<compile_context>
chip_gen: v7x
topology: tpu7x:2x2x1
jax: 0.10.0
libtpu: 0.0.40
codegen_flags: <defaults>
</compile_context>

<pallas_src>
import math

import jax
import jax.numpy as jnp
from jax.experimental import pallas as pl
from jax.experimental.pallas import tpu as pltpu


# ---------------------------------------------------------------------------
# Fused BasicBlock kernel
# ---------------------------------------------------------------------------
def _make_block_kernel(*, H, W, Cin, Cout, stride, has_proj):
    Ho = (H - 1) // stride + 1
    Wo = (W - 1) // stride + 1
    taps = [(kh, kw) for kh in range(3) for kw in range(3)]
    n_in = 7 if has_proj else 5

    def kernel(*refs):
        if has_proj:
            (x_ref, w1_ref, b1_ref, w2_ref, b2_ref,
             wsc_ref, bsc_ref) = refs[:n_in]
        else:
            x_ref, w1_ref, b1_ref, w2_ref, b2_ref = refs[:n_in]
            wsc_ref = bsc_ref = None
        o_ref = refs[n_in]
        scratch = refs[n_in + 1:]
        xpad_ref, y1pad_ref, p1_ref, p2_ref = scratch[:4]
        xsub_ref = scratch[4] if stride > 1 else None

        x = x_ref[0]                                      # (H, W, Cin) f32

        # ---- conv1 halo: zero ONLY the 1-px border, interior written once --
        zrow = jnp.zeros((1, W + 2, Cin), jnp.float32)
        zcol = jnp.zeros((H + 2, 1, Cin), jnp.float32)
        xpad_ref[0:1, :, :] = zrow
        xpad_ref[H + 1:H + 2, :, :] = zrow
        xpad_ref[:, 0:1, :] = zcol
        xpad_ref[:, W + 1:W + 2, :] = zcol
        xpad_ref[1:H + 1, 1:W + 1, :] = x

        # ---- conv1: (Ho*Wo, 9*Cin) im2col slab, single MXU matmul ----------
        if stride == 1:
            for t, (kh, kw) in enumerate(taps):
                p1_ref[:, t * Cin:(t + 1) * Cin] = (
                    xpad_ref[kh:kh + Ho, kw:kw + Wo, :].reshape(Ho * Wo, Cin))
        else:
            # Strided taps, one strided axis per load:
            #  pass A: subsample W -> (H+2, Wo, 3*Cin)
            #  pass B: subsample H -> (Ho, Wo, 3*Cin) per kh
            for kw in range(3):
                xsub_ref[:, :, kw * Cin:(kw + 1) * Cin] = (
                    xpad_ref[:, pl.ds(kw, Wo, stride), :])
            for kh in range(3):
                p1_ref[:, kh * 3 * Cin:(kh + 1) * 3 * Cin] = (
                    xsub_ref[pl.ds(kh, Ho, stride), :, :].reshape(Ho * Wo, 3 * Cin))

        y1 = jnp.dot(p1_ref[...], w1_ref[...], preferred_element_type=jnp.float32)
        y1 = jnp.maximum(y1 + b1_ref[...], 0.0)           # folded BN1 + ReLU

        # ---- conv1 output stays in VMEM (padded for conv2's halo) ----------
        zrow2 = jnp.zeros((1, Wo + 2, Cout), jnp.float32)
        zcol2 = jnp.zeros((Ho + 2, 1, Cout), jnp.float32)
        y1pad_ref[0:1, :, :] = zrow2
        y1pad_ref[Ho + 1:Ho + 2, :, :] = zrow2
        y1pad_ref[:, 0:1, :] = zcol2
        y1pad_ref[:, Wo + 1:Wo + 2, :] = zcol2
        y1pad_ref[1:Ho + 1, 1:Wo + 1, :] = y1.reshape(Ho, Wo, Cout)

        # ---- conv2 (stride 1): (Ho*Wo, 9*Cout) slab, single MXU matmul -----
        for t, (kh, kw) in enumerate(taps):
            p2_ref[:, t * Cout:(t + 1) * Cout] = (
                y1pad_ref[kh:kh + Ho, kw:kw + Wo, :].reshape(Ho * Wo, Cout))
        y2 = jnp.dot(p2_ref[...], w2_ref[...], preferred_element_type=jnp.float32)
        y2 = y2 + b2_ref[...]                             # folded BN2

        # ---- shortcut (fused: one extra matmul on the resident input) ------
        if has_proj:
            if stride == 1:
                xs = x.reshape(H * W, Cin)
            else:
                # kw-phase 1 of xsub holds padded col 1 + stride*wo == x[:, stride*wo];
                # stride the rows the same way -> x[stride*ho, stride*wo]
                xs = xsub_ref[pl.ds(1, Ho, stride), :, Cin:2 * Cin].reshape(
                    Ho * Wo, Cin)
            sc = jnp.dot(xs, wsc_ref[...], preferred_element_type=jnp.float32)
            sc = sc + bsc_ref[...]
        else:
            sc = x.reshape(H * W, Cin)                    # identity

        # ---- residual add + ReLU, lane-packed (Ho*Wo, Cout) store ----------
        o_ref[0] = jnp.maximum(y2 + sc, 0.0).astype(o_ref.dtype)

    return kernel


# ---------------------------------------------------------------------------
# Wrapper (NCHW in / NCHW out), single pallas_call per block
# ---------------------------------------------------------------------------
def bn_scale_shift(p, eps=1e-5):
    scale = p["gamma"] / jnp.sqrt(p["var"] + eps)
    shift = p["beta"] - p["mean"] * scale
    return scale, shift


def basic_block_forward(x_nchw, params, *, stride=1):
    x = jnp.transpose(x_nchw, (0, 2, 3, 1)).astype(jnp.float32)  # NCHW -> NHWC
    N, H, W, Cin = x.shape
    Cout = params["w1"].shape[-1]
    Ho = (H - 1) // stride + 1
    Wo = (W - 1) // stride + 1
    has_proj = (stride != 1) or (Cin != Cout)

    s1, b1 = bn_scale_shift(params["bn1"])
    s2, b2 = bn_scale_shift(params["bn2"])
    # Fold the BN scales into the conv-weight columns (weight-side only, so
    # the extra XLA op is tiny); the kernel does matmul + bias-add.
    w1f = params["w1"].reshape(9 * Cin, Cout) * s1[None, :]
    w2f = params["w2"].reshape(9 * Cout, Cout) * s2[None, :]

    inputs = [x, w1f, b1.reshape(1, Cout), w2f, b2.reshape(1, Cout)]
    in_specs = [
        pl.BlockSpec((1, H, W, Cin), lambda n: (n, 0, 0, 0)),
        pl.BlockSpec((9 * Cin, Cout), lambda n: (0, 0)),
        pl.BlockSpec((1, Cout), lambda n: (0, 0)),
        pl.BlockSpec((9 * Cout, Cout), lambda n: (0, 0)),
        pl.BlockSpec((1, Cout), lambda n: (0, 0)),
    ]
    if has_proj:
        ssc, bsc = bn_scale_shift(params["bn_sc"])
        wscf = params["w_sc"].reshape(Cin, Cout) * ssc[None, :]
        inputs += [wscf, bsc.reshape(1, Cout)]
        in_specs += [pl.BlockSpec((Cin, Cout), lambda n: (0, 0)),
                     pl.BlockSpec((1, Cout), lambda n: (0, 0))]

    scratch = [pltpu.VMEM((H + 2, W + 2, Cin), jnp.float32),      # padded input
               pltpu.VMEM((Ho + 2, Wo + 2, Cout), jnp.float32),   # padded conv1 out
               pltpu.VMEM((Ho * Wo, 9 * Cin), jnp.float32),       # im2col slab 1
               pltpu.VMEM((Ho * Wo, 9 * Cout), jnp.float32)]      # im2col slab 2
    if stride > 1:
        scratch.append(pltpu.VMEM((H + 2, Wo, 3 * Cin), jnp.float32))  # W-subsample

    out = pl.pallas_call(
        _make_block_kernel(H=H, W=W, Cin=Cin, Cout=Cout,
                           stride=stride, has_proj=has_proj),
        out_shape=jax.ShapeDtypeStruct((N, Ho * Wo, Cout), jnp.float32),
        grid=(N,),
        in_specs=in_specs,
        out_specs=pl.BlockSpec((1, Ho * Wo, Cout), lambda n: (n, 0, 0)),
        scratch_shapes=scratch,
        compiler_params=pltpu.CompilerParams(
            dimension_semantics=("parallel",)),
    )(*inputs)

    out = out.reshape(N, Ho, Wo, Cout)
    return jnp.transpose(out, (0, 3, 1, 2))                      # NHWC -> NCHW


# ---------------------------------------------------------------------------
# Params + pure-JAX reference (mirrors PyTorch forward, inference-mode BN)
# ---------------------------------------------------------------------------
def make_params(key, cin, cout, *, stride):
    def conv_init(k, shape, fan_in):
        bound = 1.0 / math.sqrt(fan_in)
        return jax.random.uniform(k, shape, jnp.float32, -bound, bound)

    def bn_init(k, c):
        kg, kb, km, kv = jax.random.split(k, 4)
        return {
            "gamma": 1.0 + 0.1 * jax.random.normal(kg, (c,), jnp.float32),
            "beta": 0.1 * jax.random.normal(kb, (c,), jnp.float32),
            "mean": 0.1 * jax.random.normal(km, (c,), jnp.float32),
            "var": jax.random.uniform(kv, (c,), jnp.float32, 0.5, 1.5),
        }

    ks = jax.random.split(key, 6)
    params = {
        "w1": conv_init(ks[0], (3, 3, cin, cout), 3 * 3 * cin),
        "bn1": bn_init(ks[1], cout),
        "w2": conv_init(ks[2], (3, 3, cout, cout), 3 * 3 * cout),
        "bn2": bn_init(ks[3], cout),
    }
    if stride != 1 or cin != cout:
        params["w_sc"] = conv_init(ks[4], (1, 1, cin, cout), cin)
        params["bn_sc"] = bn_init(ks[5], cout)
    return params


def ref_basic_block(x_nchw, params, *, stride=1):
    x = jnp.transpose(x_nchw, (0, 2, 3, 1))

    def conv(h, w, s, pad):
        return jax.lax.conv_general_dilated(
            h, w, window_strides=(s, s), padding=[(pad, pad), (pad, pad)],
            dimension_numbers=("NHWC", "HWIO", "NHWC"))

    def bn(h, p, eps=1e-5):
        return (h - p["mean"]) / jnp.sqrt(p["var"] + eps) * p["gamma"] + p["beta"]

    Cin = x.shape[-1]
    Cout = params["w1"].shape[-1]
    out = jax.nn.relu(bn(conv(x, params["w1"], stride, 1), params["bn1"]))
    out = bn(conv(out, params["w2"], 1, 1), params["bn2"])
    sc = x
    if stride != 1 or Cin != Cout:
        sc = bn(conv(x, params["w_sc"], stride, 0), params["bn_sc"])
    return jnp.transpose(jax.nn.relu(out + sc), (0, 3, 1, 2))


# ---------------------------------------------------------------------------
if __name__ == "__main__":
    key = jax.random.PRNGKey(0)
    kx, kp1, kp2, kp3 = jax.random.split(key, 4)
    N, H, W = 2, 16, 16
    ok = True

    # Case 1: stride=1, channel expansion (projection shortcut)
    cin, cout, stride = 4, 8, 1
    x = jax.random.normal(kx, (N, cin, H, W), jnp.float32)
    p = make_params(kp1, cin, cout, stride=stride)
    out = jax.block_until_ready(basic_block_forward(x, p, stride=stride))
    ref = ref_basic_block(x, p, stride=stride)
    ok &= out.shape == (N, cout, H, W)
    ok &= bool(jnp.allclose(out, ref, atol=1e-4, rtol=1e-4))

    # Case 2: stride=2 downsampling block (projection shortcut, strided conv)
    cin, cout, stride = 4, 8, 2
    p = make_params(kp2, cin, cout, stride=stride)
    out = jax.block_until_ready(basic_block_forward(x, p, stride=stride))
    ref = ref_basic_block(x, p, stride=stride)
    ok &= out.shape == (N, cout, H // 2, W // 2)
    ok &= bool(jnp.allclose(out, ref, atol=1e-4, rtol=1e-4))

    # Case 3: stride=1, same channels (identity shortcut)
    cin, cout, stride = 8, 8, 1
    x3 = jax.random.normal(kx, (N, cin, H, W), jnp.float32)
    p = make_params(kp3, cin, cout, stride=stride)
    out = jax.block_until_ready(basic_block_forward(x3, p, stride=stride))
    ref = ref_basic_block(x3, p, stride=stride)
    ok &= out.shape == (N, cout, H, W)
    ok &= bool(jnp.allclose(out, ref, atol=1e-4, rtol=1e-4))

    if ok:
        print("KERNEL_OK")
    else:
        raise SystemExit("Pallas output mismatch vs reference")
</pallas_src>

<mosaic_0001>
module attributes {stable_mosaic.version = 11 : i64} {
  func.func @kernel(%arg0: i32, %arg1: memref<1x16x16x4xf32, #tpu.memory_space<vmem>>, %arg2: memref<36x8xf32, #tpu.memory_space<vmem>>, %arg3: memref<1x8xf32, #tpu.memory_space<vmem>>, %arg4: memref<72x8xf32, #tpu.memory_space<vmem>>, %arg5: memref<1x8xf32, #tpu.memory_space<vmem>>, %arg6: memref<4x8xf32, #tpu.memory_space<vmem>>, %arg7: memref<1x8xf32, #tpu.memory_space<vmem>>, %arg8: memref<1x256x8xf32, #tpu.memory_space<vmem>>, %arg9: memref<18x18x4xf32, #tpu.memory_space<vmem>>, %arg10: memref<18x18x8xf32, #tpu.memory_space<vmem>>, %arg11: memref<256x36xf32, #tpu.memory_space<vmem>>, %arg12: memref<256x72xf32, #tpu.memory_space<vmem>>) attributes {dimension_semantics = [#tpu.dimension_semantics<parallel>], iteration_bounds = array<i64: 2>, scalar_prefetch = 0 : i64, scratch_operands = 4 : i64, tpu.core_type = #tpu.core_type<tc>, window_params = [{transform_indices = @transform_0, window_bounds = array<i64: 1, 16, 16, 4>}, {pipeline_mode = #tpu.pipeline_mode<synchronous>, transform_indices = @transform_1, window_bounds = array<i64: 36, 8>}, {pipeline_mode = #tpu.pipeline_mode<synchronous>, transform_indices = @transform_2, window_bounds = array<i64: 1, 8>}, {pipeline_mode = #tpu.pipeline_mode<synchronous>, transform_indices = @transform_3, window_bounds = array<i64: 72, 8>}, {pipeline_mode = #tpu.pipeline_mode<synchronous>, transform_indices = @transform_4, window_bounds = array<i64: 1, 8>}, {pipeline_mode = #tpu.pipeline_mode<synchronous>, transform_indices = @transform_5, window_bounds = array<i64: 4, 8>}, {pipeline_mode = #tpu.pipeline_mode<synchronous>, transform_indices = @transform_6, window_bounds = array<i64: 1, 8>}, {transform_indices = @transform_7, window_bounds = array<i64: 1, 256, 8>}]} {
    %c0 = arith.constant 0 : index
    %c0_0 = arith.constant 0 : index
    %c0_1 = arith.constant 0 : index
    %c0_2 = arith.constant 0 : index
    %0 = vector.load %arg1[%c0, %c0_0, %c0_1, %c0_2] : memref<1x16x16x4xf32, #tpu.memory_space<vmem>>, vector<1x16x16x4xf32>
    %1 = vector.shape_cast %0 : vector<1x16x16x4xf32> to vector<16x16x4xf32>
    %cst = arith.constant 0.000000e+00 : f32
    %2 = vector.broadcast %cst : f32 to vector<1x18x4xf32>
    %cst_3 = arith.constant 0.000000e+00 : f32
    %3 = vector.broadcast %cst_3 : f32 to vector<18x1x4xf32>
    %c0_4 = arith.constant 0 : index
    %c0_5 = arith.constant 0 : index
    %c0_6 = arith.constant 0 : index
    %4 = vector.load %arg9[%c0_4, %c0_5, %c0_6] : memref<18x18x4xf32, #tpu.memory_space<vmem>>, vector<1x18x4xf32>
    tpu.vector_store %arg9[%c0_4, %c0_5, %c0_6], %2 {strides = array<i32>} : memref<18x18x4xf32, #tpu.memory_space<vmem>>, vector<1x18x4xf32>,
    %c17 = arith.constant 17 : index
    %c0_7 = arith.constant 0 : index
    %c0_8 = arith.constant 0 : index
    %5 = vector.load %arg9[%c17, %c0_7, %c0_8] : memref<18x18x4xf32, #tpu.memory_space<vmem>>, vector<1x18x4xf32>
    tpu.vector_store %arg9[%c17, %c0_7, %c0_8], %2 {strides = array<i32>} : memref<18x18x4xf32, #tpu.memory_space<vmem>>, vector<1x18x4xf32>,
    %c0_9 = arith.constant 0 : index
    %c0_10 = arith.constant 0 : index
    %c0_11 = arith.constant 0 : index
    %6 = vector.load %arg9[%c0_9, %c0_10, %c0_11] : memref<18x18x4xf32, #tpu.memory_space<vmem>>, vector<18x1x4xf32>
    tpu.vector_store %arg9[%c0_9, %c0_10, %c0_11], %3 {strides = array<i32>} : memref<18x18x4xf32, #tpu.memory_space<vmem>>, vector<18x1x4xf32>,
    %c0_12 = arith.constant 0 : index
    %c17_13 = arith.constant 17 : index
    %c0_14 = arith.constant 0 : index
    %7 = vector.load %arg9[%c0_12, %c17_13, %c0_14] : memref<18x18x4xf32, #tpu.memory_space<vmem>>, vector<18x1x4xf32>
    tpu.vector_store %arg9[%c0_12, %c17_13, %c0_14], %3 {strides = array<i32>} : memref<18x18x4xf32, #tpu.memory_space<vmem>>, vector<18x1x4xf32>,
    %c1 = arith.constant 1 : index
    %c1_15 = arith.constant 1 : index
    %c0_16 = arith.constant 0 : index
    %8 = vector.load %arg9[%c1, %c1_15, %c0_16] : memref<18x18x4xf32, #tpu.memory_space<vmem>>, vector<16x16x4xf32>
    tpu.vector_store %arg9[%c1, %c1_15, %c0_16], %1 {strides = array<i32>} : memref<18x18x4xf32, #tpu.memory_space<vmem>>, vector<16x16x4xf32>,
    %c0_17 = arith.constant 0 : index
    %c0_18 = arith.constant 0 : index
    %c0_19 = arith.constant 0 : index
    %9 = vector.load %arg9[%c0_17, %c0_18, %c0_19] : memref<18x18x4xf32, #tpu.memory_space<vmem>>, vector<16x16x4xf32>
    %10 = vector.shape_cast %9 : vector<16x16x4xf32> to vector<256x4xf32>
    %c0_20 = arith.constant 0 : index
    %c0_21 = arith.constant 0 : index
    %11 = vector.load %arg11[%c0_20, %c0_21] : memref<256x36xf32, #tpu.memory_space<vmem>>, vector<256x4xf32>
    tpu.vector_store %arg11[%c0_20, %c0_21], %10 {strides = array<i32>} : memref<256x36xf32, #tpu.memory_space<vmem>>, vector<256x4xf32>,
    %c0_22 = arith.constant 0 : index
    %c1_23 = arith.constant 1 : index
    %c0_24 = arith.constant 0 : index
    %12 = vector.load %arg9[%c0_22, %c1_23, %c0_24] : memref<18x18x4xf32, #tpu.memory_space<vmem>>, vector<16x16x4xf32>
    %13 = vector.shape_cast %12 : vector<16x16x4xf32> to vector<256x4xf32>
    %c0_25 = arith.constant 0 : index
    %c4 = arith.constant 4 : index
    %14 = vector.load %arg11[%c0_25, %c4] : memref<256x36xf32, #tpu.memory_space<vmem>>, vector<256x4xf32>
    tpu.vector_store %arg11[%c0_25, %c4], %13 {strides = array<i32>} : memref<256x36xf32, #tpu.memory_space<vmem>>, vector<256x4xf32>,
    %c0_26 = arith.constant 0 : index
    %c2 = arith.constant 2 : index
    %c0_27 = arith.constant 0 : index
    %15 = vector.load %arg9[%c0_26, %c2, %c0_27] : memref<18x18x4xf32, #tpu.memory_space<vmem>>, vector<16x16x4xf32>
    %16 = vector.shape_cast %15 : vector<16x16x4xf32> to vector<256x4xf32>
    %c0_28 = arith.constant 0 : index
    %c8 = arith.constant 8 : index
    %17 = vector.load %arg11[%c0_28, %c8] : memref<256x36xf32, #tpu.memory_space<vmem>>, vector<256x4xf32>
    tpu.vector_store %arg11[%c0_28, %c8], %16 {strides = array<i32>} : memref<256x36xf32, #tpu.memory_space<vmem>>, vector<256x4xf32>,
    %c1_29 = arith.constant 1 : index
    %c0_30 = arith.constant 0 : index
    %c0_31 = arith.constant 0 : index
    %18 = vector.load %arg9[%c1_29, %c0_30, %c0_31] : memref<18x18x4xf32, #tpu.memory_space<vmem>>, vector<16x16x4xf32>
    %19 = vector.shape_cast %18 : vector<16x16x4xf32> to vector<256x4xf32>
    %c0_32 = arith.constant 0 : index
    %c12 = arith.constant 12 : index
    %20 = vector.load %arg11[%c0_32, %c12] : memref<256x36xf32, #tpu.memory_space<vmem>>, vector<256x4xf32>
    tpu.vector_store %arg11[%c0_32, %c12], %19 {strides = array<i32>} : memref<256x36xf32, #tpu.memory_space<vmem>>, vector<256x4xf32>,
    %c1_33 = arith.constant 1 : index
    %c1_34 = arith.constant 1 : index
    %c0_35 = arith.constant 0 : index
    %21 = vector.load %arg9[%c1_33, %c1_34, %c0_35] : memref<18x18x4xf32, #tpu.memory_space<vmem>>, vector<16x16x4xf32>
    %22 = vector.shape_cast %21 : vector<16x16x4xf32> to vector<256x4xf32>
    %c0_36 = arith.constant 0 : index
    %c16 = arith.constant 16 : index
    %23 = vector.load %arg11[%c0_36, %c16] : memref<256x36xf32, #tpu.memory_space<vmem>>, vector<256x4xf32>
    tpu.vector_store %arg11[%c0_36, %c16], %22 {strides = array<i32>} : memref<256x36xf32, #tpu.memory_space<vmem>>, vector<256x4xf32>,
    %c1_37 = arith.constant 1 : index
    %c2_38 = arith.constant 2 : index
    %c0_39 = arith.constant 0 : index
    %24 = vector.load %arg9[%c1_37, %c2_38, %c0_39] : memref<18x18x4xf32, #tpu.memory_space<vmem>>, vector<16x16x4xf32>
    %25 = vector.shape_cast %24 : vector<16x16x4xf32> to vector<256x4xf32>
    %c0_40 = arith.constant 0 : index
    %c20 = arith.constant 20 : index
    %26 = vector.load %arg11[%c0_40, %c20] : memref<256x36xf32, #tpu.memory_space<vmem>>, vector<256x4xf32>
    tpu.vector_store %arg11[%c0_40, %c20], %25 {strides = array<i32>} : memref<256x36xf32, #tpu.memory_space<vmem>>, vector<256x4xf32>,
    %c2_41 = arith.constant 2 : index
    %c0_42 = arith.constant 0 : index
    %c0_43 = arith.constant 0 : index
    %27 = vector.load %arg9[%c2_41, %c0_42, %c0_43] : memref<18x18x4xf32, #tpu.memory_space<vmem>>, vector<16x16x4xf32>
    %28 = vector.shape_cast %27 : vector<16x16x4xf32> to vector<256x4xf32>
    %c0_44 = arith.constant 0 : index
    %c24 = arith.constant 24 : index
    %29 = vector.load %arg11[%c0_44, %c24] : memref<256x36xf32, #tpu.memory_space<vmem>>, vector<256x4xf32>
    tpu.vector_store %arg11[%c0_44, %c24], %28 {strides = array<i32>} : memref<256x36xf32, #tpu.memory_space<vmem>>, vector<256x4xf32>,
    %c2_45 = arith.constant 2 : index
    %c1_46 = arith.constant 1 : index
    %c0_47 = arith.constant 0 : index
    %30 = vector.load %arg9[%c2_45, %c1_46, %c0_47] : memref<18x18x4xf32, #tpu.memory_space<vmem>>, vector<16x16x4xf32>
    %31 = vector.shape_cast %30 : vector<16x16x4xf32> to vector<256x4xf32>
    %c0_48 = arith.constant 0 : index
    %c28 = arith.constant 28 : index
    %32 = vector.load %arg11[%c0_48, %c28] : memref<256x36xf32, #tpu.memory_space<vmem>>, vector<256x4xf32>
    tpu.vector_store %arg11[%c0_48, %c28], %31 {strides = array<i32>} : memref<256x36xf32, #tpu.memory_space<vmem>>, vector<256x4xf32>,
    %c2_49 = arith.constant 2 : index
    %c2_50 = arith.constant 2 : index
    %c0_51 = arith.constant 0 : index
    %33 = vector.load %arg9[%c2_49, %c2_50, %c0_51] : memref<18x18x4xf32, #tpu.memory_space<vmem>>, vector<16x16x4xf32>
    %34 = vector.shape_cast %33 : vector<16x16x4xf32> to vector<256x4xf32>
    %c0_52 = arith.constant 0 : index
    %c32 = arith.constant 32 : index
    %35 = vector.load %arg11[%c0_52, %c32] : memref<256x36xf32, #tpu.memory_space<vmem>>, vector<256x4xf32>
    tpu.vector_store %arg11[%c0_52, %c32], %34 {strides = array<i32>} : memref<256x36xf32, #tpu.memory_space<vmem>>, vector<256x4xf32>,
    %c0_53 = arith.constant 0 : index
    %c0_54 = arith.constant 0 : index
    %36 = vector.load %arg11[%c0_53, %c0_54] : memref<256x36xf32, #tpu.memory_space<vmem>>, vector<256x36xf32>
    %c0_55 = arith.constant 0 : index
    %c0_56 = arith.constant 0 : index
    %37 = vector.load %arg2[%c0_55, %c0_56] : memref<36x8xf32, #tpu.memory_space<vmem>>, vector<36x8xf32>
    %cst_57 = arith.constant dense<0.000000e+00> : vector<256x8xf32>
    %38 = tpu.matmul %36, %37, %cst_57 {dimension_numbers = #tpu.dot_dimension_numbers<[1], [0], [0], [1], [0, 0, 1, 1], [], []>} : vector<256x36xf32>, vector<36x8xf32>, vector<256x8xf32> -> vector<256x8xf32>
    %c0_58 = arith.constant 0 : index
    %c0_59 = arith.constant 0 : index
    %39 = vector.load %arg3[%c0_58, %c0_59] : memref<1x8xf32, #tpu.memory_space<vmem>>, vector<1x8xf32>
    %40 = vector.broadcast %39 : vector<1x8xf32> to vector<256x8xf32>
    %41 = arith.addf %38, %40 : vector<256x8xf32>
    %cst_60 = arith.constant 0.000000e+00 : f32
    %42 = vector.broadcast %cst_60 : f32 to vector<256x8xf32>
    %43 = arith.maximumf %41, %42 : vector<256x8xf32>
    %cst_61 = arith.constant 0.000000e+00 : f32
    %44 = vector.broadcast %cst_61 : f32 to vector<1x18x8xf32>
    %cst_62 = arith.constant 0.000000e+00 : f32
    %45 = vector.broadcast %cst_62 : f32 to vector<18x1x8xf32>
    %c0_63 = arith.constant 0 : index
    %c0_64 = arith.constant 0 : index
    %c0_65 = arith.constant 0 : index
    %46 = vector.load %arg10[%c0_63, %c0_64, %c0_65] : memref<18x18x8xf32, #tpu.memory_space<vmem>>, vector<1x18x8xf32>
    tpu.vector_store %arg10[%c0_63, %c0_64, %c0_65], %44 {strides = array<i32>} : memref<18x18x8xf32, #tpu.memory_space<vmem>>, vector<1x18x8xf32>,
    %c17_66 = arith.constant 17 : index
    %c0_67 = arith.constant 0 : index
    %c0_68 = arith.constant 0 : index
    %47 = vector.load %arg10[%c17_66, %c0_67, %c0_68] : memref<18x18x8xf32, #tpu.memory_space<vmem>>, vector<1x18x8xf32>
    tpu.vector_store %arg10[%c17_66, %c0_67, %c0_68], %44 {strides = array<i32>} : memref<18x18x8xf32, #tpu.memory_space<vmem>>, vector<1x18x8xf32>,
    %c0_69 = arith.constant 0 : index
    %c0_70 = arith.constant 0 : index
    %c0_71 = arith.constant 0 : index
    %48 = vector.load %arg10[%c0_69, %c0_70, %c0_71] : memref<18x18x8xf32, #tpu.memory_space<vmem>>, vector<18x1x8xf32>
    tpu.vector_store %arg10[%c0_69, %c0_70, %c0_71], %45 {strides = array<i32>} : memref<18x18x8xf32, #tpu.memory_space<vmem>>, vector<18x1x8xf32>,
    %c0_72 = arith.constant 0 : index
    %c17_73 = arith.constant 17 : index
    %c0_74 = arith.constant 0 : index
    %49 = vector.load %arg10[%c0_72, %c17_73, %c0_74] : memref<18x18x8xf32, #tpu.memory_space<vmem>>, vector<18x1x8xf32>
    tpu.vector_store %arg10[%c0_72, %c17_73, %c0_74], %45 {strides = array<i32>} : memref<18x18x8xf32, #tpu.memory_space<vmem>>, vector<18x1x8xf32>,
    %50 = vector.shape_cast %43 : vector<256x8xf32> to vector<16x16x8xf32>
    %c1_75 = arith.constant 1 : index
    %c1_76 = arith.constant 1 : index
    %c0_77 = arith.constant 0 : index
    %51 = vector.load %arg10[%c1_75, %c1_76, %c0_77] : memref<18x18x8xf32, #tpu.memory_space<vmem>>, vector<16x16x8xf32>
    tpu.vector_store %arg10[%c1_75, %c1_76, %c0_77], %50 {strides = array<i32>} : memref<18x18x8xf32, #tpu.memory_space<vmem>>, vector<16x16x8xf32>,
    %c0_78 = arith.constant 0 : index
    %c0_79 = arith.constant 0 : index
    %c0_80 = arith.constant 0 : index
    %52 = vector.load %arg10[%c0_78, %c0_79, %c0_80] : memref<18x18x8xf32, #tpu.memory_space<vmem>>, vector<16x16x8xf32>
    %53 = vector.shape_cast %52 : vector<16x16x8xf32> to vector<256x8xf32>
    %c0_81 = arith.constant 0 : index
    %c0_82 = arith.constant 0 : index
    %54 = vector.load %arg12[%c0_81, %c0_82] : memref<256x72xf32, #tpu.memory_space<vmem>>, vector<256x8xf32>
    tpu.vector_store %arg12[%c0_81, %c0_82], %53 {strides = array<i32>} : memref<256x72xf32, #tpu.memory_space<vmem>>, vector<256x8xf32>,
    %c0_83 = arith.constant 0 : index
    %c1_84 = arith.constant 1 : index
    %c0_85 = arith.constant 0 : index
    %55 = vector.load %arg10[%c0_83, %c1_84, %c0_85] : memref<18x18x8xf32, #tpu.memory_space<vmem>>, vector<16x16x8xf32>
    %56 = vector.shape_cast %55 : vector<16x16x8xf32> to vector<256x8xf32>
    %c0_86 = arith.constant 0 : index
    %c8_87 = arith.constant 8 : index
    %57 = vector.load %arg12[%c0_86, %c8_87] : memref<256x72xf32, #tpu.memory_space<vmem>>, vector<256x8xf32>
    tpu.vector_store %arg12[%c0_86, %c8_87], %56 {strides = array<i32>} : memref<256x72xf32, #tpu.memory_space<vmem>>, vector<256x8xf32>,
    %c0_88 = arith.constant 0 : index
    %c2_89 = arith.constant 2 : index
    %c0_90 = arith.constant 0 : index
    %58 = vector.load %arg10[%c0_88, %c2_89, %c0_90] : memref<18x18x8xf32, #tpu.memory_space<vmem>>, vector<16x16x8xf32>
    %59 = vector.shape_cast %58 : vector<16x16x8xf32> to vector<256x8xf32>
    %c0_91 = arith.constant 0 : index
    %c16_92 = arith.constant 16 : index
    %60 = vector.load %arg12[%c0_91, %c16_92] : memref<256x72xf32, #tpu.memory_space<vmem>>, vector<256x8xf32>
    tpu.vector_store %arg12[%c0_91, %c16_92], %59 {strides = array<i32>} : memref<256x72xf32, #tpu.memory_space<vmem>>, vector<256x8xf32>,
    %c1_93 = arith.constant 1 : index
    %c0_94 = arith.constant 0 : index
    %c0_95 = arith.constant 0 : index
    %61 = vector.load %arg10[%c1_93, %c0_94, %c0_95] : memref<18x18x8xf32, #tpu.memory_space<vmem>>, vector<16x16x8xf32>
    %62 = vector.shape_cast %61 : vector<16x16x8xf32> to vector<256x8xf32>
    %c0_96 = arith.constant 0 : index
    %c24_97 = arith.constant 24 : index
    %63 = vector.load %arg12[%c0_96, %c24_97] : memref<256x72xf32, #tpu.memory_space<vmem>>, vector<256x8xf32>
    tpu.vector_store %arg12[%c0_96, %c24_97], %62 {strides = array<i32>} : memref<256x72xf32, #tpu.memory_space<vmem>>, vector<256x8xf32>,
    %c1_98 = arith.constant 1 : index
    %c1_99 = arith.constant 1 : index
    %c0_100 = arith.constant 0 : index
    %64 = vector.load %arg10[%c1_98, %c1_99, %c0_100] : memref<18x18x8xf32, #tpu.memory_space<vmem>>, vector<16x16x8xf32>
    %65 = vector.shape_cast %64 : vector<16x16x8xf32> to vector<256x8xf32>
    %c0_101 = arith.constant 0 : index
    %c32_102 = arith.constant 32 : index
    %66 = vector.load %arg12[%c0_101, %c32_102] : memref<256x72xf32, #tpu.memory_space<vmem>>, vector<256x8xf32>
    tpu.vector_store %arg12[%c0_101, %c32_102], %65 {strides = array<i32>} : memref<256x72xf32, #tpu.memory_space<vmem>>, vector<256x8xf32>,
    %c1_103 = arith.constant 1 : index
    %c2_104 = arith.constant 2 : index
    %c0_105 = arith.constant 0 : index
    %67 = vector.load %arg10[%c1_103, %c2_104, %c0_105] : memref<18x18x8xf32, #tpu.memory_space<vmem>>, vector<16x16x8xf32>
    %68 = vector.shape_cast %67 : vector<16x16x8xf32> to vector<256x8xf32>
    %c0_106 = arith.constant 0 : index
    %c40 = arith.constant 40 : index
    %69 = vector.load %arg12[%c0_106, %c40] : memref<256x72xf32, #tpu.memory_space<vmem>>, vector<256x8xf32>
    tpu.vector_store %arg12[%c0_106, %c40], %68 {strides = array<i32>} : memref<256x72xf32, #tpu.memory_space<vmem>>, vector<256x8xf32>,
    %c2_107 = arith.constant 2 : index
    %c0_108 = arith.constant 0 : index
    %c0_109 = arith.constant 0 : index
    %70 = vector.load %arg10[%c2_107, %c0_108, %c0_109] : memref<18x18x8xf32, #tpu.memory_space<vmem>>, vector<16x16x8xf32>
    %71 = vector.shape_cast %70 : vector<16x16x8xf32> to vector<256x8xf32>
    %c0_110 = arith.constant 0 : index
    %c48 = arith.constant 48 : index
    %72 = vector.load %arg12[%c0_110, %c48] : memref<256x72xf32, #tpu.memory_space<vmem>>, vector<256x8xf32>
    tpu.vector_store %arg12[%c0_110, %c48], %71 {strides = array<i32>} : memref<256x72xf32, #tpu.memory_space<vmem>>, vector<256x8xf32>,
    %c2_111 = arith.constant 2 : index
    %c1_112 = arith.constant 1 : index
    %c0_113 = arith.constant 0 : index
    %73 = vector.load %arg10[%c2_111, %c1_112, %c0_113] : memref<18x18x8xf32, #tpu.memory_space<vmem>>, vector<16x16x8xf32>
    %74 = vector.shape_cast %73 : vector<16x16x8xf32> to vector<256x8xf32>
    %c0_114 = arith.constant 0 : index
    %c56 = arith.constant 56 : index
    %75 = vector.load %arg12[%c0_114, %c56] : memref<256x72xf32, #tpu.memory_space<vmem>>, vector<256x8xf32>
    tpu.vector_store %arg12[%c0_114, %c56], %74 {strides = array<i32>} : memref<256x72xf32, #tpu.memory_space<vmem>>, vector<256x8xf32>,
    %c2_115 = arith.constant 2 : index
    %c2_116 = arith.constant 2 : index
    %c0_117 = arith.constant 0 : index
    %76 = vector.load %arg10[%c2_115, %c2_116, %c0_117] : memref<18x18x8xf32, #tpu.memory_space<vmem>>, vector<16x16x8xf32>
    %77 = vector.shape_cast %76 : vector<16x16x8xf32> to vector<256x8xf32>
    %c0_118 = arith.constant 0 : index
    %c64 = arith.constant 64 : index
    %78 = vector.load %arg12[%c0_118, %c64] : memref<256x72xf32, #tpu.memory_space<vmem>>, vector<256x8xf32>
    tpu.vector_store %arg12[%c0_118, %c64], %77 {strides = array<i32>} : memref<256x72xf32, #tpu.memory_space<vmem>>, vector<256x8xf32>,
    %c0_119 = arith.constant 0 : index
    %c0_120 = arith.constant 0 : index
    %79 = vector.load %arg12[%c0_119, %c0_120] : memref<256x72xf32, #tpu.memory_space<vmem>>, vector<256x72xf32>
    %c0_121 = arith.constant 0 : index
    %c0_122 = arith.constant 0 : index
    %80 = vector.load %arg4[%c0_121, %c0_122] : memref<72x8xf32, #tpu.memory_space<vmem>>, vector<72x8xf32>
    %cst_123 = arith.constant dense<0.000000e+00> : vector<256x8xf32>
    %81 = tpu.matmul %79, %80, %cst_123 {dimension_numbers = #tpu.dot_dimension_numbers<[1], [0], [0], [1], [0, 0, 1, 1], [], []>} : vector<256x72xf32>, vector<72x8xf32>, vector<256x8xf32> -> vector<256x8xf32>
    %c0_124 = arith.constant 0 : index
    %c0_125 = arith.constant 0 : index
    %82 = vector.load %arg5[%c0_124, %c0_125] : memref<1x8xf32, #tpu.memory_space<vmem>>, vector<1x8xf32>
    %83 = vector.broadcast %82 : vector<1x8xf32> to vector<256x8xf32>
    %84 = arith.addf %81, %83 : vector<256x8xf32>
    %85 = vector.shape_cast %1 : vector<16x16x4xf32> to vector<256x4xf32>
    %c0_126 = arith.constant 0 : index
    %c0_127 = arith.constant 0 : index
    %86 = vector.load %arg6[%c0_126, %c0_127] : memref<4x8xf32, #tpu.memory_space<vmem>>, vector<4x8xf32>
    %cst_128 = arith.constant dense<0.000000e+00> : vector<256x8xf32>
    %87 = tpu.matmul %85, %86, %cst_128 {dimension_numbers = #tpu.dot_dimension_numbers<[1], [0], [0], [1], [0, 0, 1, 1], [], []>} : vector<256x4xf32>, vector<4x8xf32>, vector<256x8xf32> -> vector<256x8xf32>
    %c0_129 = arith.constant 0 : index
    %c0_130 = arith.constant 0 : index
    %88 = vector.load %arg7[%c0_129, %c0_130] : memref<1x8xf32, #tpu.memory_space<vmem>>, vector<1x8xf32>
    %89 = vector.broadcast %88 : vector<1x8xf32> to vector<256x8xf32>
    %90 = arith.addf %87, %89 : vector<256x8xf32>
    %91 = arith.addf %84, %90 : vector<256x8xf32>
    %cst_131 = arith.constant 0.000000e+00 : f32
    %92 = vector.broadcast %cst_131 : f32 to vector<256x8xf32>
    %93 = arith.maximumf %91, %92 : vector<256x8xf32>
    %c0_132 = arith.constant 0 : index
    %c0_133 = arith.constant 0 : index
    %c0_134 = arith.constant 0 : index
    %94 = vector.load %arg8[%c0_132, %c0_133, %c0_134] : memref<1x256x8xf32, #tpu.memory_space<vmem>>, vector<1x256x8xf32>
    %95 = vector.shape_cast %94 : vector<1x256x8xf32> to vector<256x8xf32>
    %96 = vector.shape_cast %93 : vector<256x8xf32> to vector<1x256x8xf32>
    tpu.vector_store %arg8[%c0_132, %c0_133, %c0_134], %96 {strides = array<i32>} : memref<1x256x8xf32, #tpu.memory_space<vmem>>, vector<1x256x8xf32>,
    return
  }
  func.func @transform_0(%arg0: i32) -> (i32, i32, i32, i32) {
    %c0_i32 = arith.constant 0 : i32
    %c0_i32_0 = arith.constant 0 : i32
    %c0_i32_1 = arith.constant 0 : i32
    %c0_i32_2 = arith.constant 0 : i32
    return %arg0, %c0_i32, %c0_i32_0, %c0_i32_1 : i32, i32, i32, i32
  }
  func.func @transform_1(%arg0: i32) -> (i32, i32) {
    %c0_i32 = arith.constant 0 : i32
    %c0_i32_0 = arith.constant 0 : i32
    %c0_i32_1 = arith.constant 0 : i32
    return %c0_i32, %c0_i32_0 : i32, i32
  }
  func.func @transform_2(%arg0: i32) -> (i32, i32) {
    %c0_i32 = arith.constant 0 : i32
    %c0_i32_0 = arith.constant 0 : i32
    %c0_i32_1 = arith.constant 0 : i32
    return %c0_i32, %c0_i32_0 : i32, i32
  }
  func.func @transform_3(%arg0: i32) -> (i32, i32) {
    %c0_i32 = arith.constant 0 : i32
    %c0_i32_0 = arith.constant 0 : i32
    %c0_i32_1 = arith.constant 0 : i32
    return %c0_i32, %c0_i32_0 : i32, i32
  }
  func.func @transform_4(%arg0: i32) -> (i32, i32) {
    %c0_i32 = arith.constant 0 : i32
    %c0_i32_0 = arith.constant 0 : i32
    %c0_i32_1 = arith.constant 0 : i32
    return %c0_i32, %c0_i32_0 : i32, i32
  }
  func.func @transform_5(%arg0: i32) -> (i32, i32) {
    %c0_i32 = arith.constant 0 : i32
    %c0_i32_0 = arith.constant 0 : i32
    %c0_i32_1 = arith.constant 0 : i32
    return %c0_i32, %c0_i32_0 : i32, i32
  }
  func.func @transform_6(%arg0: i32) -> (i32, i32) {
    %c0_i32 = arith.constant 0 : i32
    %c0_i32_0 = arith.constant 0 : i32
    %c0_i32_1 = arith.constant 0 : i32
    return %c0_i32, %c0_i32_0 : i32, i32
  }
  func.func @transform_7(%arg0: i32) -> (i32, i32, i32) {
    %c0_i32 = arith.constant 0 : i32
    %c0_i32_0 = arith.constant 0 : i32
    %c0_i32_1 = arith.constant 0 : i32
    return %arg0, %c0_i32, %c0_i32_0 : i32, i32, i32
  }
}

</mosaic_0001>

<llo_original>
// kernel: tpu_custom_call.1
$region0: #{tpu_custom_call.1}
  #allocation0 [shape = 'u32[]', space=smem, size = 0x4, offset = 0x4, fixed_abs, tag = 'smem constant byte address 0x4 - core index']
  #allocation1 [shape = 'u32[144,128]{1,0:T(1,128)}', space=vmem, size = 0x12000, scoped, tag = 'internal scratch']
  #allocation2 [shape = 'f32[18,18,4]{2,1,0:T(8,128)}', space=vmem, size = 0x36000, scoped, tag = 'scratch operand']
  #allocation3 [shape = 'f32[18,18,8]{2,1,0:T(8,128)}', space=vmem, size = 0x36000, scoped, tag = 'scratch operand']
  #allocation4 [shape = 'f32[256,36]{1,0:T(8,128)}', space=vmem, size = 0x20000, scoped, tag = 'scratch operand']
  #allocation5 [shape = 'f32[256,72]{1,0:T(8,128)}', space=vmem, size = 0x20000, scoped, tag = 'scratch operand']
  %s0 = inlined_call_operand.vmem [shape: f32[2,16,16,4], index: 0, kind: input, shape index: {}]
  %s1 = inlined_call_operand.vmem [shape: f32[36,8], index: 1, kind: input, shape index: {}]
  %s2 = inlined_call_operand.vmem [shape: f32[1,8], index: 2, kind: input, shape index: {}]
  %s3 = inlined_call_operand.vmem [shape: f32[72,8], index: 3, kind: input, shape index: {}]
  %s4 = inlined_call_operand.vmem [shape: f32[1,8], index: 4, kind: input, shape index: {}]
  %s5 = inlined_call_operand.vmem [shape: f32[4,8], index: 5, kind: input, shape index: {}]
  %s6 = inlined_call_operand.vmem [shape: f32[1,8], index: 6, kind: input, shape index: {}]
  %s7 = inlined_call_operand.vmem [shape: f32[2,256,8], index: 7, kind: output, shape index: {}]
  %s8 = sld [smem:[#allocation0]]
  $region61: #{tpu_custom_call.1} parent=0
    _
  %s10 = ssub.s32 1, %s8
  %s11 = scalar_select 0, %s10, %s8
  loop: start=0, step=1, limit=4
  $region2: #{tpu_custom_call.1} parent=0 // loop_pre_header
    _
  $region3: #{tpu_custom_call.1} parent=0 // loop_header
    %s13 = sphi 0, %s17
    %p14 = scmp.ge.s32.totalorder %s13, 4
    %s23 = sphi 0, %s25
    %s26 = sphi 0, %s23
    %s27 = sphi 0, %s26
    %s43 = sphi 0, %s27
    %s47 = sphi 0, %s47
    %s49 = sphi 0, %s47
    %s50 = sphi 0, %s49
    %s64 = sphi 0, %s50
    %s68 = sphi 0, %s68
    %s70 = sphi 0, %s68
    %s71 = sphi 0, %s70
    %s85 = sphi 0, %s71
    %s89 = sphi 0, %s89
    %s91 = sphi 0, %s89
    %s92 = sphi 0, %s91
    %s106 = sphi 0, %s92
    %s110 = sphi 0, %s110
    %s112 = sphi 0, %s110
    %s113 = sphi 0, %s112
    %s127 = sphi 0, %s113
    %s131 = sphi 0, %s131
    %s133 = sphi 0, %s131
    %s134 = sphi 0, %s133
    %s148 = sphi 0, %s134
    %s152 = sphi 0, %s152
    %s154 = sphi 0, %s152
    %s155 = sphi 0, %s154
    %s169 = sphi 0, %s155
    %s175 = sphi 0, %s177
    %s178 = sphi 0, %s175
    %s179 = sphi 0, %s178
    %s195 = sphi 0, %s179
  $region4: #{tpu_custom_call.1} parent=0 // loop_header_branch
    %16 = sbr.rel (%p14) target = $region8
  $region5: #{tpu_custom_call.1} parent=0 // loop_body
    %s18 = ssub.s32 %s13, 1
    %s19 = ssub.s32 %s13, 2
    %s20 = sadd.s32 %s13, 1
    %s21 = ssub.s32 %s13, %s20
    %p22 = scmp.eq.s32.totalorder %s21, 0
    %s24 = sadd.s32 %s23, 1
    %s25 = scalar_select %p22, %s23, %s24
    %p28 = pneg %p22
    %p29 = scmp.eq.s32.totalorder %s13, 1
    %p30 = por %p28, %p29
    %p31 = scmp.ne.s32.totalorder %s23, %s26
    %p32 = scmp.eq.s32.totalorder %s13, 0
    %p33 = por %p31, %p32
    %p34 = scmp.ne.s32.totalorder %s23, %s26
    %p35 = scmp.eq.s32.totalorder %s18, 1
    %p36 = por %p34, %p35
    %p37 = scmp.ne.s32.totalorder %s26, %s27
    %p38 = scmp.eq.s32.totalorder %s18, 0
    %p39 = por %p37, %p38
    %p40 = scmp.ne.s32.totalorder %s26, %s27
    %p41 = scmp.eq.s32.totalorder %s19, 1
    %p42 = por %p40, %p41
    %p44 = scmp.ne.s32.totalorder %s27, %s43
    %p45 = scmp.eq.s32.totalorder %s19, 0
    %p46 = por %p44, %p45
    %s48 = sadd.s32 %s47, 1
    %p51 = scmp.eq.s32.totalorder %s13, 1
    %p52 = scmp.ne.s32.totalorder %s47, %s49
    %p53 = scmp.eq.s32.totalorder %s13, 0
    %p54 = por %p52, %p53
    %p55 = scmp.ne.s32.totalorder %s47, %s49
    %p56 = scmp.eq.s32.totalorder %s18, 1
    %p57 = por %p55, %p56
    %p58 = scmp.ne.s32.totalorder %s49, %s50
    %p59 = scmp.eq.s32.totalorder %s18, 0
    %p60 = por %p58, %p59
    %p61 = scmp.ne.s32.totalorder %s49, %s50
    %p62 = scmp.eq.s32.totalorder %s19, 1
    %p63 = por %p61, %p62
    %p65 = scmp.ne.s32.totalorder %s50, %s64
    %p66 = scmp.eq.s32.totalorder %s19, 0
    %p67 = por %p65, %p66
    %s69 = sadd.s32 %s68, 1
    %p72 = scmp.eq.s32.totalorder %s13, 1
    %p73 = scmp.ne.s32.totalorder %s68, %s70
    %p74 = scmp.eq.s32.totalorder %s13, 0
    %p75 = por %p73, %p74
    %p76 = scmp.ne.s32.totalorder %s68, %s70
    %p77 = scmp.eq.s32.totalorder %s18, 1
    %p78 = por %p76, %p77
    %p79 = scmp.ne.s32.totalorder %s70, %s71
    %p80 = scmp.eq.s32.totalorder %s18, 0
    %p81 = por %p79, %p80
    %p82 = scmp.ne.s32.totalorder %s70, %s71
    %p83 = scmp.eq.s32.totalorder %s19, 1
    %p84 = por %p82, %p83
    %p86 = scmp.ne.s32.totalorder %s71, %s85
    %p87 = scmp.eq.s32.totalorder %s19, 0
    %p88 = por %p86, %p87
    %s90 = sadd.s32 %s89, 1
    %p93 = scmp.eq.s32.totalorder %s13, 1
    %p94 = scmp.ne.s32.totalorder %s89, %s91
    %p95 = scmp.eq.s32.totalorder %s13, 0
    %p96 = por %p94, %p95
    %p97 = scmp.ne.s32.totalorder %s89, %s91
    %p98 = scmp.eq.s32.totalorder %s18, 1
    %p99 = por %p97, %p98
    %p100 = scmp.ne.s32.totalorder %s91, %s92
    %p101 = scmp.eq.s32.totalorder %s18, 0
    %p102 = por %p100, %p101
    %p103 = scmp.ne.s32.totalorder %s91, %s92
    %p104 = scmp.eq.s32.totalorder %s19, 1
    %p105 = por %p103, %p104
    %p107 = scmp.ne.s32.totalorder %s92, %s106
    %p108 = scmp.eq.s32.totalorder %s19, 0
    %p109 = por %p107, %p108
    %s111 = sadd.s32 %s110, 1
    %p114 = scmp.eq.s32.totalorder %s13, 1
    %p115 = scmp.ne.s32.totalorder %s110, %s112
    %p116 = scmp.eq.s32.totalorder %s13, 0
    %p117 = por %p115, %p116
    %p118 = scmp.ne.s32.totalorder %s110, %s112
    %p119 = scmp.eq.s32.totalorder %s18, 1
    %p120 = por %p118, %p119
    %p121 = scmp.ne.s32.totalorder %s112, %s113
    %p122 = scmp.eq.s32.totalorder %s18, 0
    %p123 = por %p121, %p122
    %p124 = scmp.ne.s32.totalorder %s112, %s113
    %p125 = scmp.eq.s32.totalorder %s19, 1
    %p126 = por %p124, %p125
    %p128 = scmp.ne.s32.totalorder %s113, %s127
    %p129 = scmp.eq.s32.totalorder %s19, 0
    %p130 = por %p128, %p129
    %s132 = sadd.s32 %s131, 1
    %p135 = scmp.eq.s32.totalorder %s13, 1
    %p136 = scmp.ne.s32.totalorder %s131, %s133
    %p137 = scmp.eq.s32.totalorder %s13, 0
    %p138 = por %p136, %p137
    %p139 = scmp.ne.s32.totalorder %s131, %s133
    %p140 = scmp.eq.s32.totalorder %s18, 1
    %p141 = por %p139, %p140
    %p142 = scmp.ne.s32.totalorder %s133, %s134
    %p143 = scmp.eq.s32.totalorder %s18, 0
    %p144 = por %p142, %p143
    %p145 = scmp.ne.s32.totalorder %s133, %s134
    %p146 = scmp.eq.s32.totalorder %s19, 1
    %p147 = por %p145, %p146
    %p149 = scmp.ne.s32.totalorder %s134, %s148
    %p150 = scmp.eq.s32.totalorder %s19, 0
    %p151 = por %p149, %p150
    %s153 = sadd.s32 %s152, 1
    %p156 = scmp.eq.s32.totalorder %s13, 1
    %p157 = scmp.ne.s32.totalorder %s152, %s154
    %p158 = scmp.eq.s32.totalorder %s13, 0
    %p159 = por %p157, %p158
    %p160 = scmp.ne.s32.totalorder %s152, %s154
    %p161 = scmp.eq.s32.totalorder %s18, 1
    %p162 = por %p160, %p161
    %p163 = scmp.ne.s32.totalorder %s154, %s155
    %p164 = scmp.eq.s32.totalorder %s18, 0
    %p165 = por %p163, %p164
    %p166 = scmp.ne.s32.totalorder %s154, %s155
    %p167 = scmp.eq.s32.totalorder %s19, 1
    %p168 = por %p166, %p167
    %p170 = scmp.ne.s32.totalorder %s155, %s169
    %p171 = scmp.eq.s32.totalorder %s19, 0
    %p172 = por %p170, %p171
    %s173 = ssub.s32 %s13, %s20
    %p174 = scmp.eq.s32.totalorder %s173, 0
    %s176 = sadd.s32 %s175, 1
    %s177 = scalar_select %p174, %s175, %s176
    %p180 = pneg %p174
    %p181 = scmp.eq.s32.totalorder %s13, 1
    %p182 = por %p180, %p181
    %p183 = scmp.ne.s32.totalorder %s175, %s178
    %p184 = scmp.eq.s32.totalorder %s13, 0
    %p185 = por %p183, %p184
    %p186 = scmp.ne.s32.totalorder %s175, %s178
    %p187 = scmp.eq.s32.totalorder %s18, 1
    %p188 = por %p186, %p187
    %p189 = scmp.ne.s32.totalorder %s178, %s179
    %p190 = scmp.eq.s32.totalorder %s18, 0
    %p191 = por %p189, %p190
    %p192 = scmp.ne.s32.totalorder %s178, %s179
    %p193 = scmp.eq.s32.totalorder %s19, 1
    %p194 = por %p192, %p193
    %p196 = scmp.ne.s32.totalorder %s179, %s195
    %p197 = scmp.eq.s32.totalorder %s19, 0
    %p198 = por %p196, %p197
    %p199 = scmp.le.s32.totalorder 1, %s13
    %p200 = scmp.lt.s32.totalorder %s13, 3
    %p201 = pnand %p199, %p200
    %p202 = pneg %p201
    // Predicated region
    $region9: #{tpu_custom_call.1} parent=5 // pred_check
      _
    $region10: #{tpu_custom_call.1} parent=5 // pred_check_branch
      %204 = sbr.rel (%p201) target = $region12
    $region11: #{tpu_custom_call.1} parent=5 // pred_region
      %s205 = ssub.s32 %s13, 1
      // Predicated region
      $region13: #{tpu_custom_call.1} parent=11 // pred_check
        %p206 = pneg %p60
      $region14: #{tpu_custom_call.1} parent=11 // pred_check_branch
        %208 = sbr.rel (%p206) target = $region16
      $region15: #{tpu_custom_call.1} parent=11 // pred_region
        _
      $region16: #{tpu_custom_call.1} parent=11 // pred_fallthru
        _
      // Predicated region
      $region17: #{tpu_custom_call.1} parent=11 // pred_check
        %p209 = pneg %p81
      $region18: #{tpu_custom_call.1} parent=11 // pred_check_branch
        %211 = sbr.rel (%p209) target = $region20
      $region19: #{tpu_custom_call.1} parent=11 // pred_region
        _
      $region20: #{tpu_custom_call.1} parent=11 // pred_fallthru
        _
      // Predicated region
      $region21: #{tpu_custom_call.1} parent=11 // pred_check
        %p212 = pneg %p102
      $region22: #{tpu_custom_call.1} parent=11 // pred_check_branch
        %214 = sbr.rel (%p212) target = $region24
      $region23: #{tpu_custom_call.1} parent=11 // pred_region
        _
      $region24: #{tpu_custom_call.1} parent=11 // pred_fallthru
        _
      // Predicated region
      $region25: #{tpu_custom_call.1} parent=11 // pred_check
        %p215 = pneg %p123
      $region26: #{tpu_custom_call.1} parent=11 // pred_check_branch
        %217 = sbr.rel (%p215) target = $region28
      $region27: #{tpu_custom_call.1} parent=11 // pred_region
        _
      $region28: #{tpu_custom_call.1} parent=11 // pred_fallthru
        _
      // Predicated region
      $region29: #{tpu_custom_call.1} parent=11 // pred_check
        %p218 = pneg %p144
      $region30: #{tpu_custom_call.1} parent=11 // pred_check_branch
        %220 = sbr.rel (%p218) target = $region32
      $region31: #{tpu_custom_call.1} parent=11 // pred_region
        _
      $region32: #{tpu_custom_call.1} parent=11 // pred_fallthru
        _
      // Predicated region
      $region33: #{tpu_custom_call.1} parent=11 // pred_check
        %p221 = pneg %p165
      $region34: #{tpu_custom_call.1} parent=11 // pred_check_branch
        %223 = sbr.rel (%p221) target = $region36
      $region35: #{tpu_custom_call.1} parent=11 // pred_region
        _
      $region36: #{tpu_custom_call.1} parent=11 // pred_fallthru
        _
    $region12: #{tpu_custom_call.1} parent=5 // pred_fallthru
      _
    %p224 = scmp.lt.s32.totalorder %s13, 2
    // Predicated region
    $region37: #{tpu_custom_call.1} parent=5 // pred_check
      %p225 = pneg %p224
    $region38: #{tpu_custom_call.1} parent=5 // pred_check_branch
      %227 = sbr.rel (%p225) target = $region40
    $region39: #{tpu_custom_call.1} parent=5 // pred_region
      // Predicated region
      $region41: #{tpu_custom_call.1} parent=39 // pred_check
        %p228 = pneg %p33
      $region42: #{tpu_custom_call.1} parent=39 // pred_check_branch
        %230 = sbr.rel (%p228) target = $region44
      $region43: #{tpu_custom_call.1} parent=39 // pred_region
        %p231 = scmp.lt.s32.totalorder %s13, 1
        %s232 = scalar_select %p231, %s13, 1
        %s233 = smul.addr %s232, 32
        %s234 = smul.addr %s233, 8
        %s235 = scalar_lea.vmem %s0, %s234
      $region44: #{tpu_custom_call.1} parent=39 // pred_fallthru
        _
    $region40: #{tpu_custom_call.1} parent=5 // pred_fallthru
      _
    %p236 = scmp.le.s32.totalorder 1, %s13
    %p237 = scmp.lt.s32.totalorder %s13, 3
    %p238 = pnand %p236, %p237
    %p239 = pneg %p238
    // Predicated region
    $region45: #{tpu_custom_call.1} parent=5 // pred_check
      _
    $region46: #{tpu_custom_call.1} parent=5 // pred_check_branch
      %241 = sbr.rel (%p238) target = $region48
    $region47: #{tpu_custom_call.1} parent=5 // pred_region
      %s242 = ssub.s32 %s13, 1
      %p243 = scmp.lt.s32.totalorder %s18, 1
      %s244 = scalar_select %p243, %s18, 1
      %s245 = smul.addr %s244, 32
      %s246 = smul.addr %s245, 8
      %s247 = scalar_lea.vmem %s0, %s246
      %p248 = pneg %p39
      %p249 = pneg %p36
      %p250 = pneg %p60
      %p251 = pneg %p57
      %p252 = pneg %p81
      %p253 = pneg %p78
      %p254 = pneg %p102
      %p255 = pneg %p99
      %p256 = pneg %p123
      %p257 = pneg %p120
      %p258 = pneg %p144
      %p259 = pneg %p141
      %p260 = pneg %p165
      %p261 = pneg %p162
      %p262 = pneg %p191
      %p263 = pneg %p188
      %p264 = scmp.lt.s32.totalorder %s18, 1
      %s265 = scalar_select %p264, %s18, 1
      %s266 = smul.addr %s265, 32
      %s267 = smul.addr %s266, 8
      %s268 = scalar_lea.vmem %s7, %s267
      %p269 = scmp.lt.s32.totalorder %s18, 1
      %s270 = scalar_select %p269, %s18, 1
      %s271 = smul.addr %s270, 32
      %s272 = smul.addr %s271, 8
      %s273 = scalar_lea.vmem %s0, %s272
      %p274 = scmp.lt.s32.totalorder %s18, 1
      %s275 = scalar_select %p274, %s18, 1
      %s276 = smul.addr %s275, 32
      %s277 = smul.addr %s276, 8
      %s278 = scalar_lea.vmem %s7, %s277
      %v279 = vld [vmem:[%s273] sm:$0xff]
      %v280 = vld [vmem:[%s273 + $0x8] sm:$0xff]
      %v281 = vld [vmem:[%s273 + $0x10] sm:$0xff]
      %v282 = vld [vmem:[%s273 + $0x18] sm:$0xff]
      %v283 = vld [vmem:[%s273 + $0x20] sm:$0xff]
      %v284 = vld [vmem:[%s273 + $0x28] sm:$0xff]
      %v285 = vld [vmem:[%s273 + $0x30] sm:$0xff]
      %v286 = vld [vmem:[%s273 + $0x38] sm:$0xff]
      %v287 = vld [vmem:[%s273 + $0x40] sm:$0xff]
      %v288 = vld [vmem:[%s273 + $0x48] sm:$0xff]
      %v289 = vld [vmem:[%s273 + $0x50] sm:$0xff]
      %v290 = vld [vmem:[%s273 + $0x58] sm:$0xff]
      %v291 = vld [vmem:[%s273 + $0x60] sm:$0xff]
      %v292 = vld [vmem:[%s273 + $0x68] sm:$0xff]
      %v293 = vld [vmem:[%s273 + $0x70] sm:$0xff]
      %v294 = vld [vmem:[%s273 + $0x78] sm:$0xff]
      %v295 = vld [vmem:[%s273 + $0x80] sm:$0xff]
      %v296 = vld [vmem:[%s273 + $0x88] sm:$0xff]
      %v297 = vld [vmem:[%s273 + $0x90] sm:$0xff]
      %v298 = vld [vmem:[%s273 + $0x98] sm:$0xff]
      %v299 = vld [vmem:[%s273 + $0xa0] sm:$0xff]
      %v300 = vld [vmem:[%s273 + $0xa8] sm:$0xff]
      %v301 = vld [vmem:[%s273 + $0xb0] sm:$0xff]
      %v302 = vld [vmem:[%s273 + $0xb8] sm:$0xff]
      %v303 = vld [vmem:[%s273 + $0xc0] sm:$0xff]
      %v304 = vld [vmem:[%s273 + $0xc8] sm:$0xff]
      %v305 = vld [vmem:[%s273 + $0xd0] sm:$0xff]
      %v306 = vld [vmem:[%s273 + $0xd8] sm:$0xff]
      %v307 = vld [vmem:[%s273 + $0xe0] sm:$0xff]
      %v308 = vld [vmem:[%s273 + $0xe8] sm:$0xff]
      %v309 = vld [vmem:[%s273 + $0xf0] sm:$0xff]
      %v310 = vld [vmem:[%s273 + $0xf8] sm:$0xff]
      %vm311 = vcmask 31744
      %312 = vst.msk [vmem:[#allocation2] sm:$0xff] %vm311, 0.0
      %313 = vst.msk [vmem:[#allocation2 + $0x8] sm:$0xff] %vm311, 0.0
      %vm314 = vcmask 25600
      %315 = vst.msk [vmem:[#allocation2 + $0x10] sm:$0x3] %vm314, 0.0
      %s316 = scalar_lea.vmem [#allocation2], 408
      %317 = vst.msk [vmem:[%s316] sm:$0xff] %vm311, 0.0
      %318 = vst.msk [vmem:[%s316 + $0x8] sm:$0xff] %vm311, 0.0
      %319 = vst.msk [vmem:[%s316 + $0x10] sm:$0x3] %vm314, 0.0
      %vm320 = vcmask 24576
      %321 = vst.msk [vmem:[#allocation2] sm:$0x1] %vm320, 0.0
      %322 = vst.msk [vmem:[#allocation2 + $0x18] sm:$0x1] %vm320, 0.0
      %323 = vst.msk [vmem:[#allocation2 + $0x30] sm:$0x1] %vm320, 0.0
      %324 = vst.msk [vmem:[#allocation2 + $0x48] sm:$0x1] %vm320, 0.0
      %325 = vst.msk [vmem:[#allocation2 + $0x60] sm:$0x1] %vm320, 0.0
      %326 = vst.msk [vmem:[#allocation2 + $0x78] sm:$0x1] %vm320, 0.0
      %327 = vst.msk [vmem:[#allocation2 + $0x90] sm:$0x1] %vm320, 0.0
      %328 = vst.msk [vmem:[#allocation2 + $0xa8] sm:$0x1] %vm320, 0.0
      %329 = vst.msk [vmem:[#allocation2 + $0xc0] sm:$0x1] %vm320, 0.0
      %330 = vst.msk [vmem:[#allocation2 + $0xd8] sm:$0x1] %vm320, 0.0
      %331 = vst.msk [vmem:[#allocation2 + $0xf0] sm:$0x1] %vm320, 0.0
      %332 = vst.msk [vmem:[#allocation2 + $0x108] sm:$0x1] %vm320, 0.0
      %333 = vst.msk [vmem:[#allocation2 + $0x120] sm:$0x1] %vm320, 0.0
      %334 = vst.msk [vmem:[#allocation2 + $0x138] sm:$0x1] %vm320, 0.0
      %335 = vst.msk [vmem:[#allocation2 + $0x150] sm:$0x1] %vm320, 0.0
      %336 = vst.msk [vmem:[#allocation2 + $0x168] sm:$0x1] %vm320, 0.0
      %337 = vst.msk [vmem:[#allocation2 + $0x180] sm:$0x1] %vm320, 0.0
      %338 = vst.msk [vmem:[#allocation2 + $0x198] sm:$0x1] %vm320, 0.0
      %339 = vst.msk [vmem:[#allocation2 + $0x11] sm:$0x1] %vm320, 0.0
      %340 = vst.msk [vmem:[#allocation2 + $0x29] sm:$0x1] %vm320, 0.0
      %341 = vst.msk [vmem:[#allocation2 + $0x41] sm:$0x1] %vm320, 0.0
      %342 = vst.msk [vmem:[#allocation2 + $0x59] sm:$0x1] %vm320, 0.0
      %343 = vst.msk [vmem:[#allocation2 + $0x71] sm:$0x1] %vm320, 0.0
      %344 = vst.msk [vmem:[#allocation2 + $0x89] sm:$0x1] %vm320, 0.0
      %345 = vst.msk [vmem:[#allocation2 + $0xa1] sm:$0x1] %vm320, 0.0
      %346 = vst.msk [vmem:[#allocation2 + $0xb9] sm:$0x1] %vm320, 0.0
      %347 = vst.msk [vmem:[#allocation2 + $0xd1] sm:$0x1] %vm320, 0.0
      %348 = vst.msk [vmem:[#allocation2 + $0xe9] sm:$0x1] %vm320, 0.0
      %349 = vst.msk [vmem:[#allocation2 + $0x101] sm:$0x1] %vm320, 0.0
      %350 = vst.msk [vmem:[#allocation2 + $0x119] sm:$0x1] %vm320, 0.0
      %351 = vst.msk [vmem:[#allocation2 + $0x131] sm:$0x1] %vm320, 0.0
      %352 = vst.msk [vmem:[#allocation2 + $0x149] sm:$0x1] %vm320, 0.0
      %353 = vst.msk [vmem:[#allocation2 + $0x161] sm:$0x1] %vm320, 0.0
      %354 = vst.msk [vmem:[#allocation2 + $0x179] sm:$0x1] %vm320, 0.0
      %355 = vst.msk [vmem:[#allocation2 + $0x191] sm:$0x1] %vm320, 0.0
      %356 = vst.msk [vmem:[#allocation2 + $0x1a9] sm:$0x1] %vm320, 0.0
      %s357 = scalar_lea.vmem [#allocation2], 24
      %358 = vst.msk [vmem:[%s357 + $0x1] sm:$0xff] %vm311, %v279
      %359 = vst.msk [vmem:[%s357 + $0x9] sm:$0xff] %vm311, %v280
      %360 = vst.msk [vmem:[%s357 + $0x19] sm:$0xff] %vm311, %v281
      %361 = vst.msk [vmem:[%s357 + $0x21] sm:$0xff] %vm311, %v282
      %362 = vst.msk [vmem:[%s357 + $0x31] sm:$0xff] %vm311, %v283
      %363 = vst.msk [vmem:[%s357 + $0x39] sm:$0xff] %vm311, %v284
      %364 = vst.msk [vmem:[%s357 + $0x49] sm:$0xff] %vm311, %v285
      %365 = vst.msk [vmem:[%s357 + $0x51] sm:$0xff] %vm311, %v286
      %366 = vst.msk [vmem:[%s357 + $0x61] sm:$0xff] %vm311, %v287
      %367 = vst.msk [vmem:[%s357 + $0x69] sm:$0xff] %vm311, %v288
      %368 = vst.msk [vmem:[%s357 + $0x79] sm:$0xff] %vm311, %v289
      %369 = vst.msk [vmem:[%s357 + $0x81] sm:$0xff] %vm311, %v290
      %370 = vst.msk [vmem:[%s357 + $0x91] sm:$0xff] %vm311, %v291
      %371 = vst.msk [vmem:[%s357 + $0x99] sm:$0xff] %vm311, %v292
      %372 = vst.msk [vmem:[%s357 + $0xa9] sm:$0xff] %vm311, %v293
      %373 = vst.msk [vmem:[%s357 + $0xb1] sm:$0xff] %vm311, %v294
      %374 = vst.msk [vmem:[%s357 + $0xc1] sm:$0xff] %vm311, %v295
      %375 = vst.msk [vmem:[%s357 + $0xc9] sm:$0xff] %vm311, %v296
      %376 = vst.msk [vmem:[%s357 + $0xd9] sm:$0xff] %vm311, %v297
      %377 = vst.msk [vmem:[%s357 + $0xe1] sm:$0xff] %vm311, %v298
      %378 = vst.msk [vmem:[%s357 + $0xf1] sm:$0xff] %vm311, %v299
      %379 = vst.msk [vmem:[%s357 + $0xf9] sm:$0xff] %vm311, %v300
      %380 = vst.msk [vmem:[%s357 + $0x109] sm:$0xff] %vm311, %v301
      %381 = vst.msk [vmem:[%s357 + $0x111] sm:$0xff] %vm311, %v302
      %382 = vst.msk [vmem:[%s357 + $0x121] sm:$0xff] %vm311, %v303
      %383 = vst.msk [vmem:[%s357 + $0x129] sm:$0xff] %vm311, %v304
      %384 = vst.msk [vmem:[%s357 + $0x139] sm:$0xff] %vm311, %v305
      %385 = vst.msk [vmem:[%s357 + $0x141] sm:$0xff] %vm311, %v306
      %386 = vst.msk [vmem:[%s357 + $0x151] sm:$0xff] %vm311, %v307
      %387 = vst.msk [vmem:[%s357 + $0x159] sm:$0xff] %vm311, %v308
      %388 = vst.msk [vmem:[%s357 + $0x169] sm:$0xff] %vm311, %v309
      %389 = vst.msk [vmem:[%s357 + $0x171] sm:$0xff] %vm311, %v310
      %v390 = vld [vmem:[#allocation2] sm:$0xff]
      %v391 = vld [vmem:[#allocation2 + $0x8] sm:$0xff]
      %v392 = vld [vmem:[#allocation2 + $0x18] sm:$0xff]
      %v393 = vld [vmem:[#allocation2 + $0x20] sm:$0xff]
      %v394 = vld [vmem:[#allocation2 + $0x30] sm:$0xff]
      %v395 = vld [vmem:[#allocation2 + $0x38] sm:$0xff]
      %v396 = vld [vmem:[#allocation2 + $0x48] sm:$0xff]
      %v397 = vld [vmem:[#allocation2 + $0x50] sm:$0xff]
      %v398 = vld [vmem:[#allocation2 + $0x60] sm:$0xff]
      %v399 = vld [vmem:[#allocation2 + $0x68] sm:$0xff]
      %v400 = vld [vmem:[#allocation2 + $0x78] sm:$0xff]
      %v401 = vld [vmem:[#allocation2 + $0x80] sm:$0xff]
      %v402 = vld [vmem:[#allocation2 + $0x90] sm:$0xff]
      %v403 = vld [vmem:[#allocation2 + $0x98] sm:$0xff]
      %v404 = vld [vmem:[#allocation2 + $0xa8] sm:$0xff]
      %v405 = vld [vmem:[#allocation2 + $0xb0] sm:$0xff]
      %v406 = vld [vmem:[#allocation2 + $0xc0] sm:$0xff]
      %v407 = vld [vmem:[#allocation2 + $0xc8] sm:$0xff]
      %v408 = vld [vmem:[#allocation2 + $0xd8] sm:$0xff]
      %v409 = vld [vmem:[#allocation2 + $0xe0] sm:$0xff]
      %v410 = vld [vmem:[#allocation2 + $0xf0] sm:$0xff]
      %v411 = vld [vmem:[#allocation2 + $0xf8] sm:$0xff]
      %v412 = vld [vmem:[#allocation2 + $0x108] sm:$0xff]
      %v413 = vld [vmem:[#allocation2 + $0x110] sm:$0xff]
      %v414 = vld [vmem:[#allocation2 + $0x120] sm:$0xff]
      %v415 = vld [vmem:[#allocation2 + $0x128] sm:$0xff]
      %v416 = vld [vmem:[#allocation2 + $0x138] sm:$0xff]
      %v417 = vld [vmem:[#allocation2 + $0x140] sm:$0xff]
      %v418 = vld [vmem:[#allocation2 + $0x150] sm:$0xff]
      %v419 = vld [vmem:[#allocation2 + $0x158] sm:$0xff]
      %v420 = vld [vmem:[#allocation2 + $0x168] sm:$0xff]
      %v421 = vld [vmem:[#allocation2 + $0x170] sm:$0xff]
      %422 = vst.msk [vmem:[#allocation4] sm:$0xff] %vm311, %v390
      %423 = vst.msk [vmem:[#allocation4 + $0x8] sm:$0xff] %vm311, %v391
      %424 = vst.msk [vmem:[#allocation4 + $0x10] sm:$0xff] %vm311, %v392
      %425 = vst.msk [vmem:[#allocation4 + $0x18] sm:$0xff] %vm311, %v393
      %426 = vst.msk [vmem:[#allocation4 + $0x20] sm:$0xff] %vm311, %v394
      %427 = vst.msk [vmem:[#allocation4 + $0x28] sm:$0xff] %vm311, %v395
      %428 = vst.msk [vmem:[#allocation4 + $0x30] sm:$0xff] %vm311, %v396
      %429 = vst.msk [vmem:[#allocation4 + $0x38] sm:$0xff] %vm311, %v397
      %430 = vst.msk [vmem:[#allocation4 + $0x40] sm:$0xff] %vm311, %v398
      %431 = vst.msk [vmem:[#allocation4 + $0x48] sm:$0xff] %vm311, %v399
      %432 = vst.msk [vmem:[#allocation4 + $0x50] sm:$0xff] %vm311, %v400
      %433 = vst.msk [vmem:[#allocation4 + $0x58] sm:$0xff] %vm311, %v401
      %434 = vst.msk [vmem:[#allocation4 + $0x60] sm:$0xff] %vm311, %v402
      %435 = vst.msk [vmem:[#allocation4 + $0x68] sm:$0xff] %vm311, %v403
      %436 = vst.msk [vmem:[#allocation4 + $0x70] sm:$0xff] %vm311, %v404
      %437 = vst.msk [vmem:[#allocation4 + $0x78] sm:$0xff] %vm311, %v405
      %438 = vst.msk [vmem:[#allocation4 + $0x80] sm:$0xff] %vm311, %v406
      %439 = vst.msk [vmem:[#allocation4 + $0x88] sm:$0xff] %vm311, %v407
      %440 = vst.msk [vmem:[#allocation4 + $0x90] sm:$0xff] %vm311, %v408
      %441 = vst.msk [vmem:[#allocation4 + $0x98] sm:$0xff] %vm311, %v409
      %442 = vst.msk [vmem:[#allocation4 + $0xa0] sm:$0xff] %vm311, %v410
      %443 = vst.msk [vmem:[#allocation4 + $0xa8] sm:$0xff] %vm311, %v411
      %444 = vst.msk [vmem:[#allocation4 + $0xb0] sm:$0xff] %vm311, %v412
      %445 = vst.msk [vmem:[#allocation4 + $0xb8] sm:$0xff] %vm311, %v413
      %446 = vst.msk [vmem:[#allocation4 + $0xc0] sm:$0xff] %vm311, %v414
      %447 = vst.msk [vmem:[#allocation4 + $0xc8] sm:$0xff] %vm311, %v415
      %448 = vst.msk [vmem:[#allocation4 + $0xd0] sm:$0xff] %vm311, %v416
      %449 = vst.msk [vmem:[#allocation4 + $0xd8] sm:$0xff] %vm311, %v417
      %450 = vst.msk [vmem:[#allocation4 + $0xe0] sm:$0xff] %vm311, %v418
      %451 = vst.msk [vmem:[#allocation4 + $0xe8] sm:$0xff] %vm311, %v419
      %452 = vst.msk [vmem:[#allocation4 + $0xf0] sm:$0xff] %vm311, %v420
      %453 = vst.msk [vmem:[#allocation4 + $0xf8] sm:$0xff] %vm311, %v421
      %v454 = vld [vmem:[#allocation2 + $0x1] sm:$0xff]
      %v455 = vld [vmem:[#allocation2 + $0x9] sm:$0xff]
      %v456 = vld [vmem:[#allocation2 + $0x19] sm:$0xff]
      %v457 = vld [vmem:[#allocation2 + $0x21] sm:$0xff]
      %v458 = vld [vmem:[#allocation2 + $0x31] sm:$0xff]
      %v459 = vld [vmem:[#allocation2 + $0x39] sm:$0xff]
      %v460 = vld [vmem:[#allocation2 + $0x49] sm:$0xff]
      %v461 = vld [vmem:[#allocation2 + $0x51] sm:$0xff]
      %v462 = vld [vmem:[#allocation2 + $0x61] sm:$0xff]
      %v463 = vld [vmem:[#allocation2 + $0x69] sm:$0xff]
      %v464 = vld [vmem:[#allocation2 + $0x79] sm:$0xff]
      %v465 = vld [vmem:[#allocation2 + $0x81] sm:$0xff]
      %v466 = vld [vmem:[#allocation2 + $0x91] sm:$0xff]
      %v467 = vld [vmem:[#allocation2 + $0x99] sm:$0xff]
      %v468 = vld [vmem:[#allocation2 + $0xa9] sm:$0xff]
      %v469 = vld [vmem:[#allocation2 + $0xb1] sm:$0xff]
      %v470 = vld [vmem:[#allocation2 + $0xc1] sm:$0xff]
      %v471 = vld [vmem:[#allocation2 + $0xc9] sm:$0xff]
      %v472 = vld [vmem:[#allocation2 + $0xd9] sm:$0xff]
      %v473 = vld [vmem:[#allocation2 + $0xe1] sm:$0xff]
      %v474 = vld [vmem:[#allocation2 + $0xf1] sm:$0xff]
      %v475 = vld [vmem:[#allocation2 + $0xf9] sm:$0xff]
      %v476 = vld [vmem:[#allocation2 + $0x109] sm:$0xff]
      %v477 = vld [vmem:[#allocation2 + $0x111] sm:$0xff]
      %v478 = vld [vmem:[#allocation2 + $0x121] sm:$0xff]
      %v479 = vld [vmem:[#allocation2 + $0x129] sm:$0xff]
      %v480 = vld [vmem:[#allocation2 + $0x139] sm:$0xff]
      %v481 = vld [vmem:[#allocation2 + $0x141] sm:$0xff]
      %v482 = vld [vmem:[#allocation2 + $0x151] sm:$0xff]
      %v483 = vld [vmem:[#allocation2 + $0x159] sm:$0xff]
      %v484 = vld [vmem:[#allocation2 + $0x169] sm:$0xff]
      %v485 = vld [vmem:[#allocation2 + $0x171] sm:$0xff]
      %518 = vrot.lane.b32.xlu0 %v454, 4
      %v519 = vpop.permute.xlu0 %518
      %520 = vrot.lane.b32.xlu0 %v455, 4
      %v521 = vpop.permute.xlu0 %520
      %522 = vrot.lane.b32.xlu0 %v456, 4
      %v523 = vpop.permute.xlu0 %522
      %524 = vrot.lane.b32.xlu0 %v457, 4
      %v525 = vpop.permute.xlu0 %524
      %526 = vrot.lane.b32.xlu0 %v458, 4
      %v527 = vpop.permute.xlu0 %526
      %528 = vrot.lane.b32.xlu0 %v459, 4
      %v529 = vpop.permute.xlu0 %528
      %530 = vrot.lane.b32.xlu0 %v460, 4
      %v531 = vpop.permute.xlu0 %530
      %532 = vrot.lane.b32.xlu0 %v461, 4
      %v533 = vpop.permute.xlu0 %532
      %534 = vrot.lane.b32.xlu0 %v462, 4
      %v535 = vpop.permute.xlu0 %534
      %536 = vrot.lane.b32.xlu0 %v463, 4
      %v537 = vpop.permute.xlu0 %536
      %538 = vrot.lane.b32.xlu0 %v464, 4
      %v539 = vpop.permute.xlu0 %538
      %540 = vrot.lane.b32.xlu0 %v465, 4
      %v541 = vpop.permute.xlu0 %540
      %542 = vrot.lane.b32.xlu0 %v466, 4
      %v543 = vpop.permute.xlu0 %542
      %544 = vrot.lane.b32.xlu0 %v467, 4
      %v545 = vpop.permute.xlu0 %544
      %546 = vrot.lane.b32.xlu0 %v468, 4
      %v547 = vpop.permute.xlu0 %546
      %548 = vrot.lane.b32.xlu0 %v469, 4
      %v549 = vpop.permute.xlu0 %548
      %550 = vrot.lane.b32.xlu0 %v470, 4
      %v551 = vpop.permute.xlu0 %550
      %552 = vrot.lane.b32.xlu0 %v471, 4
      %v553 = vpop.permute.xlu0 %552
      %554 = vrot.lane.b32.xlu0 %v472, 4
      %v555 = vpop.permute.xlu0 %554
      %556 = vrot.lane.b32.xlu0 %v473, 4
      %v557 = vpop.permute.xlu0 %556
      %558 = vrot.lane.b32.xlu0 %v474, 4
      %v559 = vpop.permute.xlu0 %558
      %560 = vrot.lane.b32.xlu0 %v475, 4
      %v561 = vpop.permute.xlu0 %560
      %562 = vrot.lane.b32.xlu0 %v476, 4
      %v563 = vpop.permute.xlu0 %562
      %564 = vrot.lane.b32.xlu0 %v477, 4
      %v565 = vpop.permute.xlu0 %564
      %566 = vrot.lane.b32.xlu0 %v478, 4
      %v567 = vpop.permute.xlu0 %566
      %568 = vrot.lane.b32.xlu0 %v479, 4
      %v569 = vpop.permute.xlu0 %568
      %570 = vrot.lane.b32.xlu0 %v480, 4
      %v571 = vpop.permute.xlu0 %570
      %572 = vrot.lane.b32.xlu0 %v481, 4
      %v573 = vpop.permute.xlu0 %572
      %574 = vrot.lane.b32.xlu0 %v482, 4
      %v575 = vpop.permute.xlu0 %574
      %576 = vrot.lane.b32.xlu0 %v483, 4
      %v577 = vpop.permute.xlu0 %576
      %578 = vrot.lane.b32.xlu0 %v484, 4
      %v579 = vpop.permute.xlu0 %578
      %580 = vrot.lane.b32.xlu0 %v485, 4
      %v581 = vpop.permute.xlu0 %580
      %vm614 = vcmask 64544
      %615 = vst.msk [vmem:[#allocation4] sm:$0xff] %vm614, %v519
      %616 = vst.msk [vmem:[#allocation4 + $0x8] sm:$0xff] %vm614, %v521
      %617 = vst.msk [vmem:[#allocation4 + $0x10] sm:$0xff] %vm614, %v523
      %618 = vst.msk [vmem:[#allocation4 + $0x18] sm:$0xff] %vm614, %v525
      %619 = vst.msk [vmem:[#allocation4 + $0x20] sm:$0xff] %vm614, %v527
      %620 = vst.msk [vmem:[#allocation4 + $0x28] sm:$0xff] %vm614, %v529
      %621 = vst.msk [vmem:[#allocation4 + $0x30] sm:$0xff] %vm614, %v531
      %622 = vst.msk [vmem:[#allocation4 + $0x38] sm:$0xff] %vm614, %v533
      %623 = vst.msk [vmem:[#allocation4 + $0x40] sm:$0xff] %vm614, %v535
      %624 = vst.msk [vmem:[#allocation4 + $0x48] sm:$0xff] %vm614, %v537
      %625 = vst.msk [vmem:[#allocation4 + $0x50] sm:$0xff] %vm614, %v539
      %626 = vst.msk [vmem:[#allocation4 + $0x58] sm:$0xff] %vm614, %v541
      %627 = vst.msk [vmem:[#allocation4 + $0x60] sm:$0xff] %vm614, %v543
      %628 = vst.msk [vmem:[#allocation4 + $0x68] sm:$0xff] %vm614, %v545
      %629 = vst.msk [vmem:[#allocation4 + $0x70] sm:$0xff] %vm614, %v547
      %630 = vst.msk [vmem:[#allocation4 + $0x78] sm:$0xff] %vm614, %v549
      %631 = vst.msk [vmem:[#allocation4 + $0x80] sm:$0xff] %vm614, %v551
      %632 = vst.msk [vmem:[#allocation4 + $0x88] sm:$0xff] %vm614, %v553
      %633 = vst.msk [vmem:[#allocation4 + $0x90] sm:$0xff] %vm614, %v555
      %634 = vst.msk [vmem:[#allocation4 + $0x98] sm:$0xff] %vm614, %v557
      %635 = vst.msk [vmem:[#allocation4 + $0xa0] sm:$0xff] %vm614, %v559
      %636 = vst.msk [vmem:[#allocation4 + $0xa8] sm:$0xff] %vm614, %v561
      %637 = vst.msk [vmem:[#allocation4 + $0xb0] sm:$0xff] %vm614, %v563
      %638 = vst.msk [vmem:[#allocation4 + $0xb8] sm:$0xff] %vm614, %v565
      %639 = vst.msk [vmem:[#allocation4 + $0xc0] sm:$0xff] %vm614, %v567
      %640 = vst.msk [vmem:[#allocation4 + $0xc8] sm:$0xff] %vm614, %v569
      %641 = vst.msk [vmem:[#allocation4 + $0xd0] sm:$0xff] %vm614, %v571
      %642 = vst.msk [vmem:[#allocation4 + $0xd8] sm:$0xff] %vm614, %v573
      %643 = vst.msk [vmem:[#allocation4 + $0xe0] sm:$0xff] %vm614, %v575
      %644 = vst.msk [vmem:[#allocation4 + $0xe8] sm:$0xff] %vm614, %v577
      %645 = vst.msk [vmem:[#allocation4 + $0xf0] sm:$0xff] %vm614, %v579
      %646 = vst.msk [vmem:[#allocation4 + $0xf8] sm:$0xff] %vm614, %v581
      %v647 = vld [vmem:[#allocation2 + $0x2] sm:$0xff]
      %v648 = vld [vmem:[#allocation2 + $0xa] sm:$0xff]
      %v649 = vld [vmem:[#allocation2 + $0x1a] sm:$0xff]
      %v650 = vld [vmem:[#allocation2 + $0x22] sm:$0xff]
      %v651 = vld [vmem:[#allocation2 + $0x32] sm:$0xff]
      %v652 = vld [vmem:[#allocation2 + $0x3a] sm:$0xff]
      %v653 = vld [vmem:[#allocation2 + $0x4a] sm:$0xff]
      %v654 = vld [vmem:[#allocation2 + $0x52] sm:$0xff]
      %v655 = vld [vmem:[#allocation2 + $0x62] sm:$0xff]
      %v656 = vld [vmem:[#allocation2 + $0x6a] sm:$0xff]
      %v657 = vld [vmem:[#allocation2 + $0x7a] sm:$0xff]
      %v658 = vld [vmem:[#allocation2 + $0x82] sm:$0xff]
      %v659 = vld [vmem:[#allocation2 + $0x92] sm:$0xff]
      %v660 = vld [vmem:[#allocation2 + $0x9a] sm:$0xff]
      %v661 = vld [vmem:[#allocation2 + $0xaa] sm:$0xff]
      %v662 = vld [vmem:[#allocation2 + $0xb2] sm:$0xff]
      %v663 = vld [vmem:[#allocation2 + $0xc2] sm:$0xff]
      %v664 = vld [vmem:[#allocation2 + $0xca] sm:$0xff]
      %v665 = vld [vmem:[#allocation2 + $0xda] sm:$0xff]
      %v666 = vld [vmem:[#allocation2 + $0xe2] sm:$0xff]
      %v667 = vld [vmem:[#allocation2 + $0xf2] sm:$0xff]
      %v668 = vld [vmem:[#allocation2 + $0xfa] sm:$0xff]
      %v669 = vld [vmem:[#allocation2 + $0x10a] sm:$0xff]
      %v670 = vld [vmem:[#allocation2 + $0x112] sm:$0xff]
      %v671 = vld [vmem:[#allocation2 + $0x122] sm:$0xff]
      %v672 = vld [vmem:[#allocation2 + $0x12a] sm:$0xff]
      %v673 = vld [vmem:[#allocation2 + $0x13a] sm:$0xff]
      %v674 = vld [vmem:[#allocation2 + $0x142] sm:$0xff]
      %v675 = vld [vmem:[#allocation2 + $0x152] sm:$0xff]
      %v676 = vld [vmem:[#allocation2 + $0x15a] sm:$0xff]
      %v677 = vld [vmem:[#allocation2 + $0x16a] sm:$0xff]
      %v678 = vld [vmem:[#allocation2 + $0x172] sm:$0xff]
      %711 = vrot.lane.b32.xlu0 %v647, 8
      %v712 = vpop.permute.xlu0 %711
      %713 = vrot.lane.b32.xlu0 %v648, 8
      %v714 = vpop.permute.xlu0 %713
      %715 = vrot.lane.b32.xlu0 %v649, 8
      %v716 = vpop.permute.xlu0 %715
      %717 = vrot.lane.b32.xlu0 %v650, 8
      %v718 = vpop.permute.xlu0 %717
      %719 = vrot.lane.b32.xlu0 %v651, 8
      %v720 = vpop.permute.xlu0 %719
      %721 = vrot.lane.b32.xlu0 %v652, 8
      %v722 = vpop.permute.xlu0 %721
      %723 = vrot.lane.b32.xlu0 %v653, 8
      %v724 = vpop.permute.xlu0 %723
      %725 = vrot.lane.b32.xlu0 %v654, 8
      %v726 = vpop.permute.xlu0 %725
      %727 = vrot.lane.b32.xlu0 %v655, 8
      %v728 = vpop.permute.xlu0 %727
      %729 = vrot.lane.b32.xlu0 %v656, 8
      %v730 = vpop.permute.xlu0 %729
      %731 = vrot.lane.b32.xlu0 %v657, 8
      %v732 = vpop.permute.xlu0 %731
      %733 = vrot.lane.b32.xlu0 %v658, 8
      %v734 = vpop.permute.xlu0 %733
      %735 = vrot.lane.b32.xlu0 %v659, 8
      %v736 = vpop.permute.xlu0 %735
      %737 = vrot.lane.b32.xlu0 %v660, 8
      %v738 = vpop.permute.xlu0 %737
      %739 = vrot.lane.b32.xlu0 %v661, 8
      %v740 = vpop.permute.xlu0 %739
      %741 = vrot.lane.b32.xlu0 %v662, 8
      %v742 = vpop.permute.xlu0 %741
      %743 = vrot.lane.b32.xlu0 %v663, 8
      %v744 = vpop.permute.xlu0 %743
      %745 = vrot.lane.b32.xlu0 %v664, 8
      %v746 = vpop.permute.xlu0 %745
      %747 = vrot.lane.b32.xlu0 %v665, 8
      %v748 = vpop.permute.xlu0 %747
      %749 = vrot.lane.b32.xlu0 %v666, 8
      %v750 = vpop.permute.xlu0 %749
      %751 = vrot.lane.b32.xlu0 %v667, 8
      %v752 = vpop.permute.xlu0 %751
      %753 = vrot.lane.b32.xlu0 %v668, 8
      %v754 = vpop.permute.xlu0 %753
      %755 = vrot.lane.b32.xlu0 %v669, 8
      %v756 = vpop.permute.xlu0 %755
      %757 = vrot.lane.b32.xlu0 %v670, 8
      %v758 = vpop.permute.xlu0 %757
      %759 = vrot.lane.b32.xlu0 %v671, 8
      %v760 = vpop.permute.xlu0 %759
      %761 = vrot.lane.b32.xlu0 %v672, 8
      %v762 = vpop.permute.xlu0 %761
      %763 = vrot.lane.b32.xlu0 %v673, 8
      %v764 = vpop.permute.xlu0 %763
      %765 = vrot.lane.b32.xlu0 %v674, 8
      %v766 = vpop.permute.xlu0 %765
      %767 = vrot.lane.b32.xlu0 %v675, 8
      %v768 = vpop.permute.xlu0 %767
      %769 = vrot.lane.b32.xlu0 %v676, 8
      %v770 = vpop.permute.xlu0 %769
      %771 = vrot.lane.b32.xlu0 %v677, 8
      %v772 = vpop.permute.xlu0 %771
      %773 = vrot.lane.b32.xlu0 %v678, 8
      %v774 = vpop.permute.xlu0 %773
      %vm807 = vcmask 97344
      %808 = vst.msk [vmem:[#allocation4] sm:$0xff] %vm807, %v712
      %809 = vst.msk [vmem:[#allocation4 + $0x8] sm:$0xff] %vm807, %v714
      %810 = vst.msk [vmem:[#allocation4 + $0x10] sm:$0xff] %vm807, %v716
      %811 = vst.msk [vmem:[#allocation4 + $0x18] sm:$0xff] %vm807, %v718
      %812 = vst.msk [vmem:[#allocation4 + $0x20] sm:$0xff] %vm807, %v720
      %813 = vst.msk [vmem:[#allocation4 + $0x28] sm:$0xff] %vm807, %v722
      %814 = vst.msk [vmem:[#allocation4 + $0x30] sm:$0xff] %vm807, %v724
      %815 = vst.msk [vmem:[#allocation4 + $0x38] sm:$0xff] %vm807, %v726
      %816 = vst.msk [vmem:[#allocation4 + $0x40] sm:$0xff] %vm807, %v728
      %817 = vst.msk [vmem:[#allocation4 + $0x48] sm:$0xff] %vm807, %v730
      %818 = vst.msk [vmem:[#allocation4 + $0x50] sm:$0xff] %vm807, %v732
      %819 = vst.msk [vmem:[#allocation4 + $0x58] sm:$0xff] %vm807, %v734
      %820 = vst.msk [vmem:[#allocation4 + $0x60] sm:$0xff] %vm807, %v736
      %821 = vst.msk [vmem:[#allocation4 + $0x68] sm:$0xff] %vm807, %v738
      %822 = vst.msk [vmem:[#allocation4 + $0x70] sm:$0xff] %vm807, %v740
      %823 = vst.msk [vmem:[#allocation4 + $0x78] sm:$0xff] %vm807, %v742
      %824 = vst.msk [vmem:[#allocation4 + $0x80] sm:$0xff] %vm807, %v744
      %825 = vst.msk [vmem:[#allocation4 + $0x88] sm:$0xff] %vm807, %v746
      %826 = vst.msk [vmem:[#allocation4 + $0x90] sm:$0xff] %vm807, %v748
      %827 = vst.msk [vmem:[#allocation4 + $0x98] sm:$0xff] %vm807, %v750
      %828 = vst.msk [vmem:[#allocation4 + $0xa0] sm:$0xff] %vm807, %v752
      %829 = vst.msk [vmem:[#allocation4 + $0xa8] sm:$0xff] %vm807, %v754
      %830 = vst.msk [vmem:[#allocation4 + $0xb0] sm:$0xff] %vm807, %v756
      %831 = vst.msk [vmem:[#allocation4 + $0xb8] sm:$0xff] %vm807, %v758
      %832 = vst.msk [vmem:[#allocation4 + $0xc0] sm:$0xff] %vm807, %v760
      %833 = vst.msk [vmem:[#allocation4 + $0xc8] sm:$0xff] %vm807, %v762
      %834 = vst.msk [vmem:[#allocation4 + $0xd0] sm:$0xff] %vm807, %v764
      %835 = vst.msk [vmem:[#allocation4 + $0xd8] sm:$0xff] %vm807, %v766
      %836 = vst.msk [vmem:[#allocation4 + $0xe0] sm:$0xff] %vm807, %v768
      %837 = vst.msk [vmem:[#allocation4 + $0xe8] sm:$0xff] %vm807, %v770
      %838 = vst.msk [vmem:[#allocation4 + $0xf0] sm:$0xff] %vm807, %v772
      %839 = vst.msk [vmem:[#allocation4 + $0xf8] sm:$0xff] %vm807, %v774
      %v840 = vld [vmem:[%s357] sm:$0xff]
      %v841 = vld [vmem:[%s357 + $0x8] sm:$0xff]
      %v842 = vld [vmem:[%s357 + $0x18] sm:$0xff]
      %v843 = vld [vmem:[%s357 + $0x20] sm:$0xff]
      %v844 = vld [vmem:[%s357 + $0x30] sm:$0xff]
      %v845 = vld [vmem:[%s357 + $0x38] sm:$0xff]
      %v846 = vld [vmem:[%s357 + $0x48] sm:$0xff]
      %v847 = vld [vmem:[%s357 + $0x50] sm:$0xff]
      %v848 = vld [vmem:[%s357 + $0x60] sm:$0xff]
      %v849 = vld [vmem:[%s357 + $0x68] sm:$0xff]
      %v850 = vld [vmem:[%s357 + $0x78] sm:$0xff]
      %v851 = vld [vmem:[%s357 + $0x80] sm:$0xff]
      %v852 = vld [vmem:[%s357 + $0x90] sm:$0xff]
      %v853 = vld [vmem:[%s357 + $0x98] sm:$0xff]
      %v854 = vld [vmem:[%s357 + $0xa8] sm:$0xff]
      %v855 = vld [vmem:[%s357 + $0xb0] sm:$0xff]
      %v856 = vld [vmem:[%s357 + $0xc0] sm:$0xff]
      %v857 = vld [vmem:[%s357 + $0xc8] sm:$0xff]
      %v858 = vld [vmem:[%s357 + $0xd8] sm:$0xff]
      %v859 = vld [vmem:[%s357 + $0xe0] sm:$0xff]
      %v860 = vld [vmem:[%s357 + $0xf0] sm:$0xff]
      %v861 = vld [vmem:[%s357 + $0xf8] sm:$0xff]
      %v862 = vld [vmem:[%s357 + $0x108] sm:$0xff]
      %v863 = vld [vmem:[%s357 + $0x110] sm:$0xff]
      %v864 = vld [vmem:[%s357 + $0x120] sm:$0xff]
      %v865 = vld [vmem:[%s357 + $0x128] sm:$0xff]
      %v866 = vld [vmem:[%s357 + $0x138] sm:$0xff]
      %v867 = vld [vmem:[%s357 + $0x140] sm:$0xff]
      %v868 = vld [vmem:[%s357 + $0x150] sm:$0xff]
      %v869 = vld [vmem:[%s357 + $0x158] sm:$0xff]
      %v870 = vld [vmem:[%s357 + $0x168] sm:$0xff]
      %v871 = vld [vmem:[%s357 + $0x170] sm:$0xff]
      %904 = vrot.lane.b32.xlu0 %v840, 12
      %v905 = vpop.permute.xlu0 %904
      %906 = vrot.lane.b32.xlu0 %v841, 12
      %v907 = vpop.permute.xlu0 %906
      %908 = vrot.lane.b32.xlu0 %v842, 12
      %v909 = vpop.permute.xlu0 %908
      %910 = vrot.lane.b32.xlu0 %v843, 12
      %v911 = vpop.permute.xlu0 %910
      %912 = vrot.lane.b32.xlu0 %v844, 12
      %v913 = vpop.permute.xlu0 %912
      %914 = vrot.lane.b32.xlu0 %v845, 12
      %v915 = vpop.permute.xlu0 %914
      %916 = vrot.lane.b32.xlu0 %v846, 12
      %v917 = vpop.permute.xlu0 %916
      %918 = vrot.lane.b32.xlu0 %v847, 12
      %v919 = vpop.permute.xlu0 %918
      %920 = vrot.lane.b32.xlu0 %v848, 12
      %v921 = vpop.permute.xlu0 %920
      %922 = vrot.lane.b32.xlu0 %v849, 12
      %v923 = vpop.permute.xlu0 %922
      %924 = vrot.lane.b32.xlu0 %v850, 12
      %v925 = vpop.permute.xlu0 %924
      %926 = vrot.lane.b32.xlu0 %v851, 12
      %v927 = vpop.permute.xlu0 %926
      %928 = vrot.lane.b32.xlu0 %v852, 12
      %v929 = vpop.permute.xlu0 %928
      %930 = vrot.lane.b32.xlu0 %v853, 12
      %v931 = vpop.permute.xlu0 %930
      %932 = vrot.lane.b32.xlu0 %v854, 12
      %v933 = vpop.permute.xlu0 %932
      %934 = vrot.lane.b32.xlu0 %v855, 12
      %v935 = vpop.permute.xlu0 %934
      %936 = vrot.lane.b32.xlu0 %v856, 12
      %v937 = vpop.permute.xlu0 %936
      %938 = vrot.lane.b32.xlu0 %v857, 12
      %v939 = vpop.permute.xlu0 %938
      %940 = vrot.lane.b32.xlu0 %v858, 12
      %v941 = vpop.permute.xlu0 %940
      %942 = vrot.lane.b32.xlu0 %v859, 12
      %v943 = vpop.permute.xlu0 %942
      %944 = vrot.lane.b32.xlu0 %v860, 12
      %v945 = vpop.permute.xlu0 %944
      %946 = vrot.lane.b32.xlu0 %v861, 12
      %v947 = vpop.permute.xlu0 %946
      %948 = vrot.lane.b32.xlu0 %v862, 12
      %v949 = vpop.permute.xlu0 %948
      %950 = vrot.lane.b32.xlu0 %v863, 12
      %v951 = vpop.permute.xlu0 %950
      %952 = vrot.lane.b32.xlu0 %v864, 12
      %v953 = vpop.permute.xlu0 %952
      %954 = vrot.lane.b32.xlu0 %v865, 12
      %v955 = vpop.permute.xlu0 %954
      %956 = vrot.lane.b32.xlu0 %v866, 12
      %v957 = vpop.permute.xlu0 %956
      %958 = vrot.lane.b32.xlu0 %v867, 12
      %v959 = vpop.permute.xlu0 %958
      %960 = vrot.lane.b32.xlu0 %v868, 12
      %v961 = vpop.permute.xlu0 %960
      %962 = vrot.lane.b32.xlu0 %v869, 12
      %v963 = vpop.permute.xlu0 %962
      %964 = vrot.lane.b32.xlu0 %v870, 12
      %v965 = vpop.permute.xlu0 %964
      %966 = vrot.lane.b32.xlu0 %v871, 12
      %v967 = vpop.permute.xlu0 %966
      %vm1000 = vcmask 130144
      %1001 = vst.msk [vmem:[#allocation4] sm:$0xff] %vm1000, %v905
      %1002 = vst.msk [vmem:[#allocation4 + $0x8] sm:$0xff] %vm1000, %v907
      %1003 = vst.msk [vmem:[#allocation4 + $0x10] sm:$0xff] %vm1000, %v909
      %1004 = vst.msk [vmem:[#allocation4 + $0x18] sm:$0xff] %vm1000, %v911
      %1005 = vst.msk [vmem:[#allocation4 + $0x20] sm:$0xff] %vm1000, %v913
      %1006 = vst.msk [vmem:[#allocation4 + $0x28] sm:$0xff] %vm1000, %v915
      %1007 = vst.msk [vmem:[#allocation4 + $0x30] sm:$0xff] %vm1000, %v917
      %1008 = vst.msk [vmem:[#allocation4 + $0x38] sm:$0xff] %vm1000, %v919
      %1009 = vst.msk [vmem:[#allocation4 + $0x40] sm:$0xff] %vm1000, %v921
      %1010 = vst.msk [vmem:[#allocation4 + $0x48] sm:$0xff] %vm1000, %v923
      %1011 = vst.msk [vmem:[#allocation4 + $0x50] sm:$0xff] %vm1000, %v925
      %1012 = vst.msk [vmem:[#allocation4 + $0x58] sm:$0xff] %vm1000, %v927
      %1013 = vst.msk [vmem:[#allocation4 + $0x60] sm:$0xff] %vm1000, %v929
      %1014 = vst.msk [vmem:[#allocation4 + $0x68] sm:$0xff] %vm1000, %v931
      %1015 = vst.msk [vmem:[#allocation4 + $0x70] sm:$0xff] %vm1000, %v933
      %1016 = vst.msk [vmem:[#allocation4 + $0x78] sm:$0xff] %vm1000, %v935
      %1017 = vst.msk [vmem:[#allocation4 + $0x80] sm:$0xff] %vm1000, %v937
      %1018 = vst.msk [vmem:[#allocation4 + $0x88] sm:$0xff] %vm1000, %v939
      %1019 = vst.msk [vmem:[#allocation4 + $0x90] sm:$0xff] %vm1000, %v941
      %1020 = vst.msk [vmem:[#allocation4 + $0x98] sm:$0xff] %vm1000, %v943
      %1021 = vst.msk [vmem:[#allocation4 + $0xa0] sm:$0xff] %vm1000, %v945
      %1022 = vst.msk [vmem:[#allocation4 + $0xa8] sm:$0xff] %vm1000, %v947
      %1023 = vst.msk [vmem:[#allocation4 + $0xb0] sm:$0xff] %vm1000, %v949
      %1024 = vst.msk [vmem:[#allocation4 + $0xb8] sm:$0xff] %vm1000, %v951
      %1025 = vst.msk [vmem:[#allocation4 + $0xc0] sm:$0xff] %vm1000, %v953
      %1026 = vst.msk [vmem:[#allocation4 + $0xc8] sm:$0xff] %vm1000, %v955
      %1027 = vst.msk [vmem:[#allocation4 + $0xd0] sm:$0xff] %vm1000, %v957
      %1028 = vst.msk [vmem:[#allocation4 + $0xd8] sm:$0xff] %vm1000, %v959
      %1029 = vst.msk [vmem:[#allocation4 + $0xe0] sm:$0xff] %vm1000, %v961
      %1030 = vst.msk [vmem:[#allocation4 + $0xe8] sm:$0xff] %vm1000, %v963
      %1031 = vst.msk [vmem:[#allocation4 + $0xf0] sm:$0xff] %vm1000, %v965
      %1032 = vst.msk [vmem:[#allocation4 + $0xf8] sm:$0xff] %vm1000, %v967
      %v1033 = vld [vmem:[%s357 + $0x1] sm:$0xff]
      %v1034 = vld [vmem:[%s357 + $0x9] sm:$0xff]
      %v1035 = vld [vmem:[%s357 + $0x19] sm:$0xff]
      %v1036 = vld [vmem:[%s357 + $0x21] sm:$0xff]
      %v1037 = vld [vmem:[%s357 + $0x31] sm:$0xff]
      %v1038 = vld [vmem:[%s357 + $0x39] sm:$0xff]
      %v1039 = vld [vmem:[%s357 + $0x49] sm:$0xff]
      %v1040 = vld [vmem:[%s357 + $0x51] sm:$0xff]
      %v1041 = vld [vmem:[%s357 + $0x61] sm:$0xff]
      %v1042 = vld [vmem:[%s357 + $0x69] sm:$0xff]
      %v1043 = vld [vmem:[%s357 + $0x79] sm:$0xff]
      %v1044 = vld [vmem:[%s357 + $0x81] sm:$0xff]
      %v1045 = vld [vmem:[%s357 + $0x91] sm:$0xff]
      %v1046 = vld [vmem:[%s357 + $0x99] sm:$0xff]
      %v1047 = vld [vmem:[%s357 + $0xa9] sm:$0xff]
      %v1048 = vld [vmem:[%s357 + $0xb1] sm:$0xff]
      %v1049 = vld [vmem:[%s357 + $0xc1] sm:$0xff]
      %v1050 = vld [vmem:[%s357 + $0xc9] sm:$0xff]
      %v1051 = vld [vmem:[%s357 + $0xd9] sm:$0xff]
      %v1052 = vld [vmem:[%s357 + $0xe1] sm:$0xff]
      %v1053 = vld [vmem:[%s357 + $0xf1] sm:$0xff]
      %v1054 = vld [vmem:[%s357 + $0xf9] sm:$0xff]
      %v1055 = vld [vmem:[%s357 + $0x109] sm:$0xff]
      %v1056 = vld [vmem:[%s357 + $0x111] sm:$0xff]
      %v1057 = vld [vmem:[%s357 + $0x121] sm:$0xff]
      %v1058 = vld [vmem:[%s357 + $0x129] sm:$0xff]
      %v1059 = vld [vmem:[%s357 + $0x139] sm:$0xff]
      %v1060 = vld [vmem:[%s357 + $0x141] sm:$0xff]
      %v1061 = vld [vmem:[%s357 + $0x151] sm:$0xff]
      %v1062 = vld [vmem:[%s357 + $0x159] sm:$0xff]
      %v1063 = vld [vmem:[%s357 + $0x169] sm:$0xff]
      %v1064 = vld [vmem:[%s357 + $0x171] sm:$0xff]
      %1097 = vrot.lane.b32.xlu0 %v1033, 16
      %v1098 = vpop.permute.xlu0 %1097
      %1099 = vrot.lane.b32.xlu0 %v1034, 16
      %v1100 = vpop.permute.xlu0 %1099
      %1101 = vrot.lane.b32.xlu0 %v1035, 16
      %v1102 = vpop.permute.xlu0 %1101
      %1103 = vrot.lane.b32.xlu0 %v1036, 16
      %v1104 = vpop.permute.xlu0 %1103
      %1105 = vrot.lane.b32.xlu0 %v1037, 16
      %v1106 = vpop.permute.xlu0 %1105
      %1107 = vrot.lane.b32.xlu0 %v1038, 16
      %v1108 = vpop.permute.xlu0 %1107
      %1109 = vrot.lane.b32.xlu0 %v1039, 16
      %v1110 = vpop.permute.xlu0 %1109
      %1111 = vrot.lane.b32.xlu0 %v1040, 16
      %v1112 = vpop.permute.xlu0 %1111
      %1113 = vrot.lane.b32.xlu0 %v1041, 16
      %v1114 = vpop.permute.xlu0 %1113
      %1115 = vrot.lane.b32.xlu0 %v1042, 16
      %v1116 = vpop.permute.xlu0 %1115
      %1117 = vrot.lane.b32.xlu0 %v1043, 16
      %v1118 = vpop.permute.xlu0 %1117
      %1119 = vrot.lane.b32.xlu0 %v1044, 16
      %v1120 = vpop.permute.xlu0 %1119
      %1121 = vrot.lane.b32.xlu0 %v1045, 16
      %v1122 = vpop.permute.xlu0 %1121
      %1123 = vrot.lane.b32.xlu0 %v1046, 16
      %v1124 = vpop.permute.xlu0 %1123
      %1125 = vrot.lane.b32.xlu0 %v1047, 16
      %v1126 = vpop.permute.xlu0 %1125
      %1127 = vrot.lane.b32.xlu0 %v1048, 16
      %v1128 = vpop.permute.xlu0 %1127
      %1129 = vrot.lane.b32.xlu0 %v1049, 16
      %v1130 = vpop.permute.xlu0 %1129
      %1131 = vrot.lane.b32.xlu0 %v1050, 16
      %v1132 = vpop.permute.xlu0 %1131
      %1133 = vrot.lane.b32.xlu0 %v1051, 16
      %v1134 = vpop.permute.xlu0 %1133
      %1135 = vrot.lane.b32.xlu0 %v1052, 16
      %v1136 = vpop.permute.xlu0 %1135
      %1137 = vrot.lane.b32.xlu0 %v1053, 16
      %v1138 = vpop.permute.xlu0 %1137
      %1139 = vrot.lane.b32.xlu0 %v1054, 16
      %v1140 = vpop.permute.xlu0 %1139
      %1141 = vrot.lane.b32.xlu0 %v1055, 16
      %v1142 = vpop.permute.xlu0 %1141
      %1143 = vrot.lane.b32.xlu0 %v1056, 16
      %v1144 = vpop.permute.xlu0 %1143
      %1145 = vrot.lane.b32.xlu0 %v1057, 16
      %v1146 = vpop.permute.xlu0 %1145
      %1147 = vrot.lane.b32.xlu0 %v1058, 16
      %v1148 = vpop.permute.xlu0 %1147
      %1149 = vrot.lane.b32.xlu0 %v1059, 16
      %v1150 = vpop.permute.xlu0 %1149
      %1151 = vrot.lane.b32.xlu0 %v1060, 16
      %v1152 = vpop.permute.xlu0 %1151
      %1153 = vrot.lane.b32.xlu0 %v1061, 16
      %v1154 = vpop.permute.xlu0 %1153
      %1155 = vrot.lane.b32.xlu0 %v1062, 16
      %v1156 = vpop.permute.xlu0 %1155
      %1157 = vrot.lane.b32.xlu0 %v1063, 16
      %v1158 = vpop.permute.xlu0 %1157
      %1159 = vrot.lane.b32.xlu0 %v1064, 16
      %v1160 = vpop.permute.xlu0 %1159
      %vm1193 = vcmask 162944
      %1194 = vst.msk [vmem:[#allocation4] sm:$0xff] %vm1193, %v1098
      %1195 = vst.msk [vmem:[#allocation4 + $0x8] sm:$0xff] %vm1193, %v1100
      %1196 = vst.msk [vmem:[#allocation4 + $0x10] sm:$0xff] %vm1193, %v1102
      %1197 = vst.msk [vmem:[#allocation4 + $0x18] sm:$0xff] %vm1193, %v1104
      %1198 = vst.msk [vmem:[#allocation4 + $0x20] sm:$0xff] %vm1193, %v1106
      %1199 = vst.msk [vmem:[#allocation4 + $0x28] sm:$0xff] %vm1193, %v1108
      %1200 = vst.msk [vmem:[#allocation4 + $0x30] sm:$0xff] %vm1193, %v1110
      %1201 = vst.msk [vmem:[#allocation4 + $0x38] sm:$0xff] %vm1193, %v1112
      %1202 = vst.msk [vmem:[#allocation4 + $0x40] sm:$0xff] %vm1193, %v1114
      %1203 = vst.msk [vmem:[#allocation4 + $0x48] sm:$0xff] %vm1193, %v1116
      %1204 = vst.msk [vmem:[#allocation4 + $0x50] sm:$0xff] %vm1193, %v1118
      %1205 = vst.msk [vmem:[#allocation4 + $0x58] sm:$0xff] %vm1193, %v1120
      %1206 = vst.msk [vmem:[#allocation4 + $0x60] sm:$0xff] %vm1193, %v1122
      %1207 = vst.msk [vmem:[#allocation4 + $0x68] sm:$0xff] %vm1193, %v1124
      %1208 = vst.msk [vmem:[#allocation4 + $0x70] sm:$0xff] %vm1193, %v1126
      %1209 = vst.msk [vmem:[#allocation4 + $0x78] sm:$0xff] %vm1193, %v1128
      %1210 = vst.msk [vmem:[#allocation4 + $0x80] sm:$0xff] %vm1193, %v1130
      %1211 = vst.msk [vmem:[#allocation4 + $0x88] sm:$0xff] %vm1193, %v1132
      %1212 = vst.msk [vmem:[#allocation4 + $0x90] sm:$0xff] %vm1193, %v1134
      %1213 = vst.msk [vmem:[#allocation4 + $0x98] sm:$0xff] %vm1193, %v1136
      %1214 = vst.msk [vmem:[#allocation4 + $0xa0] sm:$0xff] %vm1193, %v1138
      %1215 = vst.msk [vmem:[#allocation4 + $0xa8] sm:$0xff] %vm1193, %v1140
      %1216 = vst.msk [vmem:[#allocation4 + $0xb0] sm:$0xff] %vm1193, %v1142
      %1217 = vst.msk [vmem:[#allocation4 + $0xb8] sm:$0xff] %vm1193, %v1144
      %1218 = vst.msk [vmem:[#allocation4 + $0xc0] sm:$0xff] %vm1193, %v1146
      %1219 = vst.msk [vmem:[#allocation4 + $0xc8] sm:$0xff] %vm1193, %v1148
      %1220 = vst.msk [vmem:[#allocation4 + $0xd0] sm:$0xff] %vm1193, %v1150
      %1221 = vst.msk [vmem:[#allocation4 + $0xd8] sm:$0xff] %vm1193, %v1152
      %1222 = vst.msk [vmem:[#allocation4 + $0xe0] sm:$0xff] %vm1193, %v1154
      %1223 = vst.msk [vmem:[#allocation4 + $0xe8] sm:$0xff] %vm1193, %v1156
      %1224 = vst.msk [vmem:[#allocation4 + $0xf0] sm:$0xff] %vm1193, %v1158
      %1225 = vst.msk [vmem:[#allocation4 + $0xf8] sm:$0xff] %vm1193, %v1160
      %v1226 = vld [vmem:[%s357 + $0x2] sm:$0xff]
      %v1227 = vld [vmem:[%s357 + $0xa] sm:$0xff]
      %v1228 = vld [vmem:[%s357 + $0x1a] sm:$0xff]
      %v1229 = vld [vmem:[%s357 + $0x22] sm:$0xff]
      %v1230 = vld [vmem:[%s357 + $0x32] sm:$0xff]
      %v1231 = vld [vmem:[%s357 + $0x3a] sm:$0xff]
      %v1232 = vld [vmem:[%s357 + $0x4a] sm:$0xff]
      %v1233 = vld [vmem:[%s357 + $0x52] sm:$0xff]
      %v1234 = vld [vmem:[%s357 + $0x62] sm:$0xff]
      %v1235 = vld [vmem:[%s357 + $0x6a] sm:$0xff]
      %v1236 = vld [vmem:[%s357 + $0x7a] sm:$0xff]
      %v1237 = vld [vmem:[%s357 + $0x82] sm:$0xff]
      %v1238 = vld [vmem:[%s357 + $0x92] sm:$0xff]
      %v1239 = vld [vmem:[%s357 + $0x9a] sm:$0xff]
      %v1240 = vld [vmem:[%s357 + $0xaa] sm:$0xff]
      %v1241 = vld [vmem:[%s357 + $0xb2] sm:$0xff]
      %v1242 = vld [vmem:[%s357 + $0xc2] sm:$0xff]
      %v1243 = vld [vmem:[%s357 + $0xca] sm:$0xff]
      %v1244 = vld [vmem:[%s357 + $0xda] sm:$0xff]
      %v1245 = vld [vmem:[%s357 + $0xe2] sm:$0xff]
      %v1246 = vld [vmem:[%s357 + $0xf2] sm:$0xff]
      %v1247 = vld [vmem:[%s357 + $0xfa] sm:$0xff]
      %v1248 = vld [vmem:[%s357 + $0x10a] sm:$0xff]
      %v1249 = vld [vmem:[%s357 + $0x112] sm:$0xff]
      %v1250 = vld [vmem:[%s357 + $0x122] sm:$0xff]
      %v1251 = vld [vmem:[%s357 + $0x12a] sm:$0xff]
      %v1252 = vld [vmem:[%s357 + $0x13a] sm:$0xff]
      %v1253 = vld [vmem:[%s357 + $0x142] sm:$0xff]
      %v1254 = vld [vmem:[%s357 + $0x152] sm:$0xff]
      %v1255 = vld [vmem:[%s357 + $0x15a] sm:$0xff]
      %v1256 = vld [vmem:[%s357 + $0x16a] sm:$0xff]
      %v1257 = vld [vmem:[%s357 + $0x172] sm:$0xff]
      %1290 = vrot.lane.b32.xlu0 %v1226, 20
      %v1291 = vpop.permute.xlu0 %1290
      %1292 = vrot.lane.b32.xlu0 %v1227, 20
      %v1293 = vpop.permute.xlu0 %1292
      %1294 = vrot.lane.b32.xlu0 %v1228, 20
      %v1295 = vpop.permute.xlu0 %1294
      %1296 = vrot.lane.b32.xlu0 %v1229, 20
      %v1297 = vpop.permute.xlu0 %1296
      %1298 = vrot.lane.b32.xlu0 %v1230, 20
      %v1299 = vpop.permute.xlu0 %1298
      %1300 = vrot.lane.b32.xlu0 %v1231, 20
      %v1301 = vpop.permute.xlu0 %1300
      %1302 = vrot.lane.b32.xlu0 %v1232, 20
      %v1303 = vpop.permute.xlu0 %1302
      %1304 = vrot.lane.b32.xlu0 %v1233, 20
      %v1305 = vpop.permute.xlu0 %1304
      %1306 = vrot.lane.b32.xlu0 %v1234, 20
      %v1307 = vpop.permute.xlu0 %1306
      %1308 = vrot.lane.b32.xlu0 %v1235, 20
      %v1309 = vpop.permute.xlu0 %1308
      %1310 = vrot.lane.b32.xlu0 %v1236, 20
      %v1311 = vpop.permute.xlu0 %1310
      %1312 = vrot.lane.b32.xlu0 %v1237, 20
      %v1313 = vpop.permute.xlu0 %1312
      %1314 = vrot.lane.b32.xlu0 %v1238, 20
      %v1315 = vpop.permute.xlu0 %1314
      %1316 = vrot.lane.b32.xlu0 %v1239, 20
      %v1317 = vpop.permute.xlu0 %1316
      %1318 = vrot.lane.b32.xlu0 %v1240, 20
      %v1319 = vpop.permute.xlu0 %1318
      %1320 = vrot.lane.b32.xlu0 %v1241, 20
      %v1321 = vpop.permute.xlu0 %1320
      %1322 = vrot.lane.b32.xlu0 %v1242, 20
      %v1323 = vpop.permute.xlu0 %1322
      %1324 = vrot.lane.b32.xlu0 %v1243, 20
      %v1325 = vpop.permute.xlu0 %1324
      %1326 = vrot.lane.b32.xlu0 %v1244, 20
      %v1327 = vpop.permute.xlu0 %1326
      %1328 = vrot.lane.b32.xlu0 %v1245, 20
      %v1329 = vpop.permute.xlu0 %1328
      %1330 = vrot.lane.b32.xlu0 %v1246, 20
      %v1331 = vpop.permute.xlu0 %1330
      %1332 = vrot.lane.b32.xlu0 %v1247, 20
      %v1333 = vpop.permute.xlu0 %1332
      %1334 = vrot.lane.b32.xlu0 %v1248, 20
      %v1335 = vpop.permute.xlu0 %1334
      %1336 = vrot.lane.b32.xlu0 %v1249, 20
      %v1337 = vpop.permute.xlu0 %1336
      %1338 = vrot.lane.b32.xlu0 %v1250, 20
      %v1339 = vpop.permute.xlu0 %1338
      %1340 = vrot.lane.b32.xlu0 %v1251, 20
      %v1341 = vpop.permute.xlu0 %1340
      %1342 = vrot.lane.b32.xlu0 %v1252, 20
      %v1343 = vpop.permute.xlu0 %1342
      %1344 = vrot.lane.b32.xlu0 %v1253, 20
      %v1345 = vpop.permute.xlu0 %1344
      %1346 = vrot.lane.b32.xlu0 %v1254, 20
      %v1347 = vpop.permute.xlu0 %1346
      %1348 = vrot.lane.b32.xlu0 %v1255, 20
      %v1349 = vpop.permute.xlu0 %1348
      %1350 = vrot.lane.b32.xlu0 %v1256, 20
      %v1351 = vpop.permute.xlu0 %1350
      %1352 = vrot.lane.b32.xlu0 %v1257, 20
      %v1353 = vpop.permute.xlu0 %1352
      %vm1386 = vcmask 195744
      %1387 = vst.msk [vmem:[#allocation4] sm:$0xff] %vm1386, %v1291
      %1388 = vst.msk [vmem:[#allocation4 + $0x8] sm:$0xff] %vm1386, %v1293
      %1389 = vst.msk [vmem:[#allocation4 + $0x10] sm:$0xff] %vm1386, %v1295
      %1390 = vst.msk [vmem:[#allocation4 + $0x18] sm:$0xff] %vm1386, %v1297
      %1391 = vst.msk [vmem:[#allocation4 + $0x20] sm:$0xff] %vm1386, %v1299
      %1392 = vst.msk [vmem:[#allocation4 + $0x28] sm:$0xff] %vm1386, %v1301
      %1393 = vst.msk [vmem:[#allocation4 + $0x30] sm:$0xff] %vm1386, %v1303
      %1394 = vst.msk [vmem:[#allocation4 + $0x38] sm:$0xff] %vm1386, %v1305
      %1395 = vst.msk [vmem:[#allocation4 + $0x40] sm:$0xff] %vm1386, %v1307
      %1396 = vst.msk [vmem:[#allocation4 + $0x48] sm:$0xff] %vm1386, %v1309
      %1397 = vst.msk [vmem:[#allocation4 + $0x50] sm:$0xff] %vm1386, %v1311
      %1398 = vst.msk [vmem:[#allocation4 + $0x58] sm:$0xff] %vm1386, %v1313
      %1399 = vst.msk [vmem:[#allocation4 + $0x60] sm:$0xff] %vm1386, %v1315
      %1400 = vst.msk [vmem:[#allocation4 + $0x68] sm:$0xff] %vm1386, %v1317
      %1401 = vst.msk [vmem:[#allocation4 + $0x70] sm:$0xff] %vm1386, %v1319
      %1402 = vst.msk [vmem:[#allocation4 + $0x78] sm:$0xff] %vm1386, %v1321
      %1403 = vst.msk [vmem:[#allocation4 + $0x80] sm:$0xff] %vm1386, %v1323
      %1404 = vst.msk [vmem:[#allocation4 + $0x88] sm:$0xff] %vm1386, %v1325
      %1405 = vst.msk [vmem:[#allocation4 + $0x90] sm:$0xff] %vm1386, %v1327
      %1406 = vst.msk [vmem:[#allocation4 + $0x98] sm:$0xff] %vm1386, %v1329
      %1407 = vst.msk [vmem:[#allocation4 + $0xa0] sm:$0xff] %vm1386, %v1331
      %1408 = vst.msk [vmem:[#allocation4 + $0xa8] sm:$0xff] %vm1386, %v1333
      %1409 = vst.msk [vmem:[#allocation4 + $0xb0] sm:$0xff] %vm1386, %v1335
      %1410 = vst.msk [vmem:[#allocation4 + $0xb8] sm:$0xff] %vm1386, %v1337
      %1411 = vst.msk [vmem:[#allocation4 + $0xc0] sm:$0xff] %vm1386, %v1339
      %1412 = vst.msk [vmem:[#allocation4 + $0xc8] sm:$0xff] %vm1386, %v1341
      %1413 = vst.msk [vmem:[#allocation4 + $0xd0] sm:$0xff] %vm1386, %v1343
      %1414 = vst.msk [vmem:[#allocation4 + $0xd8] sm:$0xff] %vm1386, %v1345
      %1415 = vst.msk [vmem:[#allocation4 + $0xe0] sm:$0xff] %vm1386, %v1347
      %1416 = vst.msk [vmem:[#allocation4 + $0xe8] sm:$0xff] %vm1386, %v1349
      %1417 = vst.msk [vmem:[#allocation4 + $0xf0] sm:$0xff] %vm1386, %v1351
      %1418 = vst.msk [vmem:[#allocation4 + $0xf8] sm:$0xff] %vm1386, %v1353
      %s1419 = scalar_lea.vmem [#allocation2], 48
      %v1420 = vld [vmem:[%s1419] sm:$0xff]
      %v1421 = vld [vmem:[%s1419 + $0x8] sm:$0xff]
      %v1422 = vld [vmem:[%s1419 + $0x18] sm:$0xff]
      %v1423 = vld [vmem:[%s1419 + $0x20] sm:$0xff]
      %v1424 = vld [vmem:[%s1419 + $0x30] sm:$0xff]
      %v1425 = vld [vmem:[%s1419 + $0x38] sm:$0xff]
      %v1426 = vld [vmem:[%s1419 + $0x48] sm:$0xff]
      %v1427 = vld [vmem:[%s1419 + $0x50] sm:$0xff]
      %v1428 = vld [vmem:[%s1419 + $0x60] sm:$0xff]
      %v1429 = vld [vmem:[%s1419 + $0x68] sm:$0xff]
      %v1430 = vld [vmem:[%s1419 + $0x78] sm:$0xff]
      %v1431 = vld [vmem:[%s1419 + $0x80] sm:$0xff]
      %v1432 = vld [vmem:[%s1419 + $0x90] sm:$0xff]
      %v1433 = vld [vmem:[%s1419 + $0x98] sm:$0xff]
      %v1434 = vld [vmem:[%s1419 + $0xa8] sm:$0xff]
      %v1435 = vld [vmem:[%s1419 + $0xb0] sm:$0xff]
      %v1436 = vld [vmem:[%s1419 + $0xc0] sm:$0xff]
      %v1437 = vld [vmem:[%s1419 + $0xc8] sm:$0xff]
      %v1438 = vld [vmem:[%s1419 + $0xd8] sm:$0xff]
      %v1439 = vld [vmem:[%s1419 + $0xe0] sm:$0xff]
      %v1440 = vld [vmem:[%s1419 + $0xf0] sm:$0xff]
      %v1441 = vld [vmem:[%s1419 + $0xf8] sm:$0xff]
      %v1442 = vld [vmem:[%s1419 + $0x108] sm:$0xff]
      %v1443 = vld [vmem:[%s1419 + $0x110] sm:$0xff]
      %v1444 = vld [vmem:[%s1419 + $0x120] sm:$0xff]
      %v1445 = vld [vmem:[%s1419 + $0x128] sm:$0xff]
      %v1446 = vld [vmem:[%s1419 + $0x138] sm:$0xff]
      %v1447 = vld [vmem:[%s1419 + $0x140] sm:$0xff]
      %v1448 = vld [vmem:[%s1419 + $0x150] sm:$0xff]
      %v1449 = vld [vmem:[%s1419 + $0x158] sm:$0xff]
      %v1450 = vld [vmem:[%s1419 + $0x168] sm:$0xff]
      %v1451 = vld [vmem:[%s1419 + $0x170] sm:$0xff]
      %1484 = vrot.lane.b32.xlu0 %v1420, 24
      %v1485 = vpop.permute.xlu0 %1484
      %1486 = vrot.lane.b32.xlu0 %v1421, 24
      %v1487 = vpop.permute.xlu0 %1486
      %1488 = vrot.lane.b32.xlu0 %v1422, 24
      %v1489 = vpop.permute.xlu0 %1488
      %1490 = vrot.lane.b32.xlu0 %v1423, 24
      %v1491 = vpop.permute.xlu0 %1490
      %1492 = vrot.lane.b32.xlu0 %v1424, 24
      %v1493 = vpop.permute.xlu0 %1492
      %1494 = vrot.lane.b32.xlu0 %v1425, 24
      %v1495 = vpop.permute.xlu0 %1494
      %1496 = vrot.lane.b32.xlu0 %v1426, 24
      %v1497 = vpop.permute.xlu0 %1496
      %1498 = vrot.lane.b32.xlu0 %v1427, 24
      %v1499 = vpop.permute.xlu0 %1498
      %1500 = vrot.lane.b32.xlu0 %v1428, 24
      %v1501 = vpop.permute.xlu0 %1500
      %1502 = vrot.lane.b32.xlu0 %v1429, 24
      %v1503 = vpop.permute.xlu0 %1502
      %1504 = vrot.lane.b32.xlu0 %v1430, 24
      %v1505 = vpop.permute.xlu0 %1504
      %1506 = vrot.lane.b32.xlu0 %v1431, 24
      %v1507 = vpop.permute.xlu0 %1506
      %1508 = vrot.lane.b32.xlu0 %v1432, 24
      %v1509 = vpop.permute.xlu0 %1508
      %1510 = vrot.lane.b32.xlu0 %v1433, 24
      %v1511 = vpop.permute.xlu0 %1510
      %1512 = vrot.lane.b32.xlu0 %v1434, 24
      %v1513 = vpop.permute.xlu0 %1512
      %1514 = vrot.lane.b32.xlu0 %v1435, 24
      %v1515 = vpop.permute.xlu0 %1514
      %1516 = vrot.lane.b32.xlu0 %v1436, 24
      %v1517 = vpop.permute.xlu0 %1516
      %1518 = vrot.lane.b32.xlu0 %v1437, 24
      %v1519 = vpop.permute.xlu0 %1518
      %1520 = vrot.lane.b32.xlu0 %v1438, 24
      %v1521 = vpop.permute.xlu0 %1520
      %1522 = vrot.lane.b32.xlu0 %v1439, 24
      %v1523 = vpop.permute.xlu0 %1522
      %1524 = vrot.lane.b32.xlu0 %v1440, 24
      %v1525 = vpop.permute.xlu0 %1524
      %1526 = vrot.lane.b32.xlu0 %v1441, 24
      %v1527 = vpop.permute.xlu0 %1526
      %1528 = vrot.lane.b32.xlu0 %v1442, 24
      %v1529 = vpop.permute.xlu0 %1528
      %1530 = vrot.lane.b32.xlu0 %v1443, 24
      %v1531 = vpop.permute.xlu0 %1530
      %1532 = vrot.lane.b32.xlu0 %v1444, 24
      %v1533 = vpop.permute.xlu0 %1532
      %1534 = vrot.lane.b32.xlu0 %v1445, 24
      %v1535 = vpop.permute.xlu0 %1534
      %1536 = vrot.lane.b32.xlu0 %v1446, 24
      %v1537 = vpop.permute.xlu0 %1536
      %1538 = vrot.lane.b32.xlu0 %v1447, 24
      %v1539 = vpop.permute.xlu0 %1538
      %1540 = vrot.lane.b32.xlu0 %v1448, 24
      %v1541 = vpop.permute.xlu0 %1540
      %1542 = vrot.lane.b32.xlu0 %v1449, 24
      %v1543 = vpop.permute.xlu0 %1542
      %1544 = vrot.lane.b32.xlu0 %v1450, 24
      %v1545 = vpop.permute.xlu0 %1544
      %1546 = vrot.lane.b32.xlu0 %v1451, 24
      %v1547 = vpop.permute.xlu0 %1546
      %vm1580 = vcmask 228544
      %1581 = vst.msk [vmem:[#allocation4] sm:$0xff] %vm1580, %v1485
      %1582 = vst.msk [vmem:[#allocation4 + $0x8] sm:$0xff] %vm1580, %v1487
      %1583 = vst.msk [vmem:[#allocation4 + $0x10] sm:$0xff] %vm1580, %v1489
      %1584 = vst.msk [vmem:[#allocation4 + $0x18] sm:$0xff] %vm1580, %v1491
      %1585 = vst.msk [vmem:[#allocation4 + $0x20] sm:$0xff] %vm1580, %v1493
      %1586 = vst.msk [vmem:[#allocation4 + $0x28] sm:$0xff] %vm1580, %v1495
      %1587 = vst.msk [vmem:[#allocation4 + $0x30] sm:$0xff] %vm1580, %v1497
      %1588 = vst.msk [vmem:[#allocation4 + $0x38] sm:$0xff] %vm1580, %v1499
      %1589 = vst.msk [vmem:[#allocation4 + $0x40] sm:$0xff] %vm1580, %v1501
      %1590 = vst.msk [vmem:[#allocation4 + $0x48] sm:$0xff] %vm1580, %v1503
      %1591 = vst.msk [vmem:[#allocation4 + $0x50] sm:$0xff] %vm1580, %v1505
      %1592 = vst.msk [vmem:[#allocation4 + $0x58] sm:$0xff] %vm1580, %v1507
      %1593 = vst.msk [vmem:[#allocation4 + $0x60] sm:$0xff] %vm1580, %v1509
      %1594 = vst.msk [vmem:[#allocation4 + $0x68] sm:$0xff] %vm1580, %v1511
      %1595 = vst.msk [vmem:[#allocation4 + $0x70] sm:$0xff] %vm1580, %v1513
      %1596 = vst.msk [vmem:[#allocation4 + $0x78] sm:$0xff] %vm1580, %v1515
      %1597 = vst.msk [vmem:[#allocation4 + $0x80] sm:$0xff] %vm1580, %v1517
      %1598 = vst.msk [vmem:[#allocation4 + $0x88] sm:$0xff] %vm1580, %v1519
      %1599 = vst.msk [vmem:[#allocation4 + $0x90] sm:$0xff] %vm1580, %v1521
      %1600 = vst.msk [vmem:[#allocation4 + $0x98] sm:$0xff] %vm1580, %v1523
      %1601 = vst.msk [vmem:[#allocation4 + $0xa0] sm:$0xff] %vm1580, %v1525
      %1602 = vst.msk [vmem:[#allocation4 + $0xa8] sm:$0xff] %vm1580, %v1527
      %1603 = vst.msk [vmem:[#allocation4 + $0xb0] sm:$0xff] %vm1580, %v1529
      %1604 = vst.msk [vmem:[#allocation4 + $0xb8] sm:$0xff] %vm1580, %v1531
      %1605 = vst.msk [vmem:[#allocation4 + $0xc0] sm:$0xff] %vm1580, %v1533
      %1606 = vst.msk [vmem:[#allocation4 + $0xc8] sm:$0xff] %vm1580, %v1535
      %1607 = vst.msk [vmem:[#allocation4 + $0xd0] sm:$0xff] %vm1580, %v1537
      %1608 = vst.msk [vmem:[#allocation4 + $0xd8] sm:$0xff] %vm1580, %v1539
      %1609 = vst.msk [vmem:[#allocation4 + $0xe0] sm:$0xff] %vm1580, %v1541
      %1610 = vst.msk [vmem:[#allocation4 + $0xe8] sm:$0xff] %vm1580, %v1543
      %1611 = vst.msk [vmem:[#allocation4 + $0xf0] sm:$0xff] %vm1580, %v1545
      %1612 = vst.msk [vmem:[#allocation4 + $0xf8] sm:$0xff] %vm1580, %v1547
      %v1613 = vld [vmem:[%s1419 + $0x1] sm:$0xff]
      %v1614 = vld [vmem:[%s1419 + $0x9] sm:$0xff]
      %v1615 = vld [vmem:[%s1419 + $0x19] sm:$0xff]
      %v1616 = vld [vmem:[%s1419 + $0x21] sm:$0xff]
      %v1617 = vld [vmem:[%s1419 + $0x31] sm:$0xff]
      %v1618 = vld [vmem:[%s1419 + $0x39] sm:$0xff]
      %v1619 = vld [vmem:[%s1419 + $0x49] sm:$0xff]
      %v1620 = vld [vmem:[%s1419 + $0x51] sm:$0xff]
      %v1621 = vld [vmem:[%s1419 + $0x61] sm:$0xff]
      %v1622 = vld [vmem:[%s1419 + $0x69] sm:$0xff]
      %v1623 = vld [vmem:[%s1419 + $0x79] sm:$0xff]
      %v1624 = vld [vmem:[%s1419 + $0x81] sm:$0xff]
      %v1625 = vld [vmem:[%s1419 + $0x91] sm:$0xff]
      %v1626 = vld [vmem:[%s1419 + $0x99] sm:$0xff]
      %v1627 = vld [vmem:[%s1419 + $0xa9] sm:$0xff]
      %v1628 = vld [vmem:[%s1419 + $0xb1] sm:$0xff]
      %v1629 = vld [vmem:[%s1419 + $0xc1] sm:$0xff]
      %v1630 = vld [vmem:[%s1419 + $0xc9] sm:$0xff]
      %v1631 = vld [vmem:[%s1419 + $0xd9] sm:$0xff]
      %v1632 = vld [vmem:[%s1419 + $0xe1] sm:$0xff]
      %v1633 = vld [vmem:[%s1419 + $0xf1] sm:$0xff]
      %v1634 = vld [vmem:[%s1419 + $0xf9] sm:$0xff]
      %v1635 = vld [vmem:[%s1419 + $0x109] sm:$0xff]
      %v1636 = vld [vmem:[%s1419 + $0x111] sm:$0xff]
      %v1637 = vld [vmem:[%s1419 + $0x121] sm:$0xff]
      %v1638 = vld [vmem:[%s1419 + $0x129] sm:$0xff]
      %v1639 = vld [vmem:[%s1419 + $0x139] sm:$0xff]
      %v1640 = vld [vmem:[%s1419 + $0x141] sm:$0xff]
      %v1641 = vld [vmem:[%s1419 + $0x151] sm:$0xff]
      %v1642 = vld [vmem:[%s1419 + $0x159] sm:$0xff]
      %v1643 = vld [vmem:[%s1419 + $0x169] sm:$0xff]
      %v1644 = vld [vmem:[%s1419 + $0x171] sm:$0xff]
      %1677 = vrot.lane.b32.xlu0 %v1613, 28
      %v1678 = vpop.permute.xlu0 %1677
      %1679 = vrot.lane.b32.xlu0 %v1614, 28
      %v1680 = vpop.permute.xlu0 %1679
      %1681 = vrot.lane.b32.xlu0 %v1615, 28
      %v1682 = vpop.permute.xlu0 %1681
      %1683 = vrot.lane.b32.xlu0 %v1616, 28
      %v1684 = vpop.permute.xlu0 %1683
      %1685 = vrot.lane.b32.xlu0 %v1617, 28
      %v1686 = vpop.permute.xlu0 %1685
      %1687 = vrot.lane.b32.xlu0 %v1618, 28
      %v1688 = vpop.permute.xlu0 %1687
      %1689 = vrot.lane.b32.xlu0 %v1619, 28
      %v1690 = vpop.permute.xlu0 %1689
      %1691 = vrot.lane.b32.xlu0 %v1620, 28
      %v1692 = vpop.permute.xlu0 %1691
      %1693 = vrot.lane.b32.xlu0 %v1621, 28
      %v1694 = vpop.permute.xlu0 %1693
      %1695 = vrot.lane.b32.xlu0 %v1622, 28
      %v1696 = vpop.permute.xlu0 %1695
      %1697 = vrot.lane.b32.xlu0 %v1623, 28
      %v1698 = vpop.permute.xlu0 %1697
      %1699 = vrot.lane.b32.xlu0 %v1624, 28
      %v1700 = vpop.permute.xlu0 %1699
      %1701 = vrot.lane.b32.xlu0 %v1625, 28
      %v1702 = vpop.permute.xlu0 %1701
      %1703 = vrot.lane.b32.xlu0 %v1626, 28
      %v1704 = vpop.permute.xlu0 %1703
      %1705 = vrot.lane.b32.xlu0 %v1627, 28
      %v1706 = vpop.permute.xlu0 %1705
      %1707 = vrot.lane.b32.xlu0 %v1628, 28
      %v1708 = vpop.permute.xlu0 %1707
      %1709 = vrot.lane.b32.xlu0 %v1629, 28
      %v1710 = vpop.permute.xlu0 %1709
      %1711 = vrot.lane.b32.xlu0 %v1630, 28
      %v1712 = vpop.permute.xlu0 %1711
      %1713 = vrot.lane.b32.xlu0 %v1631, 28
      %v1714 = vpop.permute.xlu0 %1713
      %1715 = vrot.lane.b32.xlu0 %v1632, 28
      %v1716 = vpop.permute.xlu0 %1715
      %1717 = vrot.lane.b32.xlu0 %v1633, 28
      %v1718 = vpop.permute.xlu0 %1717
      %1719 = vrot.lane.b32.xlu0 %v1634, 28
      %v1720 = vpop.permute.xlu0 %1719
      %1721 = vrot.lane.b32.xlu0 %v1635, 28
      %v1722 = vpop.permute.xlu0 %1721
      %1723 = vrot.lane.b32.xlu0 %v1636, 28
      %v1724 = vpop.permute.xlu0 %1723
      %1725 = vrot.lane.b32.xlu0 %v1637, 28
      %v1726 = vpop.permute.xlu0 %1725
      %1727 = vrot.lane.b32.xlu0 %v1638, 28
      %v1728 = vpop.permute.xlu0 %1727
      %1729 = vrot.lane.b32.xlu0 %v1639, 28
      %v1730 = vpop.permute.xlu0 %1729
      %1731 = vrot.lane.b32.xlu0 %v1640, 28
      %v1732 = vpop.permute.xlu0 %1731
      %1733 = vrot.lane.b32.xlu0 %v1641, 28
      %v1734 = vpop.permute.xlu0 %1733
      %1735 = vrot.lane.b32.xlu0 %v1642, 28
      %v1736 = vpop.permute.xlu0 %1735
      %1737 = vrot.lane.b32.xlu0 %v1643, 28
      %v1738 = vpop.permute.xlu0 %1737
      %1739 = vrot.lane.b32.xlu0 %v1644, 28
      %v1740 = vpop.permute.xlu0 %1739
      %vm1773 = vcmask 261344
      %1774 = vst.msk [vmem:[#allocation4] sm:$0xff] %vm1773, %v1678
      %1775 = vst.msk [vmem:[#allocation4 + $0x8] sm:$0xff] %vm1773, %v1680
      %1776 = vst.msk [vmem:[#allocation4 + $0x10] sm:$0xff] %vm1773, %v1682
      %1777 = vst.msk [vmem:[#allocation4 + $0x18] sm:$0xff] %vm1773, %v1684
      %1778 = vst.msk [vmem:[#allocation4 + $0x20] sm:$0xff] %vm1773, %v1686
      %1779 = vst.msk [vmem:[#allocation4 + $0x28] sm:$0xff] %vm1773, %v1688
      %1780 = vst.msk [vmem:[#allocation4 + $0x30] sm:$0xff] %vm1773, %v1690
      %1781 = vst.msk [vmem:[#allocation4 + $0x38] sm:$0xff] %vm1773, %v1692
      %1782 = vst.msk [vmem:[#allocation4 + $0x40] sm:$0xff] %vm1773, %v1694
      %1783 = vst.msk [vmem:[#allocation4 + $0x48] sm:$0xff] %vm1773, %v1696
      %1784 = vst.msk [vmem:[#allocation4 + $0x50] sm:$0xff] %vm1773, %v1698
      %1785 = vst.msk [vmem:[#allocation4 + $0x58] sm:$0xff] %vm1773, %v1700
      %1786 = vst.msk [vmem:[#allocation4 + $0x60] sm:$0xff] %vm1773, %v1702
      %1787 = vst.msk [vmem:[#allocation4 + $0x68] sm:$0xff] %vm1773, %v1704
      %1788 = vst.msk [vmem:[#allocation4 + $0x70] sm:$0xff] %vm1773, %v1706
      %1789 = vst.msk [vmem:[#allocation4 + $0x78] sm:$0xff] %vm1773, %v1708
      %1790 = vst.msk [vmem:[#allocation4 + $0x80] sm:$0xff] %vm1773, %v1710
      %1791 = vst.msk [vmem:[#allocation4 + $0x88] sm:$0xff] %vm1773, %v1712
      %1792 = vst.msk [vmem:[#allocation4 + $0x90] sm:$0xff] %vm1773, %v1714
      %1793 = vst.msk [vmem:[#allocation4 + $0x98] sm:$0xff] %vm1773, %v1716
      %1794 = vst.msk [vmem:[#allocation4 + $0xa0] sm:$0xff] %vm1773, %v1718
      %1795 = vst.msk [vmem:[#allocation4 + $0xa8] sm:$0xff] %vm1773, %v1720
      %1796 = vst.msk [vmem:[#allocation4 + $0xb0] sm:$0xff] %vm1773, %v1722
      %1797 = vst.msk [vmem:[#allocation4 + $0xb8] sm:$0xff] %vm1773, %v1724
      %1798 = vst.msk [vmem:[#allocation4 + $0xc0] sm:$0xff] %vm1773, %v1726
      %1799 = vst.msk [vmem:[#allocation4 + $0xc8] sm:$0xff] %vm1773, %v1728
      %1800 = vst.msk [vmem:[#allocation4 + $0xd0] sm:$0xff] %vm1773, %v1730
      %1801 = vst.msk [vmem:[#allocation4 + $0xd8] sm:$0xff] %vm1773, %v1732
      %1802 = vst.msk [vmem:[#allocation4 + $0xe0] sm:$0xff] %vm1773, %v1734
      %1803 = vst.msk [vmem:[#allocation4 + $0xe8] sm:$0xff] %vm1773, %v1736
      %1804 = vst.msk [vmem:[#allocation4 + $0xf0] sm:$0xff] %vm1773, %v1738
      %1805 = vst.msk [vmem:[#allocation4 + $0xf8] sm:$0xff] %vm1773, %v1740
      %v1806 = vld [vmem:[%s1419 + $0x2] sm:$0xff]
      %v1807 = vld [vmem:[%s1419 + $0xa] sm:$0xff]
      %v1808 = vld [vmem:[%s1419 + $0x1a] sm:$0xff]
      %v1809 = vld [vmem:[%s1419 + $0x22] sm:$0xff]
      %v1810 = vld [vmem:[%s1419 + $0x32] sm:$0xff]
      %v1811 = vld [vmem:[%s1419 + $0x3a] sm:$0xff]
      %v1812 = vld [vmem:[%s1419 + $0x4a] sm:$0xff]
      %v1813 = vld [vmem:[%s1419 + $0x52] sm:$0xff]
      %v1814 = vld [vmem:[%s1419 + $0x62] sm:$0xff]
      %v1815 = vld [vmem:[%s1419 + $0x6a] sm:$0xff]
      %v1816 = vld [vmem:[%s1419 + $0x7a] sm:$0xff]
      %v1817 = vld [vmem:[%s1419 + $0x82] sm:$0xff]
      %v1818 = vld [vmem:[%s1419 + $0x92] sm:$0xff]
      %v1819 = vld [vmem:[%s1419 + $0x9a] sm:$0xff]
      %v1820 = vld [vmem:[%s1419 + $0xaa] sm:$0xff]
      %v1821 = vld [vmem:[%s1419 + $0xb2] sm:$0xff]
      %v1822 = vld [vmem:[%s1419 + $0xc2] sm:$0xff]
      %v1823 = vld [vmem:[%s1419 + $0xca] sm:$0xff]
      %v1824 = vld [vmem:[%s1419 + $0xda] sm:$0xff]
      %v1825 = vld [vmem:[%s1419 + $0xe2] sm:$0xff]
      %v1826 = vld [vmem:[%s1419 + $0xf2] sm:$0xff]
      %v1827 = vld [vmem:[%s1419 + $0xfa] sm:$0xff]
      %v1828 = vld [vmem:[%s1419 + $0x10a] sm:$0xff]
      %v1829 = vld [vmem:[%s1419 + $0x112] sm:$0xff]
      %v1830 = vld [vmem:[%s1419 + $0x122] sm:$0xff]
      %v1831 = vld [vmem:[%s1419 + $0x12a] sm:$0xff]
      %v1832 = vld [vmem:[%s1419 + $0x13a] sm:$0xff]
      %v1833 = vld [vmem:[%s1419 + $0x142] sm:$0xff]
      %v1834 = vld [vmem:[%s1419 + $0x152] sm:$0xff]
      %v1835 = vld [vmem:[%s1419 + $0x15a] sm:$0xff]
      %v1836 = vld [vmem:[%s1419 + $0x16a] sm:$0xff]
      %v1837 = vld [vmem:[%s1419 + $0x172] sm:$0xff]
      %1870 = vrot.lane.b32.xlu0 %v1806, 32
      %v1871 = vpop.permute.xlu0 %1870
      %1872 = vrot.lane.b32.xlu0 %v1807, 32
      %v1873 = vpop.permute.xlu0 %1872
      %1874 = vrot.lane.b32.xlu0 %v1808, 32
      %v1875 = vpop.permute.xlu0 %1874
      %1876 = vrot.lane.b32.xlu0 %v1809, 32
      %v1877 = vpop.permute.xlu0 %1876
      %1878 = vrot.lane.b32.xlu0 %v1810, 32
      %v1879 = vpop.permute.xlu0 %1878
      %1880 = vrot.lane.b32.xlu0 %v1811, 32
      %v1881 = vpop.permute.xlu0 %1880
      %1882 = vrot.lane.b32.xlu0 %v1812, 32
      %v1883 = vpop.permute.xlu0 %1882
      %1884 = vrot.lane.b32.xlu0 %v1813, 32
      %v1885 = vpop.permute.xlu0 %1884
      %1886 = vrot.lane.b32.xlu0 %v1814, 32
      %v1887 = vpop.permute.xlu0 %1886
      %1888 = vrot.lane.b32.xlu0 %v1815, 32
      %v1889 = vpop.permute.xlu0 %1888
      %1890 = vrot.lane.b32.xlu0 %v1816, 32
      %v1891 = vpop.permute.xlu0 %1890
      %1892 = vrot.lane.b32.xlu0 %v1817, 32
      %v1893 = vpop.permute.xlu0 %1892
      %1894 = vrot.lane.b32.xlu0 %v1818, 32
      %v1895 = vpop.permute.xlu0 %1894
      %1896 = vrot.lane.b32.xlu0 %v1819, 32
      %v1897 = vpop.permute.xlu0 %1896
      %1898 = vrot.lane.b32.xlu0 %v1820, 32
      %v1899 = vpop.permute.xlu0 %1898
      %1900 = vrot.lane.b32.xlu0 %v1821, 32
      %v1901 = vpop.permute.xlu0 %1900
      %1902 = vrot.lane.b32.xlu0 %v1822, 32
      %v1903 = vpop.permute.xlu0 %1902
      %1904 = vrot.lane.b32.xlu0 %v1823, 32
      %v1905 = vpop.permute.xlu0 %1904
      %1906 = vrot.lane.b32.xlu0 %v1824, 32
      %v1907 = vpop.permute.xlu0 %1906
      %1908 = vrot.lane.b32.xlu0 %v1825, 32
      %v1909 = vpop.permute.xlu0 %1908
      %1910 = vrot.lane.b32.xlu0 %v1826, 32
      %v1911 = vpop.permute.xlu0 %1910
      %1912 = vrot.lane.b32.xlu0 %v1827, 32
      %v1913 = vpop.permute.xlu0 %1912
      %1914 = vrot.lane.b32.xlu0 %v1828, 32
      %v1915 = vpop.permute.xlu0 %1914
      %1916 = vrot.lane.b32.xlu0 %v1829, 32
      %v1917 = vpop.permute.xlu0 %1916
      %1918 = vrot.lane.b32.xlu0 %v1830, 32
      %v1919 = vpop.permute.xlu0 %1918
      %1920 = vrot.lane.b32.xlu0 %v1831, 32
      %v1921 = vpop.permute.xlu0 %1920
      %1922 = vrot.lane.b32.xlu0 %v1832, 32
      %v1923 = vpop.permute.xlu0 %1922
      %1924 = vrot.lane.b32.xlu0 %v1833, 32
      %v1925 = vpop.permute.xlu0 %1924
      %1926 = vrot.lane.b32.xlu0 %v1834, 32
      %v1927 = vpop.permute.xlu0 %1926
      %1928 = vrot.lane.b32.xlu0 %v1835, 32
      %v1929 = vpop.permute.xlu0 %1928
      %1930 = vrot.lane.b32.xlu0 %v1836, 32
      %v1931 = vpop.permute.xlu0 %1930
      %1932 = vrot.lane.b32.xlu0 %v1837, 32
      %v1933 = vpop.permute.xlu0 %1932
      %vm1966 = vcmask 294144
      %1967 = vst.msk [vmem:[#allocation4] sm:$0xff] %vm1966, %v1871
      %1968 = vst.msk [vmem:[#allocation4 + $0x8] sm:$0xff] %vm1966, %v1873
      %1969 = vst.msk [vmem:[#allocation4 + $0x10] sm:$0xff] %vm1966, %v1875
      %1970 = vst.msk [vmem:[#allocation4 + $0x18] sm:$0xff] %vm1966, %v1877
      %1971 = vst.msk [vmem:[#allocation4 + $0x20] sm:$0xff] %vm1966, %v1879
      %1972 = vst.msk [vmem:[#allocation4 + $0x28] sm:$0xff] %vm1966, %v1881
      %1973 = vst.msk [vmem:[#allocation4 + $0x30] sm:$0xff] %vm1966, %v1883
      %1974 = vst.msk [vmem:[#allocation4 + $0x38] sm:$0xff] %vm1966, %v1885
      %1975 = vst.msk [vmem:[#allocation4 + $0x40] sm:$0xff] %vm1966, %v1887
      %1976 = vst.msk [vmem:[#allocation4 + $0x48] sm:$0xff] %vm1966, %v1889
      %1977 = vst.msk [vmem:[#allocation4 + $0x50] sm:$0xff] %vm1966, %v1891
      %1978 = vst.msk [vmem:[#allocation4 + $0x58] sm:$0xff] %vm1966, %v1893
      %1979 = vst.msk [vmem:[#allocation4 + $0x60] sm:$0xff] %vm1966, %v1895
      %1980 = vst.msk [vmem:[#allocation4 + $0x68] sm:$0xff] %vm1966, %v1897
      %1981 = vst.msk [vmem:[#allocation4 + $0x70] sm:$0xff] %vm1966, %v1899
      %1982 = vst.msk [vmem:[#allocation4 + $0x78] sm:$0xff] %vm1966, %v1901
      %1983 = vst.msk [vmem:[#allocation4 + $0x80] sm:$0xff] %vm1966, %v1903
      %1984 = vst.msk [vmem:[#allocation4 + $0x88] sm:$0xff] %vm1966, %v1905
      %1985 = vst.msk [vmem:[#allocation4 + $0x90] sm:$0xff] %vm1966, %v1907
      %1986 = vst.msk [vmem:[#allocation4 + $0x98] sm:$0xff] %vm1966, %v1909
      %1987 = vst.msk [vmem:[#allocation4 + $0xa0] sm:$0xff] %vm1966, %v1911
      %1988 = vst.msk [vmem:[#allocation4 + $0xa8] sm:$0xff] %vm1966, %v1913
      %1989 = vst.msk [vmem:[#allocation4 + $0xb0] sm:$0xff] %vm1966, %v1915
      %1990 = vst.msk [vmem:[#allocation4 + $0xb8] sm:$0xff] %vm1966, %v1917
      %1991 = vst.msk [vmem:[#allocation4 + $0xc0] sm:$0xff] %vm1966, %v1919
      %1992 = vst.msk [vmem:[#allocation4 + $0xc8] sm:$0xff] %vm1966, %v1921
      %1993 = vst.msk [vmem:[#allocation4 + $0xd0] sm:$0xff] %vm1966, %v1923
      %1994 = vst.msk [vmem:[#allocation4 + $0xd8] sm:$0xff] %vm1966, %v1925
      %1995 = vst.msk [vmem:[#allocation4 + $0xe0] sm:$0xff] %vm1966, %v1927
      %1996 = vst.msk [vmem:[#allocation4 + $0xe8] sm:$0xff] %vm1966, %v1929
      %1997 = vst.msk [vmem:[#allocation4 + $0xf0] sm:$0xff] %vm1966, %v1931
      %1998 = vst.msk [vmem:[#allocation4 + $0xf8] sm:$0xff] %vm1966, %v1933
      %v1999 = vld [vmem:[#allocation4] sm:$0xff]
      %v2000 = vld [vmem:[#allocation4 + $0x8] sm:$0xff]
      %v2001 = vld [vmem:[#allocation4 + $0x10] sm:$0xff]
      %v2002 = vld [vmem:[#allocation4 + $0x18] sm:$0xff]
      %v2003 = vld [vmem:[#allocation4 + $0x20] sm:$0xff]
      %v2004 = vld [vmem:[#allocation4 + $0x28] sm:$0xff]
      %v2005 = vld [vmem:[#allocation4 + $0x30] sm:$0xff]
      %v2006 = vld [vmem:[#allocation4 + $0x38] sm:$0xff]
      %v2007 = vld [vmem:[#allocation4 + $0x40] sm:$0xff]
      %v2008 = vld [vmem:[#allocation4 + $0x48] sm:$0xff]
      %v2009 = vld [vmem:[#allocation4 + $0x50] sm:$0xff]
      %v2010 = vld [vmem:[#allocation4 + $0x58] sm:$0xff]
      %v2011 = vld [vmem:[#allocation4 + $0x60] sm:$0xff]
      %v2012 = vld [vmem:[#allocation4 + $0x68] sm:$0xff]
      %v2013 = vld [vmem:[#allocation4 + $0x70] sm:$0xff]
      %v2014 = vld [vmem:[#allocation4 + $0x78] sm:$0xff]
      %v2015 = vld [vmem:[#allocation4 + $0x80] sm:$0xff]
      %v2016 = vld [vmem:[#allocation4 + $0x88] sm:$0xff]
      %v2017 = vld [vmem:[#allocation4 + $0x90] sm:$0xff]
      %v2018 = vld [vmem:[#allocation4 + $0x98] sm:$0xff]
      %v2019 = vld [vmem:[#allocation4 + $0xa0] sm:$0xff]
      %v2020 = vld [vmem:[#allocation4 + $0xa8] sm:$0xff]
      %v2021 = vld [vmem:[#allocation4 + $0xb0] sm:$0xff]
      %v2022 = vld [vmem:[#allocation4 + $0xb8] sm:$0xff]
      %v2023 = vld [vmem:[#allocation4 + $0xc0] sm:$0xff]
      %v2024 = vld [vmem:[#allocation4 + $0xc8] sm:$0xff]
      %v2025 = vld [vmem:[#allocation4 + $0xd0] sm:$0xff]
      %v2026 = vld [vmem:[#allocation4 + $0xd8] sm:$0xff]
      %v2027 = vld [vmem:[#allocation4 + $0xe0] sm:$0xff]
      %v2028 = vld [vmem:[#allocation4 + $0xe8] sm:$0xff]
      %v2029 = vld [vmem:[#allocation4 + $0xf0] sm:$0xff]
      %v2030 = vld [vmem:[#allocation4 + $0xf8] sm:$0xff]
      %v2031 = vld [vmem:[%s1] sm:$0xff]
      %v2032 = vld [vmem:[%s1 + $0x8] sm:$0xff]
      %v2033 = vld [vmem:[%s1 + $0x10] sm:$0xff]
      %v2034 = vld [vmem:[%s1 + $0x18] sm:$0xff]
      %v2035 = vld [vmem:[%s1 + $0x20] sm:$0xf]
      %v2036 = vld [vmem:[%s2] sm:$0x1]
      %v2038 = vlaneseq
      %v2039 = vshrl.u32 %v2038, 7
      %v2040 = vsub.s32 0, %v2039
      %v2041 = vrot.slane %v2036, %v2040
      %vm2043 = vcmask 293888
      %v2045 = vsel %vm2043, %v1999, 0
      %v2048 = vsel %vm2043, %v2000, 0
      %v2051 = vsel %vm2043, %v2001, 0
      %v2054 = vsel %vm2043, %v2002, 0
      %v2057 = vsel %vm2043, %v2003, 0
      %v2060 = vsel %vm2043, %v2004, 0
      %v2063 = vsel %vm2043, %v2005, 0
      %v2066 = vsel %vm2043, %v2006, 0
      %v2069 = vsel %vm2043, %v2007, 0
      %v2072 = vsel %vm2043, %v2008, 0
      %v2075 = vsel %vm2043, %v2009, 0
      %v2078 = vsel %vm2043, %v2010, 0
      %v2081 = vsel %vm2043, %v2011, 0
      %v2084 = vsel %vm2043, %v2012, 0
      %v2087 = vsel %vm2043, %v2013, 0
      %v2090 = vsel %vm2043, %v2014, 0
      %v2093 = vsel %vm2043, %v2015, 0
      %v2096 = vsel %vm2043, %v2016, 0
      %v2099 = vsel %vm2043, %v2017, 0
      %v2102 = vsel %vm2043, %v2018, 0
      %v2105 = vsel %vm2043, %v2019, 0
      %v2108 = vsel %vm2043, %v2020, 0
      %v2111 = vsel %vm2043, %v2021, 0
      %v2114 = vsel %vm2043, %v2022, 0
      %v2117 = vsel %vm2043, %v2023, 0
      %v2120 = vsel %vm2043, %v2024, 0
      %v2123 = vsel %vm2043, %v2025, 0
      %v2126 = vsel %vm2043, %v2026, 0
      %v2129 = vsel %vm2043, %v2027, 0
      %v2132 = vsel %vm2043, %v2028, 0
      %v2135 = vsel %vm2043, %v2029, 0
      %v2138 = vsel %vm2043, %v2030, 0
      %vm2140 = vcmask 1043456
      %v2142 = vsel %vm2140, %v2035, 0
      %2144 = vmatprep.subr.mxu0 0.0
      %2145 = vmatpush1.msra.mxu0 %v2031
      %2146 = vmatprep.subr.mxu0 0.0
      %2147 = vmatpush1.msra.mxu0 %v2032
      %2148 = vmatprep.subr.mxu0 0.0
      %2149 = vmatpush1.msra.mxu0 %v2033
      %2150 = vmatprep.subr.mxu0 0.0
      %2151 = vmatpush1.msra.mxu0 %v2034
      %2152 = vmatprep.subr.mxu0 0.0
      %2153 = vmatpush1.msra.mxu0 %v2142
      %2154 = vmatprep.subr.mxu0 0.0
      %2155 = vmatpush1.msra.mxu0 0.0
      %2156 = vmatprep.subr.mxu0 0.0
      %2157 = vmatpush1.msra.mxu0 0.0
      %2158 = vmatprep.subr.mxu0 0.0
      %2159 = vmatpush1.msra.mxu0 0.0
      %2160 = vmatprep.subr.mxu0 0.0
      %2161 = vmatpush1.msra.mxu0 0.0
      %2162 = vmatprep.subr.mxu0 0.0
      %2163 = vmatpush1.msra.mxu0 0.0
      %2164 = vmatprep.subr.mxu0 0.0
      %2165 = vmatpush1.msra.mxu0 0.0
      %2166 = vmatprep.subr.mxu0 0.0
      %2167 = vmatpush1.msra.mxu0 0.0
      %2168 = vmatprep.subr.mxu0 0.0
      %2169 = vmatpush1.msra.mxu0 0.0
      %2170 = vmatprep.subr.mxu0 0.0
      %2171 = vmatpush1.msra.mxu0 0.0
      %2172 = vmatprep.subr.mxu0 0.0
      %2173 = vmatpush1.msra.mxu0 0.0
      %2174 = vmatprep.subr.mxu0 0.0
      %2175 = vmatpush1.msra.mxu0 0.0
      %2176 = vmatprep.subr.mxu0 0.0
      %2177 = vmatpush1.msra.mxu0 0.0
      %2178 = vmatprep.subr.mxu0 0.0
      %2179 = vmatpush1.msra.mxu0 0.0
      %2180 = vmatprep.subr.mxu0 0.0
      %2181 = vmatpush1.msra.mxu0 0.0
      %2182 = vmatprep.subr.mxu0 0.0
      %2183 = vmatpush1.msra.mxu0 0.0
      %2184 = vmatprep.subr.mxu0 0.0
      %2185 = vmatpush1.msra.mxu0 0.0
      %2186 = vmatprep.subr.mxu0 0.0
      %2187 = vmatpush1.msra.mxu0 0.0
      %2188 = vmatprep.subr.mxu0 0.0
      %2189 = vmatpush1.msra.mxu0 0.0
      %2190 = vmatprep.subr.mxu0 0.0
      %2191 = vmatpush1.msra.mxu0 0.0
      %2192 = vmatprep.subr.mxu0 0.0
      %2193 = vmatpush1.msra.mxu0 0.0
      %2194 = vmatprep.subr.mxu0 0.0
      %2195 = vmatpush1.msra.mxu0 0.0
      %2196 = vmatprep.subr.mxu0 0.0
      %2197 = vmatpush1.msra.mxu0 0.0
      %2198 = vmatprep.subr.mxu0 0.0
      %2199 = vmatpush1.msra.mxu0 0.0
      %2200 = vmatprep.subr.mxu0 0.0
      %2201 = vmatpush1.msra.mxu0 0.0
      %2202 = vmatprep.subr.mxu0 0.0
      %2203 = vmatpush1.msra.mxu0 0.0
      %2204 = vmatprep.subr.mxu0 0.0
      %2205 = vmatpush1.msra.mxu0 0.0
      %2206 = vmatprep.subr.mxu0 0.0
      %2207 = vmatpush1.msra.mxu0 0.0
      %2208 = vmatprep.mubr.f32.mxu0 0.0
      %2209 = vmatmul.mubr.f32.gmra.mrb[0].mxu0 %v2045
      %v2210 = vpop.f32.mrb[0].mxu0
      %v2211 = vadd.f32 %v2041, %v2210
      %v2212 = vpop.f32.mrb[0].mxu0
      %2213 = vmatprep.mubr.f32.mxu0 0.0
      %2214 = vmatmul.mubr.f32.gmra.mrb[0].mxu0 %v2048
      %v2215 = vpop.f32.mrb[0].mxu0
      %v2216 = vadd.f32 %v2041, %v2215
      %v2217 = vpop.f32.mrb[0].mxu0
      %2218 = vmatprep.mubr.f32.mxu0 0.0
      %2219 = vmatmul.mubr.f32.gmra.mrb[0].mxu0 %v2051
      %v2220 = vpop.f32.mrb[0].mxu0
      %v2221 = vadd.f32 %v2041, %v2220
      %v2222 = vpop.f32.mrb[0].mxu0
      %2223 = vmatprep.mubr.f32.mxu0 0.0
      %2224 = vmatmul.mubr.f32.gmra.mrb[0].mxu0 %v2054
      %v2225 = vpop.f32.mrb[0].mxu0
      %v2226 = vadd.f32 %v2041, %v2225
      %v2227 = vpop.f32.mrb[0].mxu0
      %2228 = vmatprep.mubr.f32.mxu0 0.0
      %2229 = vmatmul.mubr.f32.gmra.mrb[0].mxu0 %v2057
      %v2230 = vpop.f32.mrb[0].mxu0
      %v2231 = vadd.f32 %v2041, %v2230
      %v2232 = vpop.f32.mrb[0].mxu0
      %2233 = vmatprep.mubr.f32.mxu0 0.0
      %2234 = vmatmul.mubr.f32.gmra.mrb[0].mxu0 %v2060
      %v2235 = vpop.f32.mrb[0].mxu0
      %v2236 = vadd.f32 %v2041, %v2235
      %v2237 = vpop.f32.mrb[0].mxu0
      %2238 = vmatprep.mubr.f32.mxu0 0.0
      %2239 = vmatmul.mubr.f32.gmra.mrb[0].mxu0 %v2063
      %v2240 = vpop.f32.mrb[0].mxu0
      %v2241 = vadd.f32 %v2041, %v2240
      %v2242 = vpop.f32.mrb[0].mxu0
      %2243 = vmatprep.mubr.f32.mxu0 0.0
      %2244 = vmatmul.mubr.f32.gmra.mrb[0].mxu0 %v2066
      %v2245 = vpop.f32.mrb[0].mxu0
      %v2246 = vadd.f32 %v2041, %v2245
      %v2247 = vpop.f32.mrb[0].mxu0
      %2248 = vmatprep.mubr.f32.mxu0 0.0
      %2249 = vmatmul.mubr.f32.gmra.mrb[0].mxu0 %v2069
      %v2250 = vpop.f32.mrb[0].mxu0
      %v2251 = vadd.f32 %v2041, %v2250
      %v2252 = vpop.f32.mrb[0].mxu0
      %2253 = vmatprep.mubr.f32.mxu0 0.0
      %2254 = vmatmul.mubr.f32.gmra.mrb[0].mxu0 %v2072
      %v2255 = vpop.f32.mrb[0].mxu0
      %v2256 = vadd.f32 %v2041, %v2255
      %v2257 = vpop.f32.mrb[0].mxu0
      %2258 = vmatprep.mubr.f32.mxu0 0.0
      %2259 = vmatmul.mubr.f32.gmra.mrb[0].mxu0 %v2075
      %v2260 = vpop.f32.mrb[0].mxu0
      %v2261 = vadd.f32 %v2041, %v2260
      %v2262 = vpop.f32.mrb[0].mxu0
      %2263 = vmatprep.mubr.f32.mxu0 0.0
      %2264 = vmatmul.mubr.f32.gmra.mrb[0].mxu0 %v2078
      %v2265 = vpop.f32.mrb[0].mxu0
      %v2266 = vadd.f32 %v2041, %v2265
      %v2267 = vpop.f32.mrb[0].mxu0
      %2268 = vmatprep.mubr.f32.mxu0 0.0
      %2269 = vmatmul.mubr.f32.gmra.mrb[0].mxu0 %v2081
      %v2270 = vpop.f32.mrb[0].mxu0
      %v2271 = vadd.f32 %v2041, %v2270
      %v2272 = vpop.f32.mrb[0].mxu0
      %2273 = vmatprep.mubr.f32.mxu0 0.0
      %2274 = vmatmul.mubr.f32.gmra.mrb[0].mxu0 %v2084
      %v2275 = vpop.f32.mrb[0].mxu0
      %v2276 = vadd.f32 %v2041, %v2275
      %v2277 = vpop.f32.mrb[0].mxu0
      %2278 = vmatprep.mubr.f32.mxu0 0.0
      %2279 = vmatmul.mubr.f32.gmra.mrb[0].mxu0 %v2087
      %v2280 = vpop.f32.mrb[0].mxu0
      %v2281 = vadd.f32 %v2041, %v2280
      %v2282 = vpop.f32.mrb[0].mxu0
      %2283 = vmatprep.mubr.f32.mxu0 0.0
      %2284 = vmatmul.mubr.f32.gmra.mrb[0].mxu0 %v2090
      %v2285 = vpop.f32.mrb[0].mxu0
      %v2286 = vadd.f32 %v2041, %v2285
      %v2287 = vpop.f32.mrb[0].mxu0
      %2288 = vmatprep.mubr.f32.mxu0 0.0
      %2289 = vmatmul.mubr.f32.gmra.mrb[0].mxu0 %v2093
      %v2290 = vpop.f32.mrb[0].mxu0
      %v2291 = vadd.f32 %v2041, %v2290
      %v2292 = vpop.f32.mrb[0].mxu0
      %2293 = vmatprep.mubr.f32.mxu0 0.0
      %2294 = vmatmul.mubr.f32.gmra.mrb[0].mxu0 %v2096
      %v2295 = vpop.f32.mrb[0].mxu0
      %v2296 = vadd.f32 %v2041, %v2295
      %v2297 = vpop.f32.mrb[0].mxu0
      %2298 = vmatprep.mubr.f32.mxu0 0.0
      %2299 = vmatmul.mubr.f32.gmra.mrb[0].mxu0 %v2099
      %v2300 = vpop.f32.mrb[0].mxu0
      %v2301 = vadd.f32 %v2041, %v2300
      %v2302 = vpop.f32.mrb[0].mxu0
      %2303 = vmatprep.mubr.f32.mxu0 0.0
      %2304 = vmatmul.mubr.f32.gmra.mrb[0].mxu0 %v2102
      %v2305 = vpop.f32.mrb[0].mxu0
      %v2306 = vadd.f32 %v2041, %v2305
      %v2307 = vpop.f32.mrb[0].mxu0
      %2308 = vmatprep.mubr.f32.mxu0 0.0
      %2309 = vmatmul.mubr.f32.gmra.mrb[0].mxu0 %v2105
      %v2310 = vpop.f32.mrb[0].mxu0
      %v2311 = vadd.f32 %v2041, %v2310
      %v2312 = vpop.f32.mrb[0].mxu0
      %2313 = vmatprep.mubr.f32.mxu0 0.0
      %2314 = vmatmul.mubr.f32.gmra.mrb[0].mxu0 %v2108
      %v2315 = vpop.f32.mrb[0].mxu0
      %v2316 = vadd.f32 %v2041, %v2315
      %v2317 = vpop.f32.mrb[0].mxu0
      %2318 = vmatprep.mubr.f32.mxu0 0.0
      %2319 = vmatmul.mubr.f32.gmra.mrb[0].mxu0 %v2111
      %v2320 = vpop.f32.mrb[0].mxu0
      %v2321 = vadd.f32 %v2041, %v2320
      %v2322 = vpop.f32.mrb[0].mxu0
      %2323 = vmatprep.mubr.f32.mxu0 0.0
      %2324 = vmatmul.mubr.f32.gmra.mrb[0].mxu0 %v2114
      %v2325 = vpop.f32.mrb[0].mxu0
      %v2326 = vadd.f32 %v2041, %v2325
      %v2327 = vpop.f32.mrb[0].mxu0
      %2328 = vmatprep.mubr.f32.mxu0 0.0
      %2329 = vmatmul.mubr.f32.gmra.mrb[0].mxu0 %v2117
      %v2330 = vpop.f32.mrb[0].mxu0
      %v2331 = vadd.f32 %v2041, %v2330
      %v2332 = vpop.f32.mrb[0].mxu0
      %2333 = vmatprep.mubr.f32.mxu0 0.0
      %2334 = vmatmul.mubr.f32.gmra.mrb[0].mxu0 %v2120
      %v2335 = vpop.f32.mrb[0].mxu0
      %v2336 = vadd.f32 %v2041, %v2335
      %v2337 = vpop.f32.mrb[0].mxu0
      %2338 = vmatprep.mubr.f32.mxu0 0.0
      %2339 = vmatmul.mubr.f32.gmra.mrb[0].mxu0 %v2123
      %v2340 = vpop.f32.mrb[0].mxu0
      %v2341 = vadd.f32 %v2041, %v2340
      %v2342 = vpop.f32.mrb[0].mxu0
      %2343 = vmatprep.mubr.f32.mxu0 0.0
      %2344 = vmatmul.mubr.f32.gmra.mrb[0].mxu0 %v2126
      %v2345 = vpop.f32.mrb[0].mxu0
      %v2346 = vadd.f32 %v2041, %v2345
      %v2347 = vpop.f32.mrb[0].mxu0
      %2348 = vmatprep.mubr.f32.mxu0 0.0
      %2349 = vmatmul.mubr.f32.gmra.mrb[0].mxu0 %v2129
      %v2350 = vpop.f32.mrb[0].mxu0
      %v2351 = vadd.f32 %v2041, %v2350
      %v2352 = vpop.f32.mrb[0].mxu0
      %2353 = vmatprep.mubr.f32.mxu0 0.0
      %2354 = vmatmul.mubr.f32.gmra.mrb[0].mxu0 %v2132
      %v2355 = vpop.f32.mrb[0].mxu0
      %v2356 = vadd.f32 %v2041, %v2355
      %v2357 = vpop.f32.mrb[0].mxu0
      %2358 = vmatprep.mubr.f32.mxu0 0.0
      %2359 = vmatmul.mubr.f32.gmra.mrb[0].mxu0 %v2135
      %v2360 = vpop.f32.mrb[0].mxu0
      %v2361 = vadd.f32 %v2041, %v2360
      %v2362 = vpop.f32.mrb[0].mxu0
      %2363 = vmatprep.mubr.f32.mxu0 0.0
      %2364 = vmatmul.mubr.f32.gmra.mrb[0].mxu0 %v2138
      %v2365 = vpop.f32.mrb[0].mxu0
      %v2366 = vadd.f32 %v2041, %v2365
      %v2367 = vpop.f32.mrb[0].mxu0
      %2368 = vdwg.mxu0
      %v2369 = vmax.f32 %v2211, 0.0
      %v2370 = vmax.f32 %v2216, 0.0
      %v2371 = vmax.f32 %v2221, 0.0
      %v2372 = vmax.f32 %v2226, 0.0
      %v2373 = vmax.f32 %v2231, 0.0
      %v2374 = vmax.f32 %v2236, 0.0
      %v2375 = vmax.f32 %v2241, 0.0
      %v2376 = vmax.f32 %v2246, 0.0
      %v2377 = vmax.f32 %v2251, 0.0
      %v2378 = vmax.f32 %v2256, 0.0
      %v2379 = vmax.f32 %v2261, 0.0
      %v2380 = vmax.f32 %v2266, 0.0
      %v2381 = vmax.f32 %v2271, 0.0
      %v2382 = vmax.f32 %v2276, 0.0
      %v2383 = vmax.f32 %v2281, 0.0
      %v2384 = vmax.f32 %v2286, 0.0
      %v2385 = vmax.f32 %v2291, 0.0
      %v2386 = vmax.f32 %v2296, 0.0
      %v2387 = vmax.f32 %v2301, 0.0
      %v2388 = vmax.f32 %v2306, 0.0
      %v2389 = vmax.f32 %v2311, 0.0
      %v2390 = vmax.f32 %v2316, 0.0
      %v2391 = vmax.f32 %v2321, 0.0
      %v2392 = vmax.f32 %v2326, 0.0
      %v2393 = vmax.f32 %v2331, 0.0
      %v2394 = vmax.f32 %v2336, 0.0
      %v2395 = vmax.f32 %v2341, 0.0
      %v2396 = vmax.f32 %v2346, 0.0
      %v2397 = vmax.f32 %v2351, 0.0
      %v2398 = vmax.f32 %v2356, 0.0
      %v2399 = vmax.f32 %v2361, 0.0
      %v2400 = vmax.f32 %v2366, 0.0
      %vm2401 = vcmask 64512
      %2402 = vst.msk [vmem:[#allocation3] sm:$0xff] %vm2401, 0.0
      %2403 = vst.msk [vmem:[#allocation3 + $0x8] sm:$0xff] %vm2401, 0.0
      %vm2404 = vcmask 58368
      %2405 = vst.msk [vmem:[#allocation3 + $0x10] sm:$0x3] %vm2404, 0.0
      %s2406 = scalar_lea.vmem [#allocation3], 408
      %2407 = vst.msk [vmem:[%s2406] sm:$0xff] %vm2401, 0.0
      %2408 = vst.msk [vmem:[%s2406 + $0x8] sm:$0xff] %vm2401, 0.0
      %2409 = vst.msk [vmem:[%s2406 + $0x10] sm:$0x3] %vm2404, 0.0
      %vm2410 = vcmask 57344
      %2411 = vst.msk [vmem:[#allocation3] sm:$0x1] %vm2410, 0.0
      %2412 = vst.msk [vmem:[#allocation3 + $0x18] sm:$0x1] %vm2410, 0.0
      %2413 = vst.msk [vmem:[#allocation3 + $0x30] sm:$0x1] %vm2410, 0.0
      %2414 = vst.msk [vmem:[#allocation3 + $0x48] sm:$0x1] %vm2410, 0.0
      %2415 = vst.msk [vmem:[#allocation3 + $0x60] sm:$0x1] %vm2410, 0.0
      %2416 = vst.msk [vmem:[#allocation3 + $0x78] sm:$0x1] %vm2410, 0.0
      %2417 = vst.msk [vmem:[#allocation3 + $0x90] sm:$0x1] %vm2410, 0.0
      %2418 = vst.msk [vmem:[#allocation3 + $0xa8] sm:$0x1] %vm2410, 0.0
      %2419 = vst.msk [vmem:[#allocation3 + $0xc0] sm:$0x1] %vm2410, 0.0
      %2420 = vst.msk [vmem:[#allocation3 + $0xd8] sm:$0x1] %vm2410, 0.0
      %2421 = vst.msk [vmem:[#allocation3 + $0xf0] sm:$0x1] %vm2410, 0.0
      %2422 = vst.msk [vmem:[#allocation3 + $0x108] sm:$0x1] %vm2410, 0.0
      %2423 = vst.msk [vmem:[#allocation3 + $0x120] sm:$0x1] %vm2410, 0.0
      %2424 = vst.msk [vmem:[#allocation3 + $0x138] sm:$0x1] %vm2410, 0.0
      %2425 = vst.msk [vmem:[#allocation3 + $0x150] sm:$0x1] %vm2410, 0.0
      %2426 = vst.msk [vmem:[#allocation3 + $0x168] sm:$0x1] %vm2410, 0.0
      %2427 = vst.msk [vmem:[#allocation3 + $0x180] sm:$0x1] %vm2410, 0.0
      %2428 = vst.msk [vmem:[#allocation3 + $0x198] sm:$0x1] %vm2410, 0.0
      %2429 = vst.msk [vmem:[#allocation3 + $0x11] sm:$0x1] %vm2410, 0.0
      %2430 = vst.msk [vmem:[#allocation3 + $0x29] sm:$0x1] %vm2410, 0.0
      %2431 = vst.msk [vmem:[#allocation3 + $0x41] sm:$0x1] %vm2410, 0.0
      %2432 = vst.msk [vmem:[#allocation3 + $0x59] sm:$0x1] %vm2410, 0.0
      %2433 = vst.msk [vmem:[#allocation3 + $0x71] sm:$0x1] %vm2410, 0.0
      %2434 = vst.msk [vmem:[#allocation3 + $0x89] sm:$0x1] %vm2410, 0.0
      %2435 = vst.msk [vmem:[#allocation3 + $0xa1] sm:$0x1] %vm2410, 0.0
      %2436 = vst.msk [vmem:[#allocation3 + $0xb9] sm:$0x1] %vm2410, 0.0
      %2437 = vst.msk [vmem:[#allocation3 + $0xd1] sm:$0x1] %vm2410, 0.0
      %2438 = vst.msk [vmem:[#allocation3 + $0xe9] sm:$0x1] %vm2410, 0.0
      %2439 = vst.msk [vmem:[#allocation3 + $0x101] sm:$0x1] %vm2410, 0.0
      %2440 = vst.msk [vmem:[#allocation3 + $0x119] sm:$0x1] %vm2410, 0.0
      %2441 = vst.msk [vmem:[#allocation3 + $0x131] sm:$0x1] %vm2410, 0.0
      %2442 = vst.msk [vmem:[#allocation3 + $0x149] sm:$0x1] %vm2410, 0.0
      %2443 = vst.msk [vmem:[#allocation3 + $0x161] sm:$0x1] %vm2410, 0.0
      %2444 = vst.msk [vmem:[#allocation3 + $0x179] sm:$0x1] %vm2410, 0.0
      %2445 = vst.msk [vmem:[#allocation3 + $0x191] sm:$0x1] %vm2410, 0.0
      %2446 = vst.msk [vmem:[#allocation3 + $0x1a9] sm:$0x1] %vm2410, 0.0
      %s2447 = scalar_lea.vmem [#allocation3], 24
      %2448 = vst.msk [vmem:[%s2447 + $0x1] sm:$0xff] %vm2401, %v2369
      %2449 = vst.msk [vmem:[%s2447 + $0x9] sm:$0xff] %vm2401, %v2370
      %2450 = vst.msk [vmem:[%s2447 + $0x19] sm:$0xff] %vm2401, %v2371
      %2451 = vst.msk [vmem:[%s2447 + $0x21] sm:$0xff] %vm2401, %v2372
      %2452 = vst.msk [vmem:[%s2447 + $0x31] sm:$0xff] %vm2401, %v2373
      %2453 = vst.msk [vmem:[%s2447 + $0x39] sm:$0xff] %vm2401, %v2374
      %2454 = vst.msk [vmem:[%s2447 + $0x49] sm:$0xff] %vm2401, %v2375
      %2455 = vst.msk [vmem:[%s2447 + $0x51] sm:$0xff] %vm2401, %v2376
      %2456 = vst.msk [vmem:[%s2447 + $0x61] sm:$0xff] %vm2401, %v2377
      %2457 = vst.msk [vmem:[%s2447 + $0x69] sm:$0xff] %vm2401, %v2378
      %2458 = vst.msk [vmem:[%s2447 + $0x79] sm:$0xff] %vm2401, %v2379
      %2459 = vst.msk [vmem:[%s2447 + $0x81] sm:$0xff] %vm2401, %v2380
      %2460 = vst.msk [vmem:[%s2447 + $0x91] sm:$0xff] %vm2401, %v2381
      %2461 = vst.msk [vmem:[%s2447 + $0x99] sm:$0xff] %vm2401, %v2382
      %2462 = vst.msk [vmem:[%s2447 + $0xa9] sm:$0xff] %vm2401, %v2383
      %2463 = vst.msk [vmem:[%s2447 + $0xb1] sm:$0xff] %vm2401, %v2384
      %2464 = vst.msk [vmem:[%s2447 + $0xc1] sm:$0xff] %vm2401, %v2385
      %2465 = vst.msk [vmem:[%s2447 + $0xc9] sm:$0xff] %vm2401, %v2386
      %2466 = vst.msk [vmem:[%s2447 + $0xd9] sm:$0xff] %vm2401, %v2387
      %2467 = vst.msk [vmem:[%s2447 + $0xe1] sm:$0xff] %vm2401, %v2388
      %2468 = vst.msk [vmem:[%s2447 + $0xf1] sm:$0xff] %vm2401, %v2389
      %2469 = vst.msk [vmem:[%s2447 + $0xf9] sm:$0xff] %vm2401, %v2390
      %2470 = vst.msk [vmem:[%s2447 + $0x109] sm:$0xff] %vm2401, %v2391
      %2471 = vst.msk [vmem:[%s2447 + $0x111] sm:$0xff] %vm2401, %v2392
      %2472 = vst.msk [vmem:[%s2447 + $0x121] sm:$0xff] %vm2401, %v2393
      %2473 = vst.msk [vmem:[%s2447 + $0x129] sm:$0xff] %vm2401, %v2394
      %2474 = vst.msk [vmem:[%s2447 + $0x139] sm:$0xff] %vm2401, %v2395
      %2475 = vst.msk [vmem:[%s2447 + $0x141] sm:$0xff] %vm2401, %v2396
      %2476 = vst.msk [vmem:[%s2447 + $0x151] sm:$0xff] %vm2401, %v2397
      %2477 = vst.msk [vmem:[%s2447 + $0x159] sm:$0xff] %vm2401, %v2398
      %2478 = vst.msk [vmem:[%s2447 + $0x169] sm:$0xff] %vm2401, %v2399
      %2479 = vst.msk [vmem:[%s2447 + $0x171] sm:$0xff] %vm2401, %v2400
      %v2480 = vld [vmem:[#allocation3] sm:$0xff]
      %v2481 = vld [vmem:[#allocation3 + $0x8] sm:$0xff]
      %v2482 = vld [vmem:[#allocation3 + $0x18] sm:$0xff]
      %v2483 = vld [vmem:[#allocation3 + $0x20] sm:$0xff]
      %v2484 = vld [vmem:[#allocation3 + $0x30] sm:$0xff]
      %v2485 = vld [vmem:[#allocation3 + $0x38] sm:$0xff]
      %v2486 = vld [vmem:[#allocation3 + $0x48] sm:$0xff]
      %v2487 = vld [vmem:[#allocation3 + $0x50] sm:$0xff]
      %v2488 = vld [vmem:[#allocation3 + $0x60] sm:$0xff]
      %v2489 = vld [vmem:[#allocation3 + $0x68] sm:$0xff]
      %v2490 = vld [vmem:[#allocation3 + $0x78] sm:$0xff]
      %v2491 = vld [vmem:[#allocation3 + $0x80] sm:$0xff]
      %v2492 = vld [vmem:[#allocation3 + $0x90] sm:$0xff]
      %v2493 = vld [vmem:[#allocation3 + $0x98] sm:$0xff]
      %v2494 = vld [vmem:[#allocation3 + $0xa8] sm:$0xff]
      %v2495 = vld [vmem:[#allocation3 + $0xb0] sm:$0xff]
      %v2496 = vld [vmem:[#allocation3 + $0xc0] sm:$0xff]
      %v2497 = vld [vmem:[#allocation3 + $0xc8] sm:$0xff]
      %v2498 = vld [vmem:[#allocation3 + $0xd8] sm:$0xff]
      %v2499 = vld [vmem:[#allocation3 + $0xe0] sm:$0xff]
      %v2500 = vld [vmem:[#allocation3 + $0xf0] sm:$0xff]
      %v2501 = vld [vmem:[#allocation3 + $0xf8] sm:$0xff]
      %v2502 = vld [vmem:[#allocation3 + $0x108] sm:$0xff]
      %v2503 = vld [vmem:[#allocation3 + $0x110] sm:$0xff]
      %v2504 = vld [vmem:[#allocation3 + $0x120] sm:$0xff]
      %v2505 = vld [vmem:[#allocation3 + $0x128] sm:$0xff]
      %v2506 = vld [vmem:[#allocation3 + $0x138] sm:$0xff]
      %v2507 = vld [vmem:[#allocation3 + $0x140] sm:$0xff]
      %v2508 = vld [vmem:[#allocation3 + $0x150] sm:$0xff]
      %v2509 = vld [vmem:[#allocation3 + $0x158] sm:$0xff]
      %v2510 = vld [vmem:[#allocation3 + $0x168] sm:$0xff]
      %v2511 = vld [vmem:[#allocation3 + $0x170] sm:$0xff]
      %2512 = vst.msk [vmem:[#allocation5] sm:$0xff] %vm2401, %v2480
      %2513 = vst.msk [vmem:[#allocation5 + $0x8] sm:$0xff] %vm2401, %v2481
      %2514 = vst.msk [vmem:[#allocation5 + $0x10] sm:$0xff] %vm2401, %v2482
      %2515 = vst.msk [vmem:[#allocation5 + $0x18] sm:$0xff] %vm2401, %v2483
      %2516 = vst.msk [vmem:[#allocation5 + $0x20] sm:$0xff] %vm2401, %v2484
      %2517 = vst.msk [vmem:[#allocation5 + $0x28] sm:$0xff] %vm2401, %v2485
      %2518 = vst.msk [vmem:[#allocation5 + $0x30] sm:$0xff] %vm2401, %v2486
      %2519 = vst.msk [vmem:[#allocation5 + $0x38] sm:$0xff] %vm2401, %v2487
      %2520 = vst.msk [vmem:[#allocation5 + $0x40] sm:$0xff] %vm2401, %v2488
      %2521 = vst.msk [vmem:[#allocation5 + $0x48] sm:$0xff] %vm2401, %v2489
      %2522 = vst.msk [vmem:[#allocation5 + $0x50] sm:$0xff] %vm2401, %v2490
      %2523 = vst.msk [vmem:[#allocation5 + $0x58] sm:$0xff] %vm2401, %v2491
      %2524 = vst.msk [vmem:[#allocation5 + $0x60] sm:$0xff] %vm2401, %v2492
      %2525 = vst.msk [vmem:[#allocation5 + $0x68] sm:$0xff] %vm2401, %v2493
      %2526 = vst.msk [vmem:[#allocation5 + $0x70] sm:$0xff] %vm2401, %v2494
      %2527 = vst.msk [vmem:[#allocation5 + $0x78] sm:$0xff] %vm2401, %v2495
      %2528 = vst.msk [vmem:[#allocation5 + $0x80] sm:$0xff] %vm2401, %v2496
      %2529 = vst.msk [vmem:[#allocation5 + $0x88] sm:$0xff] %vm2401, %v2497
      %2530 = vst.msk [vmem:[#allocation5 + $0x90] sm:$0xff] %vm2401, %v2498
      %2531 = vst.msk [vmem:[#allocation5 + $0x98] sm:$0xff] %vm2401, %v2499
      %2532 = vst.msk [vmem:[#allocation5 + $0xa0] sm:$0xff] %vm2401, %v2500
      %2533 = vst.msk [vmem:[#allocation5 + $0xa8] sm:$0xff] %vm2401, %v2501
      %2534 = vst.msk [vmem:[#allocation5 + $0xb0] sm:$0xff] %vm2401, %v2502
      %2535 = vst.msk [vmem:[#allocation5 + $0xb8] sm:$0xff] %vm2401, %v2503
      %2536 = vst.msk [vmem:[#allocation5 + $0xc0] sm:$0xff] %vm2401, %v2504
      %2537 = vst.msk [vmem:[#allocation5 + $0xc8] sm:$0xff] %vm2401, %v2505
      %2538 = vst.msk [vmem:[#allocation5 + $0xd0] sm:$0xff] %vm2401, %v2506
      %2539 = vst.msk [vmem:[#allocation5 + $0xd8] sm:$0xff] %vm2401, %v2507
      %2540 = vst.msk [vmem:[#allocation5 + $0xe0] sm:$0xff] %vm2401, %v2508
      %2541 = vst.msk [vmem:[#allocation5 + $0xe8] sm:$0xff] %vm2401, %v2509
      %2542 = vst.msk [vmem:[#allocation5 + $0xf0] sm:$0xff] %vm2401, %v2510
      %2543 = vst.msk [vmem:[#allocation5 + $0xf8] sm:$0xff] %vm2401, %v2511
      %v2544 = vld [vmem:[#allocation3 + $0x1] sm:$0xff]
      %v2545 = vld [vmem:[#allocation3 + $0x9] sm:$0xff]
      %v2546 = vld [vmem:[#allocation3 + $0x19] sm:$0xff]
      %v2547 = vld [vmem:[#allocation3 + $0x21] sm:$0xff]
      %v2548 = vld [vmem:[#allocation3 + $0x31] sm:$0xff]
      %v2549 = vld [vmem:[#allocation3 + $0x39] sm:$0xff]
      %v2550 = vld [vmem:[#allocation3 + $0x49] sm:$0xff]
      %v2551 = vld [vmem:[#allocation3 + $0x51] sm:$0xff]
      %v2552 = vld [vmem:[#allocation3 + $0x61] sm:$0xff]
      %v2553 = vld [vmem:[#allocation3 + $0x69] sm:$0xff]
      %v2554 = vld [vmem:[#allocation3 + $0x79] sm:$0xff]
      %v2555 = vld [vmem:[#allocation3 + $0x81] sm:$0xff]
      %v2556 = vld [vmem:[#allocation3 + $0x91] sm:$0xff]
      %v2557 = vld [vmem:[#allocation3 + $0x99] sm:$0xff]
      %v2558 = vld [vmem:[#allocation3 + $0xa9] sm:$0xff]
      %v2559 = vld [vmem:[#allocation3 + $0xb1] sm:$0xff]
      %v2560 = vld [vmem:[#allocation3 + $0xc1] sm:$0xff]
      %v2561 = vld [vmem:[#allocation3 + $0xc9] sm:$0xff]
      %v2562 = vld [vmem:[#allocation3 + $0xd9] sm:$0xff]
      %v2563 = vld [vmem:[#allocation3 + $0xe1] sm:$0xff]
      %v2564 = vld [vmem:[#allocation3 + $0xf1] sm:$0xff]
      %v2565 = vld [vmem:[#allocation3 + $0xf9] sm:$0xff]
      %v2566 = vld [vmem:[#allocation3 + $0x109] sm:$0xff]
      %v2567 = vld [vmem:[#allocation3 + $0x111] sm:$0xff]
      %v2568 = vld [vmem:[#allocation3 + $0x121] sm:$0xff]
      %v2569 = vld [vmem:[#allocation3 + $0x129] sm:$0xff]
      %v2570 = vld [vmem:[#allocation3 + $0x139] sm:$0xff]
      %v2571 = vld [vmem:[#allocation3 + $0x141] sm:$0xff]
      %v2572 = vld [vmem:[#allocation3 + $0x151] sm:$0xff]
      %v2573 = vld [vmem:[#allocation3 + $0x159] sm:$0xff]
      %v2574 = vld [vmem:[#allocation3 + $0x169] sm:$0xff]
      %v2575 = vld [vmem:[#allocation3 + $0x171] sm:$0xff]
      %2608 = vrot.lane.b32.xlu0 %v2544, 8
      %v2609 = vpop.permute.xlu0 %2608
      %2610 = vrot.lane.b32.xlu0 %v2545, 8
      %v2611 = vpop.permute.xlu0 %2610
      %2612 = vrot.lane.b32.xlu0 %v2546, 8
      %v2613 = vpop.permute.xlu0 %2612
      %2614 = vrot.lane.b32.xlu0 %v2547, 8
      %v2615 = vpop.permute.xlu0 %2614
      %2616 = vrot.lane.b32.xlu0 %v2548, 8
      %v2617 = vpop.permute.xlu0 %2616
      %2618 = vrot.lane.b32.xlu0 %v2549, 8
      %v2619 = vpop.permute.xlu0 %2618
      %2620 = vrot.lane.b32.xlu0 %v2550, 8
      %v2621 = vpop.permute.xlu0 %2620
      %2622 = vrot.lane.b32.xlu0 %v2551, 8
      %v2623 = vpop.permute.xlu0 %2622
      %2624 = vrot.lane.b32.xlu0 %v2552, 8
      %v2625 = vpop.permute.xlu0 %2624
      %2626 = vrot.lane.b32.xlu0 %v2553, 8
      %v2627 = vpop.permute.xlu0 %2626
      %2628 = vrot.lane.b32.xlu0 %v2554, 8
      %v2629 = vpop.permute.xlu0 %2628
      %2630 = vrot.lane.b32.xlu0 %v2555, 8
      %v2631 = vpop.permute.xlu0 %2630
      %2632 = vrot.lane.b32.xlu0 %v2556, 8
      %v2633 = vpop.permute.xlu0 %2632
      %2634 = vrot.lane.b32.xlu0 %v2557, 8
      %v2635 = vpop.permute.xlu0 %2634
      %2636 = vrot.lane.b32.xlu0 %v2558, 8
      %v2637 = vpop.permute.xlu0 %2636
      %2638 = vrot.lane.b32.xlu0 %v2559, 8
      %v2639 = vpop.permute.xlu0 %2638
      %2640 = vrot.lane.b32.xlu0 %v2560, 8
      %v2641 = vpop.permute.xlu0 %2640
      %2642 = vrot.lane.b32.xlu0 %v2561, 8
      %v2643 = vpop.permute.xlu0 %2642
      %2644 = vrot.lane.b32.xlu0 %v2562, 8
      %v2645 = vpop.permute.xlu0 %2644
      %2646 = vrot.lane.b32.xlu0 %v2563, 8
      %v2647 = vpop.permute.xlu0 %2646
      %2648 = vrot.lane.b32.xlu0 %v2564, 8
      %v2649 = vpop.permute.xlu0 %2648
      %2650 = vrot.lane.b32.xlu0 %v2565, 8
      %v2651 = vpop.permute.xlu0 %2650
      %2652 = vrot.lane.b32.xlu0 %v2566, 8
      %v2653 = vpop.permute.xlu0 %2652
      %2654 = vrot.lane.b32.xlu0 %v2567, 8
      %v2655 = vpop.permute.xlu0 %2654
      %2656 = vrot.lane.b32.xlu0 %v2568, 8
      %v2657 = vpop.permute.xlu0 %2656
      %2658 = vrot.lane.b32.xlu0 %v2569, 8
      %v2659 = vpop.permute.xlu0 %2658
      %2660 = vrot.lane.b32.xlu0 %v2570, 8
      %v2661 = vpop.permute.xlu0 %2660
      %2662 = vrot.lane.b32.xlu0 %v2571, 8
      %v2663 = vpop.permute.xlu0 %2662
      %2664 = vrot.lane.b32.xlu0 %v2572, 8
      %v2665 = vpop.permute.xlu0 %2664
      %2666 = vrot.lane.b32.xlu0 %v2573, 8
      %v2667 = vpop.permute.xlu0 %2666
      %2668 = vrot.lane.b32.xlu0 %v2574, 8
      %v2669 = vpop.permute.xlu0 %2668
      %2670 = vrot.lane.b32.xlu0 %v2575, 8
      %v2671 = vpop.permute.xlu0 %2670
      %vm2704 = vcmask 130112
      %2705 = vst.msk [vmem:[#allocation5] sm:$0xff] %vm2704, %v2609
      %2706 = vst.msk [vmem:[#allocation5 + $0x8] sm:$0xff] %vm2704, %v2611
      %2707 = vst.msk [vmem:[#allocation5 + $0x10] sm:$0xff] %vm2704, %v2613
      %2708 = vst.msk [vmem:[#allocation5 + $0x18] sm:$0xff] %vm2704, %v2615
      %2709 = vst.msk [vmem:[#allocation5 + $0x20] sm:$0xff] %vm2704, %v2617
      %2710 = vst.msk [vmem:[#allocation5 + $0x28] sm:$0xff] %vm2704, %v2619
      %2711 = vst.msk [vmem:[#allocation5 + $0x30] sm:$0xff] %vm2704, %v2621
      %2712 = vst.msk [vmem:[#allocation5 + $0x38] sm:$0xff] %vm2704, %v2623
      %2713 = vst.msk [vmem:[#allocation5 + $0x40] sm:$0xff] %vm2704, %v2625
      %2714 = vst.msk [vmem:[#allocation5 + $0x48] sm:$0xff] %vm2704, %v2627
      %2715 = vst.msk [vmem:[#allocation5 + $0x50] sm:$0xff] %vm2704, %v2629
      %2716 = vst.msk [vmem:[#allocation5 + $0x58] sm:$0xff] %vm2704, %v2631
      %2717 = vst.msk [vmem:[#allocation5 + $0x60] sm:$0xff] %vm2704, %v2633
      %2718 = vst.msk [vmem:[#allocation5 + $0x68] sm:$0xff] %vm2704, %v2635
      %2719 = vst.msk [vmem:[#allocation5 + $0x70] sm:$0xff] %vm2704, %v2637
      %2720 = vst.msk [vmem:[#allocation5 + $0x78] sm:$0xff] %vm2704, %v2639
      %2721 = vst.msk [vmem:[#allocation5 + $0x80] sm:$0xff] %vm2704, %v2641
      %2722 = vst.msk [vmem:[#allocation5 + $0x88] sm:$0xff] %vm2704, %v2643
      %2723 = vst.msk [vmem:[#allocation5 + $0x90] sm:$0xff] %vm2704, %v2645
      %2724 = vst.msk [vmem:[#allocation5 + $0x98] sm:$0xff] %vm2704, %v2647
      %2725 = vst.msk [vmem:[#allocation5 + $0xa0] sm:$0xff] %vm2704, %v2649
      %2726 = vst.msk [vmem:[#allocation5 + $0xa8] sm:$0xff] %vm2704, %v2651
      %2727 = vst.msk [vmem:[#allocation5 + $0xb0] sm:$0xff] %vm2704, %v2653
      %2728 = vst.msk [vmem:[#allocation5 + $0xb8] sm:$0xff] %vm2704, %v2655
      %2729 = vst.msk [vmem:[#allocation5 + $0xc0] sm:$0xff] %vm2704, %v2657
      %2730 = vst.msk [vmem:[#allocation5 + $0xc8] sm:$0xff] %vm2704, %v2659
      %2731 = vst.msk [vmem:[#allocation5 + $0xd0] sm:$0xff] %vm2704, %v2661
      %2732 = vst.msk [vmem:[#allocation5 + $0xd8] sm:$0xff] %vm2704, %v2663
      %2733 = vst.msk [vmem:[#allocation5 + $0xe0] sm:$0xff] %vm2704, %v2665
      %2734 = vst.msk [vmem:[#allocation5 + $0xe8] sm:$0xff] %vm2704, %v2667
      %2735 = vst.msk [vmem:[#allocation5 + $0xf0] sm:$0xff] %vm2704, %v2669
      %2736 = vst.msk [vmem:[#allocation5 + $0xf8] sm:$0xff] %vm2704, %v2671
      %v2737 = vld [vmem:[#allocation3 + $0x2] sm:$0xff]
      %v2738 = vld [vmem:[#allocation3 + $0xa] sm:$0xff]
      %v2739 = vld [vmem:[#allocation3 + $0x1a] sm:$0xff]
      %v2740 = vld [vmem:[#allocation3 + $0x22] sm:$0xff]
      %v2741 = vld [vmem:[#allocation3 + $0x32] sm:$0xff]
      %v2742 = vld [vmem:[#allocation3 + $0x3a] sm:$0xff]
      %v2743 = vld [vmem:[#allocation3 + $0x4a] sm:$0xff]
      %v2744 = vld [vmem:[#allocation3 + $0x52] sm:$0xff]
      %v2745 = vld [vmem:[#allocation3 + $0x62] sm:$0xff]
      %v2746 = vld [vmem:[#allocation3 + $0x6a] sm:$0xff]
      %v2747 = vld [vmem:[#allocation3 + $0x7a] sm:$0xff]
      %v2748 = vld [vmem:[#allocation3 + $0x82] sm:$0xff]
      %v2749 = vld [vmem:[#allocation3 + $0x92] sm:$0xff]
      %v2750 = vld [vmem:[#allocation3 + $0x9a] sm:$0xff]
      %v2751 = vld [vmem:[#allocation3 + $0xaa] sm:$0xff]
      %v2752 = vld [vmem:[#allocation3 + $0xb2] sm:$0xff]
      %v2753 = vld [vmem:[#allocation3 + $0xc2] sm:$0xff]
      %v2754 = vld [vmem:[#allocation3 + $0xca] sm:$0xff]
      %v2755 = vld [vmem:[#allocation3 + $0xda] sm:$0xff]
      %v2756 = vld [vmem:[#allocation3 + $0xe2] sm:$0xff]
      %v2757 = vld [vmem:[#allocation3 + $0xf2] sm:$0xff]
      %v2758 = vld [vmem:[#allocation3 + $0xfa] sm:$0xff]
      %v2759 = vld [vmem:[#allocation3 + $0x10a] sm:$0xff]
      %v2760 = vld [vmem:[#allocation3 + $0x112] sm:$0xff]
      %v2761 = vld [vmem:[#allocation3 + $0x122] sm:$0xff]
      %v2762 = vld [vmem:[#allocation3 + $0x12a] sm:$0xff]
      %v2763 = vld [vmem:[#allocation3 + $0x13a] sm:$0xff]
      %v2764 = vld [vmem:[#allocation3 + $0x142] sm:$0xff]
      %v2765 = vld [vmem:[#allocation3 + $0x152] sm:$0xff]
      %v2766 = vld [vmem:[#allocation3 + $0x15a] sm:$0xff]
      %v2767 = vld [vmem:[#allocation3 + $0x16a] sm:$0xff]
      %v2768 = vld [vmem:[#allocation3 + $0x172] sm:$0xff]
      %2801 = vrot.lane.b32.xlu0 %v2737, 16
      %v2802 = vpop.permute.xlu0 %2801
      %2803 = vrot.lane.b32.xlu0 %v2738, 16
      %v2804 = vpop.permute.xlu0 %2803
      %2805 = vrot.lane.b32.xlu0 %v2739, 16
      %v2806 = vpop.permute.xlu0 %2805
      %2807 = vrot.lane.b32.xlu0 %v2740, 16
      %v2808 = vpop.permute.xlu0 %2807
      %2809 = vrot.lane.b32.xlu0 %v2741, 16
      %v2810 = vpop.permute.xlu0 %2809
      %2811 = vrot.lane.b32.xlu0 %v2742, 16
      %v2812 = vpop.permute.xlu0 %2811
      %2813 = vrot.lane.b32.xlu0 %v2743, 16
      %v2814 = vpop.permute.xlu0 %2813
      %2815 = vrot.lane.b32.xlu0 %v2744, 16
      %v2816 = vpop.permute.xlu0 %2815
      %2817 = vrot.lane.b32.xlu0 %v2745, 16
      %v2818 = vpop.permute.xlu0 %2817
      %2819 = vrot.lane.b32.xlu0 %v2746, 16
      %v2820 = vpop.permute.xlu0 %2819
      %2821 = vrot.lane.b32.xlu0 %v2747, 16
      %v2822 = vpop.permute.xlu0 %2821
      %2823 = vrot.lane.b32.xlu0 %v2748, 16
      %v2824 = vpop.permute.xlu0 %2823
      %2825 = vrot.lane.b32.xlu0 %v2749, 16
      %v2826 = vpop.permute.xlu0 %2825
      %2827 = vrot.lane.b32.xlu0 %v2750, 16
      %v2828 = vpop.permute.xlu0 %2827
      %2829 = vrot.lane.b32.xlu0 %v2751, 16
      %v2830 = vpop.permute.xlu0 %2829
      %2831 = vrot.lane.b32.xlu0 %v2752, 16
      %v2832 = vpop.permute.xlu0 %2831
      %2833 = vrot.lane.b32.xlu0 %v2753, 16
      %v2834 = vpop.permute.xlu0 %2833
      %2835 = vrot.lane.b32.xlu0 %v2754, 16
      %v2836 = vpop.permute.xlu0 %2835
      %2837 = vrot.lane.b32.xlu0 %v2755, 16
      %v2838 = vpop.permute.xlu0 %2837
      %2839 = vrot.lane.b32.xlu0 %v2756, 16
      %v2840 = vpop.permute.xlu0 %2839
      %2841 = vrot.lane.b32.xlu0 %v2757, 16
      %v2842 = vpop.permute.xlu0 %2841
      %2843 = vrot.lane.b32.xlu0 %v2758, 16
      %v2844 = vpop.permute.xlu0 %2843
      %2845 = vrot.lane.b32.xlu0 %v2759, 16
      %v2846 = vpop.permute.xlu0 %2845
      %2847 = vrot.lane.b32.xlu0 %v2760, 16
      %v2848 = vpop.permute.xlu0 %2847
      %2849 = vrot.lane.b32.xlu0 %v2761, 16
      %v2850 = vpop.permute.xlu0 %2849
      %2851 = vrot.lane.b32.xlu0 %v2762, 16
      %v2852 = vpop.permute.xlu0 %2851
      %2853 = vrot.lane.b32.xlu0 %v2763, 16
      %v2854 = vpop.permute.xlu0 %2853
      %2855 = vrot.lane.b32.xlu0 %v2764, 16
      %v2856 = vpop.permute.xlu0 %2855
      %2857 = vrot.lane.b32.xlu0 %v2765, 16
      %v2858 = vpop.permute.xlu0 %2857
      %2859 = vrot.lane.b32.xlu0 %v2766, 16
      %v2860 = vpop.permute.xlu0 %2859
      %2861 = vrot.lane.b32.xlu0 %v2767, 16
      %v2862 = vpop.permute.xlu0 %2861
      %2863 = vrot.lane.b32.xlu0 %v2768, 16
      %v2864 = vpop.permute.xlu0 %2863
      %vm2897 = vcmask 195712
      %2898 = vst.msk [vmem:[#allocation5] sm:$0xff] %vm2897, %v2802
      %2899 = vst.msk [vmem:[#allocation5 + $0x8] sm:$0xff] %vm2897, %v2804
      %2900 = vst.msk [vmem:[#allocation5 + $0x10] sm:$0xff] %vm2897, %v2806
      %2901 = vst.msk [vmem:[#allocation5 + $0x18] sm:$0xff] %vm2897, %v2808
      %2902 = vst.msk [vmem:[#allocation5 + $0x20] sm:$0xff] %vm2897, %v2810
      %2903 = vst.msk [vmem:[#allocation5 + $0x28] sm:$0xff] %vm2897, %v2812
      %2904 = vst.msk [vmem:[#allocation5 + $0x30] sm:$0xff] %vm2897, %v2814
      %2905 = vst.msk [vmem:[#allocation5 + $0x38] sm:$0xff] %vm2897, %v2816
      %2906 = vst.msk [vmem:[#allocation5 + $0x40] sm:$0xff] %vm2897, %v2818
      %2907 = vst.msk [vmem:[#allocation5 + $0x48] sm:$0xff] %vm2897, %v2820
      %2908 = vst.msk [vmem:[#allocation5 + $0x50] sm:$0xff] %vm2897, %v2822
      %2909 = vst.msk [vmem:[#allocation5 + $0x58] sm:$0xff] %vm2897, %v2824
      %2910 = vst.msk [vmem:[#allocation5 + $0x60] sm:$0xff] %vm2897, %v2826
      %2911 = vst.msk [vmem:[#allocation5 + $0x68] sm:$0xff] %vm2897, %v2828
      %2912 = vst.msk [vmem:[#allocation5 + $0x70] sm:$0xff] %vm2897, %v2830
      %2913 = vst.msk [vmem:[#allocation5 + $0x78] sm:$0xff] %vm2897, %v2832
      %2914 = vst.msk [vmem:[#allocation5 + $0x80] sm:$0xff] %vm2897, %v2834
      %2915 = vst.msk [vmem:[#allocation5 + $0x88] sm:$0xff] %vm2897, %v2836
      %2916 = vst.msk [vmem:[#allocation5 + $0x90] sm:$0xff] %vm2897, %v2838
      %2917 = vst.msk [vmem:[#allocation5 + $0x98] sm:$0xff] %vm2897, %v2840
      %2918 = vst.msk [vmem:[#allocation5 + $0xa0] sm:$0xff] %vm2897, %v2842
      %2919 = vst.msk [vmem:[#allocation5 + $0xa8] sm:$0xff] %vm2897, %v2844
      %2920 = vst.msk [vmem:[#allocation5 + $0xb0] sm:$0xff] %vm2897, %v2846
      %2921 = vst.msk [vmem:[#allocation5 + $0xb8] sm:$0xff] %vm2897, %v2848
      %2922 = vst.msk [vmem:[#allocation5 + $0xc0] sm:$0xff] %vm2897, %v2850
      %2923 = vst.msk [vmem:[#allocation5 + $0xc8] sm:$0xff] %vm2897, %v2852
      %2924 = vst.msk [vmem:[#allocation5 + $0xd0] sm:$0xff] %vm2897, %v2854
      %2925 = vst.msk [vmem:[#allocation5 + $0xd8] sm:$0xff] %vm2897, %v2856
      %2926 = vst.msk [vmem:[#allocation5 + $0xe0] sm:$0xff] %vm2897, %v2858
      %2927 = vst.msk [vmem:[#allocation5 + $0xe8] sm:$0xff] %vm2897, %v2860
      %2928 = vst.msk [vmem:[#allocation5 + $0xf0] sm:$0xff] %vm2897, %v2862
      %2929 = vst.msk [vmem:[#allocation5 + $0xf8] sm:$0xff] %vm2897, %v2864
      %v2930 = vld [vmem:[%s2447] sm:$0xff]
      %v2931 = vld [vmem:[%s2447 + $0x8] sm:$0xff]
      %v2932 = vld [vmem:[%s2447 + $0x18] sm:$0xff]
      %v2933 = vld [vmem:[%s2447 + $0x20] sm:$0xff]
      %v2934 = vld [vmem:[%s2447 + $0x30] sm:$0xff]
      %v2935 = vld [vmem:[%s2447 + $0x38] sm:$0xff]
      %v2936 = vld [vmem:[%s2447 + $0x48] sm:$0xff]
      %v2937 = vld [vmem:[%s2447 + $0x50] sm:$0xff]
      %v2938 = vld [vmem:[%s2447 + $0x60] sm:$0xff]
      %v2939 = vld [vmem:[%s2447 + $0x68] sm:$0xff]
      %v2940 = vld [vmem:[%s2447 + $0x78] sm:$0xff]
      %v2941 = vld [vmem:[%s2447 + $0x80] sm:$0xff]
      %v2942 = vld [vmem:[%s2447 + $0x90] sm:$0xff]
      %v2943 = vld [vmem:[%s2447 + $0x98] sm:$0xff]
      %v2944 = vld [vmem:[%s2447 + $0xa8] sm:$0xff]
      %v2945 = vld [vmem:[%s2447 + $0xb0] sm:$0xff]
      %v2946 = vld [vmem:[%s2447 + $0xc0] sm:$0xff]
      %v2947 = vld [vmem:[%s2447 + $0xc8] sm:$0xff]
      %v2948 = vld [vmem:[%s2447 + $0xd8] sm:$0xff]
      %v2949 = vld [vmem:[%s2447 + $0xe0] sm:$0xff]
      %v2950 = vld [vmem:[%s2447 + $0xf0] sm:$0xff]
      %v2951 = vld [vmem:[%s2447 + $0xf8] sm:$0xff]
      %v2952 = vld [vmem:[%s2447 + $0x108] sm:$0xff]
      %v2953 = vld [vmem:[%s2447 + $0x110] sm:$0xff]
      %v2954 = vld [vmem:[%s2447 + $0x120] sm:$0xff]
      %v2955 = vld [vmem:[%s2447 + $0x128] sm:$0xff]
      %v2956 = vld [vmem:[%s2447 + $0x138] sm:$0xff]
      %v2957 = vld [vmem:[%s2447 + $0x140] sm:$0xff]
      %v2958 = vld [vmem:[%s2447 + $0x150] sm:$0xff]
      %v2959 = vld [vmem:[%s2447 + $0x158] sm:$0xff]
      %v2960 = vld [vmem:[%s2447 + $0x168] sm:$0xff]
      %v2961 = vld [vmem:[%s2447 + $0x170] sm:$0xff]
      %2994 = vrot.lane.b32.xlu0 %v2930, 24
      %v2995 = vpop.permute.xlu0 %2994
      %2996 = vrot.lane.b32.xlu0 %v2931, 24
      %v2997 = vpop.permute.xlu0 %2996
      %2998 = vrot.lane.b32.xlu0 %v2932, 24
      %v2999 = vpop.permute.xlu0 %2998
      %3000 = vrot.lane.b32.xlu0 %v2933, 24
      %v3001 = vpop.permute.xlu0 %3000
      %3002 = vrot.lane.b32.xlu0 %v2934, 24
      %v3003 = vpop.permute.xlu0 %3002
      %3004 = vrot.lane.b32.xlu0 %v2935, 24
      %v3005 = vpop.permute.xlu0 %3004
      %3006 = vrot.lane.b32.xlu0 %v2936, 24
      %v3007 = vpop.permute.xlu0 %3006
      %3008 = vrot.lane.b32.xlu0 %v2937, 24
      %v3009 = vpop.permute.xlu0 %3008
      %3010 = vrot.lane.b32.xlu0 %v2938, 24
      %v3011 = vpop.permute.xlu0 %3010
      %3012 = vrot.lane.b32.xlu0 %v2939, 24
      %v3013 = vpop.permute.xlu0 %3012
      %3014 = vrot.lane.b32.xlu0 %v2940, 24
      %v3015 = vpop.permute.xlu0 %3014
      %3016 = vrot.lane.b32.xlu0 %v2941, 24
      %v3017 = vpop.permute.xlu0 %3016
      %3018 = vrot.lane.b32.xlu0 %v2942, 24
      %v3019 = vpop.permute.xlu0 %3018
      %3020 = vrot.lane.b32.xlu0 %v2943, 24
      %v3021 = vpop.permute.xlu0 %3020
      %3022 = vrot.lane.b32.xlu0 %v2944, 24
      %v3023 = vpop.permute.xlu0 %3022
      %3024 = vrot.lane.b32.xlu0 %v2945, 24
      %v3025 = vpop.permute.xlu0 %3024
      %3026 = vrot.lane.b32.xlu0 %v2946, 24
      %v3027 = vpop.permute.xlu0 %3026
      %3028 = vrot.lane.b32.xlu0 %v2947, 24
      %v3029 = vpop.permute.xlu0 %3028
      %3030 = vrot.lane.b32.xlu0 %v2948, 24
      %v3031 = vpop.permute.xlu0 %3030
      %3032 = vrot.lane.b32.xlu0 %v2949, 24
      %v3033 = vpop.permute.xlu0 %3032
      %3034 = vrot.lane.b32.xlu0 %v2950, 24
      %v3035 = vpop.permute.xlu0 %3034
      %3036 = vrot.lane.b32.xlu0 %v2951, 24
      %v3037 = vpop.permute.xlu0 %3036
      %3038 = vrot.lane.b32.xlu0 %v2952, 24
      %v3039 = vpop.permute.xlu0 %3038
      %3040 = vrot.lane.b32.xlu0 %v2953, 24
      %v3041 = vpop.permute.xlu0 %3040
      %3042 = vrot.lane.b32.xlu0 %v2954, 24
      %v3043 = vpop.permute.xlu0 %3042
      %3044 = vrot.lane.b32.xlu0 %v2955, 24
      %v3045 = vpop.permute.xlu0 %3044
      %3046 = vrot.lane.b32.xlu0 %v2956, 24
      %v3047 = vpop.permute.xlu0 %3046
      %3048 = vrot.lane.b32.xlu0 %v2957, 24
      %v3049 = vpop.permute.xlu0 %3048
      %3050 = vrot.lane.b32.xlu0 %v2958, 24
      %v3051 = vpop.permute.xlu0 %3050
      %3052 = vrot.lane.b32.xlu0 %v2959, 24
      %v3053 = vpop.permute.xlu0 %3052
      %3054 = vrot.lane.b32.xlu0 %v2960, 24
      %v3055 = vpop.permute.xlu0 %3054
      %3056 = vrot.lane.b32.xlu0 %v2961, 24
      %v3057 = vpop.permute.xlu0 %3056
      %vm3090 = vcmask 261312
      %3091 = vst.msk [vmem:[#allocation5] sm:$0xff] %vm3090, %v2995
      %3092 = vst.msk [vmem:[#allocation5 + $0x8] sm:$0xff] %vm3090, %v2997
      %3093 = vst.msk [vmem:[#allocation5 + $0x10] sm:$0xff] %vm3090, %v2999
      %3094 = vst.msk [vmem:[#allocation5 + $0x18] sm:$0xff] %vm3090, %v3001
      %3095 = vst.msk [vmem:[#allocation5 + $0x20] sm:$0xff] %vm3090, %v3003
      %3096 = vst.msk [vmem:[#allocation5 + $0x28] sm:$0xff] %vm3090, %v3005
      %3097 = vst.msk [vmem:[#allocation5 + $0x30] sm:$0xff] %vm3090, %v3007
      %3098 = vst.msk [vmem:[#allocation5 + $0x38] sm:$0xff] %vm3090, %v3009
      %3099 = vst.msk [vmem:[#allocation5 + $0x40] sm:$0xff] %vm3090, %v3011
      %3100 = vst.msk [vmem:[#allocation5 + $0x48] sm:$0xff] %vm3090, %v3013
      %3101 = vst.msk [vmem:[#allocation5 + $0x50] sm:$0xff] %vm3090, %v3015
      %3102 = vst.msk [vmem:[#allocation5 + $0x58] sm:$0xff] %vm3090, %v3017
      %3103 = vst.msk [vmem:[#allocation5 + $0x60] sm:$0xff] %vm3090, %v3019
      %3104 = vst.msk [vmem:[#allocation5 + $0x68] sm:$0xff] %vm3090, %v3021
      %3105 = vst.msk [vmem:[#allocation5 + $0x70] sm:$0xff] %vm3090, %v3023
      %3106 = vst.msk [vmem:[#allocation5 + $0x78] sm:$0xff] %vm3090, %v3025
      %3107 = vst.msk [vmem:[#allocation5 + $0x80] sm:$0xff] %vm3090, %v3027
      %3108 = vst.msk [vmem:[#allocation5 + $0x88] sm:$0xff] %vm3090, %v3029
      %3109 = vst.msk [vmem:[#allocation5 + $0x90] sm:$0xff] %vm3090, %v3031
      %3110 = vst.msk [vmem:[#allocation5 + $0x98] sm:$0xff] %vm3090, %v3033
      %3111 = vst.msk [vmem:[#allocation5 + $0xa0] sm:$0xff] %vm3090, %v3035
      %3112 = vst.msk [vmem:[#allocation5 + $0xa8] sm:$0xff] %vm3090, %v3037
      %3113 = vst.msk [vmem:[#allocation5 + $0xb0] sm:$0xff] %vm3090, %v3039
      %3114 = vst.msk [vmem:[#allocation5 + $0xb8] sm:$0xff] %vm3090, %v3041
      %3115 = vst.msk [vmem:[#allocation5 + $0xc0] sm:$0xff] %vm3090, %v3043
      %3116 = vst.msk [vmem:[#allocation5 + $0xc8] sm:$0xff] %vm3090, %v3045
      %3117 = vst.msk [vmem:[#allocation5 + $0xd0] sm:$0xff] %vm3090, %v3047
      %3118 = vst.msk [vmem:[#allocation5 + $0xd8] sm:$0xff] %vm3090, %v3049
      %3119 = vst.msk [vmem:[#allocation5 + $0xe0] sm:$0xff] %vm3090, %v3051
      %3120 = vst.msk [vmem:[#allocation5 + $0xe8] sm:$0xff] %vm3090, %v3053
      %3121 = vst.msk [vmem:[#allocation5 + $0xf0] sm:$0xff] %vm3090, %v3055
      %3122 = vst.msk [vmem:[#allocation5 + $0xf8] sm:$0xff] %vm3090, %v3057
      %v3123 = vld [vmem:[%s2447 + $0x1] sm:$0xff]
      %v3124 = vld [vmem:[%s2447 + $0x9] sm:$0xff]
      %v3125 = vld [vmem:[%s2447 + $0x19] sm:$0xff]
      %v3126 = vld [vmem:[%s2447 + $0x21] sm:$0xff]
      %v3127 = vld [vmem:[%s2447 + $0x31] sm:$0xff]
      %v3128 = vld [vmem:[%s2447 + $0x39] sm:$0xff]
      %v3129 = vld [vmem:[%s2447 + $0x49] sm:$0xff]
      %v3130 = vld [vmem:[%s2447 + $0x51] sm:$0xff]
      %v3131 = vld [vmem:[%s2447 + $0x61] sm:$0xff]
      %v3132 = vld [vmem:[%s2447 + $0x69] sm:$0xff]
      %v3133 = vld [vmem:[%s2447 + $0x79] sm:$0xff]
      %v3134 = vld [vmem:[%s2447 + $0x81] sm:$0xff]
      %v3135 = vld [vmem:[%s2447 + $0x91] sm:$0xff]
      %v3136 = vld [vmem:[%s2447 + $0x99] sm:$0xff]
      %v3137 = vld [vmem:[%s2447 + $0xa9] sm:$0xff]
      %v3138 = vld [vmem:[%s2447 + $0xb1] sm:$0xff]
      %v3139 = vld [vmem:[%s2447 + $0xc1] sm:$0xff]
      %v3140 = vld [vmem:[%s2447 + $0xc9] sm:$0xff]
      %v3141 = vld [vmem:[%s2447 + $0xd9] sm:$0xff]
      %v3142 = vld [vmem:[%s2447 + $0xe1] sm:$0xff]
      %v3143 = vld [vmem:[%s2447 + $0xf1] sm:$0xff]
      %v3144 = vld [vmem:[%s2447 + $0xf9] sm:$0xff]
      %v3145 = vld [vmem:[%s2447 + $0x109] sm:$0xff]
      %v3146 = vld [vmem:[%s2447 + $0x111] sm:$0xff]
      %v3147 = vld [vmem:[%s2447 + $0x121] sm:$0xff]
      %v3148 = vld [vmem:[%s2447 + $0x129] sm:$0xff]
      %v3149 = vld [vmem:[%s2447 + $0x139] sm:$0xff]
      %v3150 = vld [vmem:[%s2447 + $0x141] sm:$0xff]
      %v3151 = vld [vmem:[%s2447 + $0x151] sm:$0xff]
      %v3152 = vld [vmem:[%s2447 + $0x159] sm:$0xff]
      %v3153 = vld [vmem:[%s2447 + $0x169] sm:$0xff]
      %v3154 = vld [vmem:[%s2447 + $0x171] sm:$0xff]
      %3187 = vrot.lane.b32.xlu0 %v3123, 32
      %v3188 = vpop.permute.xlu0 %3187
      %3189 = vrot.lane.b32.xlu0 %v3124, 32
      %v3190 = vpop.permute.xlu0 %3189
      %3191 = vrot.lane.b32.xlu0 %v3125, 32
      %v3192 = vpop.permute.xlu0 %3191
      %3193 = vrot.lane.b32.xlu0 %v3126, 32
      %v3194 = vpop.permute.xlu0 %3193
      %3195 = vrot.lane.b32.xlu0 %v3127, 32
      %v3196 = vpop.permute.xlu0 %3195
      %3197 = vrot.lane.b32.xlu0 %v3128, 32
      %v3198 = vpop.permute.xlu0 %3197
      %3199 = vrot.lane.b32.xlu0 %v3129, 32
      %v3200 = vpop.permute.xlu0 %3199
      %3201 = vrot.lane.b32.xlu0 %v3130, 32
      %v3202 = vpop.permute.xlu0 %3201
      %3203 = vrot.lane.b32.xlu0 %v3131, 32
      %v3204 = vpop.permute.xlu0 %3203
      %3205 = vrot.lane.b32.xlu0 %v3132, 32
      %v3206 = vpop.permute.xlu0 %3205
      %3207 = vrot.lane.b32.xlu0 %v3133, 32
      %v3208 = vpop.permute.xlu0 %3207
      %3209 = vrot.lane.b32.xlu0 %v3134, 32
      %v3210 = vpop.permute.xlu0 %3209
      %3211 = vrot.lane.b32.xlu0 %v3135, 32
      %v3212 = vpop.permute.xlu0 %3211
      %3213 = vrot.lane.b32.xlu0 %v3136, 32
      %v3214 = vpop.permute.xlu0 %3213
      %3215 = vrot.lane.b32.xlu0 %v3137, 32
      %v3216 = vpop.permute.xlu0 %3215
      %3217 = vrot.lane.b32.xlu0 %v3138, 32
      %v3218 = vpop.permute.xlu0 %3217
      %3219 = vrot.lane.b32.xlu0 %v3139, 32
      %v3220 = vpop.permute.xlu0 %3219
      %3221 = vrot.lane.b32.xlu0 %v3140, 32
      %v3222 = vpop.permute.xlu0 %3221
      %3223 = vrot.lane.b32.xlu0 %v3141, 32
      %v3224 = vpop.permute.xlu0 %3223
      %3225 = vrot.lane.b32.xlu0 %v3142, 32
      %v3226 = vpop.permute.xlu0 %3225
      %3227 = vrot.lane.b32.xlu0 %v3143, 32
      %v3228 = vpop.permute.xlu0 %3227
      %3229 = vrot.lane.b32.xlu0 %v3144, 32
      %v3230 = vpop.permute.xlu0 %3229
      %3231 = vrot.lane.b32.xlu0 %v3145, 32
      %v3232 = vpop.permute.xlu0 %3231
      %3233 = vrot.lane.b32.xlu0 %v3146, 32
      %v3234 = vpop.permute.xlu0 %3233
      %3235 = vrot.lane.b32.xlu0 %v3147, 32
      %v3236 = vpop.permute.xlu0 %3235
      %3237 = vrot.lane.b32.xlu0 %v3148, 32
      %v3238 = vpop.permute.xlu0 %3237
      %3239 = vrot.lane.b32.xlu0 %v3149, 32
      %v3240 = vpop.permute.xlu0 %3239
      %3241 = vrot.lane.b32.xlu0 %v3150, 32
      %v3242 = vpop.permute.xlu0 %3241
      %3243 = vrot.lane.b32.xlu0 %v3151, 32
      %v3244 = vpop.permute.xlu0 %3243
      %3245 = vrot.lane.b32.xlu0 %v3152, 32
      %v3246 = vpop.permute.xlu0 %3245
      %3247 = vrot.lane.b32.xlu0 %v3153, 32
      %v3248 = vpop.permute.xlu0 %3247
      %3249 = vrot.lane.b32.xlu0 %v3154, 32
      %v3250 = vpop.permute.xlu0 %3249
      %vm3283 = vcmask 326912
      %3284 = vst.msk [vmem:[#allocation5] sm:$0xff] %vm3283, %v3188
      %3285 = vst.msk [vmem:[#allocation5 + $0x8] sm:$0xff] %vm3283, %v3190
      %3286 = vst.msk [vmem:[#allocation5 + $0x10] sm:$0xff] %vm3283, %v3192
      %3287 = vst.msk [vmem:[#allocation5 + $0x18] sm:$0xff] %vm3283, %v3194
      %3288 = vst.msk [vmem:[#allocation5 + $0x20] sm:$0xff] %vm3283, %v3196
      %3289 = vst.msk [vmem:[#allocation5 + $0x28] sm:$0xff] %vm3283, %v3198
      %3290 = vst.msk [vmem:[#allocation5 + $0x30] sm:$0xff] %vm3283, %v3200
      %3291 = vst.msk [vmem:[#allocation5 + $0x38] sm:$0xff] %vm3283, %v3202
      %3292 = vst.msk [vmem:[#allocation5 + $0x40] sm:$0xff] %vm3283, %v3204
      %3293 = vst.msk [vmem:[#allocation5 + $0x48] sm:$0xff] %vm3283, %v3206
      %3294 = vst.msk [vmem:[#allocation5 + $0x50] sm:$0xff] %vm3283, %v3208
      %3295 = vst.msk [vmem:[#allocation5 + $0x58] sm:$0xff] %vm3283, %v3210
      %3296 = vst.msk [vmem:[#allocation5 + $0x60] sm:$0xff] %vm3283, %v3212
      %3297 = vst.msk [vmem:[#allocation5 + $0x68] sm:$0xff] %vm3283, %v3214
      %3298 = vst.msk [vmem:[#allocation5 + $0x70] sm:$0xff] %vm3283, %v3216
      %3299 = vst.msk [vmem:[#allocation5 + $0x78] sm:$0xff] %vm3283, %v3218
      %3300 = vst.msk [vmem:[#allocation5 + $0x80] sm:$0xff] %vm3283, %v3220
      %3301 = vst.msk [vmem:[#allocation5 + $0x88] sm:$0xff] %vm3283, %v3222
      %3302 = vst.msk [vmem:[#allocation5 + $0x90] sm:$0xff] %vm3283, %v3224
      %3303 = vst.msk [vmem:[#allocation5 + $0x98] sm:$0xff] %vm3283, %v3226
      %3304 = vst.msk [vmem:[#allocation5 + $0xa0] sm:$0xff] %vm3283, %v3228
      %3305 = vst.msk [vmem:[#allocation5 + $0xa8] sm:$0xff] %vm3283, %v3230
      %3306 = vst.msk [vmem:[#allocation5 + $0xb0] sm:$0xff] %vm3283, %v3232
      %3307 = vst.msk [vmem:[#allocation5 + $0xb8] sm:$0xff] %vm3283, %v3234
      %3308 = vst.msk [vmem:[#allocation5 + $0xc0] sm:$0xff] %vm3283, %v3236
      %3309 = vst.msk [vmem:[#allocation5 + $0xc8] sm:$0xff] %vm3283, %v3238
      %3310 = vst.msk [vmem:[#allocation5 + $0xd0] sm:$0xff] %vm3283, %v3240
      %3311 = vst.msk [vmem:[#allocation5 + $0xd8] sm:$0xff] %vm3283, %v3242
      %3312 = vst.msk [vmem:[#allocation5 + $0xe0] sm:$0xff] %vm3283, %v3244
      %3313 = vst.msk [vmem:[#allocation5 + $0xe8] sm:$0xff] %vm3283, %v3246
      %3314 = vst.msk [vmem:[#allocation5 + $0xf0] sm:$0xff] %vm3283, %v3248
      %3315 = vst.msk [vmem:[#allocation5 + $0xf8] sm:$0xff] %vm3283, %v3250
      %v3316 = vld [vmem:[%s2447 + $0x2] sm:$0xff]
      %v3317 = vld [vmem:[%s2447 + $0xa] sm:$0xff]
      %v3318 = vld [vmem:[%s2447 + $0x1a] sm:$0xff]
      %v3319 = vld [vmem:[%s2447 + $0x22] sm:$0xff]
      %v3320 = vld [vmem:[%s2447 + $0x32] sm:$0xff]
      %v3321 = vld [vmem:[%s2447 + $0x3a] sm:$0xff]
      %v3322 = vld [vmem:[%s2447 + $0x4a] sm:$0xff]
      %v3323 = vld [vmem:[%s2447 + $0x52] sm:$0xff]
      %v3324 = vld [vmem:[%s2447 + $0x62] sm:$0xff]
      %v3325 = vld [vmem:[%s2447 + $0x6a] sm:$0xff]
      %v3326 = vld [vmem:[%s2447 + $0x7a] sm:$0xff]
      %v3327 = vld [vmem:[%s2447 + $0x82] sm:$0xff]
      %v3328 = vld [vmem:[%s2447 + $0x92] sm:$0xff]
      %v3329 = vld [vmem:[%s2447 + $0x9a] sm:$0xff]
      %v3330 = vld [vmem:[%s2447 + $0xaa] sm:$0xff]
      %v3331 = vld [vmem:[%s2447 + $0xb2] sm:$0xff]
      %v3332 = vld [vmem:[%s2447 + $0xc2] sm:$0xff]
      %v3333 = vld [vmem:[%s2447 + $0xca] sm:$0xff]
      %v3334 = vld [vmem:[%s2447 + $0xda] sm:$0xff]
      %v3335 = vld [vmem:[%s2447 + $0xe2] sm:$0xff]
      %v3336 = vld [vmem:[%s2447 + $0xf2] sm:$0xff]
      %v3337 = vld [vmem:[%s2447 + $0xfa] sm:$0xff]
      %v3338 = vld [vmem:[%s2447 + $0x10a] sm:$0xff]
      %v3339 = vld [vmem:[%s2447 + $0x112] sm:$0xff]
      %v3340 = vld [vmem:[%s2447 + $0x122] sm:$0xff]
      %v3341 = vld [vmem:[%s2447 + $0x12a] sm:$0xff]
      %v3342 = vld [vmem:[%s2447 + $0x13a] sm:$0xff]
      %v3343 = vld [vmem:[%s2447 + $0x142] sm:$0xff]
      %v3344 = vld [vmem:[%s2447 + $0x152] sm:$0xff]
      %v3345 = vld [vmem:[%s2447 + $0x15a] sm:$0xff]
      %v3346 = vld [vmem:[%s2447 + $0x16a] sm:$0xff]
      %v3347 = vld [vmem:[%s2447 + $0x172] sm:$0xff]
      %3380 = vrot.lane.b32.xlu0 %v3316, 40
      %v3381 = vpop.permute.xlu0 %3380
      %3382 = vrot.lane.b32.xlu0 %v3317, 40
      %v3383 = vpop.permute.xlu0 %3382
      %3384 = vrot.lane.b32.xlu0 %v3318, 40
      %v3385 = vpop.permute.xlu0 %3384
      %3386 = vrot.lane.b32.xlu0 %v3319, 40
      %v3387 = vpop.permute.xlu0 %3386
      %3388 = vrot.lane.b32.xlu0 %v3320, 40
      %v3389 = vpop.permute.xlu0 %3388
      %3390 = vrot.lane.b32.xlu0 %v3321, 40
      %v3391 = vpop.permute.xlu0 %3390
      %3392 = vrot.lane.b32.xlu0 %v3322, 40
      %v3393 = vpop.permute.xlu0 %3392
      %3394 = vrot.lane.b32.xlu0 %v3323, 40
      %v3395 = vpop.permute.xlu0 %3394
      %3396 = vrot.lane.b32.xlu0 %v3324, 40
      %v3397 = vpop.permute.xlu0 %3396
      %3398 = vrot.lane.b32.xlu0 %v3325, 40
      %v3399 = vpop.permute.xlu0 %3398
      %3400 = vrot.lane.b32.xlu0 %v3326, 40
      %v3401 = vpop.permute.xlu0 %3400
      %3402 = vrot.lane.b32.xlu0 %v3327, 40
      %v3403 = vpop.permute.xlu0 %3402
      %3404 = vrot.lane.b32.xlu0 %v3328, 40
      %v3405 = vpop.permute.xlu0 %3404
      %3406 = vrot.lane.b32.xlu0 %v3329, 40
      %v3407 = vpop.permute.xlu0 %3406
      %3408 = vrot.lane.b32.xlu0 %v3330, 40
      %v3409 = vpop.permute.xlu0 %3408
      %3410 = vrot.lane.b32.xlu0 %v3331, 40
      %v3411 = vpop.permute.xlu0 %3410
      %3412 = vrot.lane.b32.xlu0 %v3332, 40
      %v3413 = vpop.permute.xlu0 %3412
      %3414 = vrot.lane.b32.xlu0 %v3333, 40
      %v3415 = vpop.permute.xlu0 %3414
      %3416 = vrot.lane.b32.xlu0 %v3334, 40
      %v3417 = vpop.permute.xlu0 %3416
      %3418 = vrot.lane.b32.xlu0 %v3335, 40
      %v3419 = vpop.permute.xlu0 %3418
      %3420 = vrot.lane.b32.xlu0 %v3336, 40
      %v3421 = vpop.permute.xlu0 %3420
      %3422 = vrot.lane.b32.xlu0 %v3337, 40
      %v3423 = vpop.permute.xlu0 %3422
      %3424 = vrot.lane.b32.xlu0 %v3338, 40
      %v3425 = vpop.permute.xlu0 %3424
      %3426 = vrot.lane.b32.xlu0 %v3339, 40
      %v3427 = vpop.permute.xlu0 %3426
      %3428 = vrot.lane.b32.xlu0 %v3340, 40
      %v3429 = vpop.permute.xlu0 %3428
      %3430 = vrot.lane.b32.xlu0 %v3341, 40
      %v3431 = vpop.permute.xlu0 %3430
      %3432 = vrot.lane.b32.xlu0 %v3342, 40
      %v3433 = vpop.permute.xlu0 %3432
      %3434 = vrot.lane.b32.xlu0 %v3343, 40
      %v3435 = vpop.permute.xlu0 %3434
      %3436 = vrot.lane.b32.xlu0 %v3344, 40
      %v3437 = vpop.permute.xlu0 %3436
      %3438 = vrot.lane.b32.xlu0 %v3345, 40
      %v3439 = vpop.permute.xlu0 %3438
      %3440 = vrot.lane.b32.xlu0 %v3346, 40
      %v3441 = vpop.permute.xlu0 %3440
      %3442 = vrot.lane.b32.xlu0 %v3347, 40
      %v3443 = vpop.permute.xlu0 %3442
      %vm3476 = vcmask 392512
      %3477 = vst.msk [vmem:[#allocation5] sm:$0xff] %vm3476, %v3381
      %3478 = vst.msk [vmem:[#allocation5 + $0x8] sm:$0xff] %vm3476, %v3383
      %3479 = vst.msk [vmem:[#allocation5 + $0x10] sm:$0xff] %vm3476, %v3385
      %3480 = vst.msk [vmem:[#allocation5 + $0x18] sm:$0xff] %vm3476, %v3387
      %3481 = vst.msk [vmem:[#allocation5 + $0x20] sm:$0xff] %vm3476, %v3389
      %3482 = vst.msk [vmem:[#allocation5 + $0x28] sm:$0xff] %vm3476, %v3391
      %3483 = vst.msk [vmem:[#allocation5 + $0x30] sm:$0xff] %vm3476, %v3393
      %3484 = vst.msk [vmem:[#allocation5 + $0x38] sm:$0xff] %vm3476, %v3395
      %3485 = vst.msk [vmem:[#allocation5 + $0x40] sm:$0xff] %vm3476, %v3397
      %3486 = vst.msk [vmem:[#allocation5 + $0x48] sm:$0xff] %vm3476, %v3399
      %3487 = vst.msk [vmem:[#allocation5 + $0x50] sm:$0xff] %vm3476, %v3401
      %3488 = vst.msk [vmem:[#allocation5 + $0x58] sm:$0xff] %vm3476, %v3403
      %3489 = vst.msk [vmem:[#allocation5 + $0x60] sm:$0xff] %vm3476, %v3405
      %3490 = vst.msk [vmem:[#allocation5 + $0x68] sm:$0xff] %vm3476, %v3407
      %3491 = vst.msk [vmem:[#allocation5 + $0x70] sm:$0xff] %vm3476, %v3409
      %3492 = vst.msk [vmem:[#allocation5 + $0x78] sm:$0xff] %vm3476, %v3411
      %3493 = vst.msk [vmem:[#allocation5 + $0x80] sm:$0xff] %vm3476, %v3413
      %3494 = vst.msk [vmem:[#allocation5 + $0x88] sm:$0xff] %vm3476, %v3415
      %3495 = vst.msk [vmem:[#allocation5 + $0x90] sm:$0xff] %vm3476, %v3417
      %3496 = vst.msk [vmem:[#allocation5 + $0x98] sm:$0xff] %vm3476, %v3419
      %3497 = vst.msk [vmem:[#allocation5 + $0xa0] sm:$0xff] %vm3476, %v3421
      %3498 = vst.msk [vmem:[#allocation5 + $0xa8] sm:$0xff] %vm3476, %v3423
      %3499 = vst.msk [vmem:[#allocation5 + $0xb0] sm:$0xff] %vm3476, %v3425
      %3500 = vst.msk [vmem:[#allocation5 + $0xb8] sm:$0xff] %vm3476, %v3427
      %3501 = vst.msk [vmem:[#allocation5 + $0xc0] sm:$0xff] %vm3476, %v3429
      %3502 = vst.msk [vmem:[#allocation5 + $0xc8] sm:$0xff] %vm3476, %v3431
      %3503 = vst.msk [vmem:[#allocation5 + $0xd0] sm:$0xff] %vm3476, %v3433
      %3504 = vst.msk [vmem:[#allocation5 + $0xd8] sm:$0xff] %vm3476, %v3435
      %3505 = vst.msk [vmem:[#allocation5 + $0xe0] sm:$0xff] %vm3476, %v3437
      %3506 = vst.msk [vmem:[#allocation5 + $0xe8] sm:$0xff] %vm3476, %v3439
      %3507 = vst.msk [vmem:[#allocation5 + $0xf0] sm:$0xff] %vm3476, %v3441
      %3508 = vst.msk [vmem:[#allocation5 + $0xf8] sm:$0xff] %vm3476, %v3443
      %s3509 = scalar_lea.vmem [#allocation3], 48
      %v3510 = vld [vmem:[%s3509] sm:$0xff]
      %v3511 = vld [vmem:[%s3509 + $0x8] sm:$0xff]
      %v3512 = vld [vmem:[%s3509 + $0x18] sm:$0xff]
      %v3513 = vld [vmem:[%s3509 + $0x20] sm:$0xff]
      %v3514 = vld [vmem:[%s3509 + $0x30] sm:$0xff]
      %v3515 = vld [vmem:[%s3509 + $0x38] sm:$0xff]
      %v3516 = vld [vmem:[%s3509 + $0x48] sm:$0xff]
      %v3517 = vld [vmem:[%s3509 + $0x50] sm:$0xff]
      %v3518 = vld [vmem:[%s3509 + $0x60] sm:$0xff]
      %v3519 = vld [vmem:[%s3509 + $0x68] sm:$0xff]
      %v3520 = vld [vmem:[%s3509 + $0x78] sm:$0xff]
      %v3521 = vld [vmem:[%s3509 + $0x80] sm:$0xff]
      %v3522 = vld [vmem:[%s3509 + $0x90] sm:$0xff]
      %v3523 = vld [vmem:[%s3509 + $0x98] sm:$0xff]
      %v3524 = vld [vmem:[%s3509 + $0xa8] sm:$0xff]
      %v3525 = vld [vmem:[%s3509 + $0xb0] sm:$0xff]
      %v3526 = vld [vmem:[%s3509 + $0xc0] sm:$0xff]
      %v3527 = vld [vmem:[%s3509 + $0xc8] sm:$0xff]
      %v3528 = vld [vmem:[%s3509 + $0xd8] sm:$0xff]
      %v3529 = vld [vmem:[%s3509 + $0xe0] sm:$0xff]
      %v3530 = vld [vmem:[%s3509 + $0xf0] sm:$0xff]
      %v3531 = vld [vmem:[%s3509 + $0xf8] sm:$0xff]
      %v3532 = vld [vmem:[%s3509 + $0x108] sm:$0xff]
      %v3533 = vld [vmem:[%s3509 + $0x110] sm:$0xff]
      %v3534 = vld [vmem:[%s3509 + $0x120] sm:$0xff]
      %v3535 = vld [vmem:[%s3509 + $0x128] sm:$0xff]
      %v3536 = vld [vmem:[%s3509 + $0x138] sm:$0xff]
      %v3537 = vld [vmem:[%s3509 + $0x140] sm:$0xff]
      %v3538 = vld [vmem:[%s3509 + $0x150] sm:$0xff]
      %v3539 = vld [vmem:[%s3509 + $0x158] sm:$0xff]
      %v3540 = vld [vmem:[%s3509 + $0x168] sm:$0xff]
      %v3541 = vld [vmem:[%s3509 + $0x170] sm:$0xff]
      %3574 = vrot.lane.b32.xlu0 %v3510, 48
      %v3575 = vpop.permute.xlu0 %3574
      %3576 = vrot.lane.b32.xlu0 %v3511, 48
      %v3577 = vpop.permute.xlu0 %3576
      %3578 = vrot.lane.b32.xlu0 %v3512, 48
      %v3579 = vpop.permute.xlu0 %3578
      %3580 = vrot.lane.b32.xlu0 %v3513, 48
      %v3581 = vpop.permute.xlu0 %3580
      %3582 = vrot.lane.b32.xlu0 %v3514, 48
      %v3583 = vpop.permute.xlu0 %3582
      %3584 = vrot.lane.b32.xlu0 %v3515, 48
      %v3585 = vpop.permute.xlu0 %3584
      %3586 = vrot.lane.b32.xlu0 %v3516, 48
      %v3587 = vpop.permute.xlu0 %3586
      %3588 = vrot.lane.b32.xlu0 %v3517, 48
      %v3589 = vpop.permute.xlu0 %3588
      %3590 = vrot.lane.b32.xlu0 %v3518, 48
      %v3591 = vpop.permute.xlu0 %3590
      %3592 = vrot.lane.b32.xlu0 %v3519, 48
      %v3593 = vpop.permute.xlu0 %3592
      %3594 = vrot.lane.b32.xlu0 %v3520, 48
      %v3595 = vpop.permute.xlu0 %3594
      %3596 = vrot.lane.b32.xlu0 %v3521, 48
      %v3597 = vpop.permute.xlu0 %3596
      %3598 = vrot.lane.b32.xlu0 %v3522, 48
      %v3599 = vpop.permute.xlu0 %3598
      %3600 = vrot.lane.b32.xlu0 %v3523, 48
      %v3601 = vpop.permute.xlu0 %3600
      %3602 = vrot.lane.b32.xlu0 %v3524, 48
      %v3603 = vpop.permute.xlu0 %3602
      %3604 = vrot.lane.b32.xlu0 %v3525, 48
      %v3605 = vpop.permute.xlu0 %3604
      %3606 = vrot.lane.b32.xlu0 %v3526, 48
      %v3607 = vpop.permute.xlu0 %3606
      %3608 = vrot.lane.b32.xlu0 %v3527, 48
      %v3609 = vpop.permute.xlu0 %3608
      %3610 = vrot.lane.b32.xlu0 %v3528, 48
      %v3611 = vpop.permute.xlu0 %3610
      %3612 = vrot.lane.b32.xlu0 %v3529, 48
      %v3613 = vpop.permute.xlu0 %3612
      %3614 = vrot.lane.b32.xlu0 %v3530, 48
      %v3615 = vpop.permute.xlu0 %3614
      %3616 = vrot.lane.b32.xlu0 %v3531, 48
      %v3617 = vpop.permute.xlu0 %3616
      %3618 = vrot.lane.b32.xlu0 %v3532, 48
      %v3619 = vpop.permute.xlu0 %3618
      %3620 = vrot.lane.b32.xlu0 %v3533, 48
      %v3621 = vpop.permute.xlu0 %3620
      %3622 = vrot.lane.b32.xlu0 %v3534, 48
      %v3623 = vpop.permute.xlu0 %3622
      %3624 = vrot.lane.b32.xlu0 %v3535, 48
      %v3625 = vpop.permute.xlu0 %3624
      %3626 = vrot.lane.b32.xlu0 %v3536, 48
      %v3627 = vpop.permute.xlu0 %3626
      %3628 = vrot.lane.b32.xlu0 %v3537, 48
      %v3629 = vpop.permute.xlu0 %3628
      %3630 = vrot.lane.b32.xlu0 %v3538, 48
      %v3631 = vpop.permute.xlu0 %3630
      %3632 = vrot.lane.b32.xlu0 %v3539, 48
      %v3633 = vpop.permute.xlu0 %3632
      %3634 = vrot.lane.b32.xlu0 %v3540, 48
      %v3635 = vpop.permute.xlu0 %3634
      %3636 = vrot.lane.b32.xlu0 %v3541, 48
      %v3637 = vpop.permute.xlu0 %3636
      %vm3670 = vcmask 458112
      %3671 = vst.msk [vmem:[#allocation5] sm:$0xff] %vm3670, %v3575
      %3672 = vst.msk [vmem:[#allocation5 + $0x8] sm:$0xff] %vm3670, %v3577
      %3673 = vst.msk [vmem:[#allocation5 + $0x10] sm:$0xff] %vm3670, %v3579
      %3674 = vst.msk [vmem:[#allocation5 + $0x18] sm:$0xff] %vm3670, %v3581
      %3675 = vst.msk [vmem:[#allocation5 + $0x20] sm:$0xff] %vm3670, %v3583
      %3676 = vst.msk [vmem:[#allocation5 + $0x28] sm:$0xff] %vm3670, %v3585
      %3677 = vst.msk [vmem:[#allocation5 + $0x30] sm:$0xff] %vm3670, %v3587
      %3678 = vst.msk [vmem:[#allocation5 + $0x38] sm:$0xff] %vm3670, %v3589
      %3679 = vst.msk [vmem:[#allocation5 + $0x40] sm:$0xff] %vm3670, %v3591
      %3680 = vst.msk [vmem:[#allocation5 + $0x48] sm:$0xff] %vm3670, %v3593
      %3681 = vst.msk [vmem:[#allocation5 + $0x50] sm:$0xff] %vm3670, %v3595
      %3682 = vst.msk [vmem:[#allocation5 + $0x58] sm:$0xff] %vm3670, %v3597
      %3683 = vst.msk [vmem:[#allocation5 + $0x60] sm:$0xff] %vm3670, %v3599
      %3684 = vst.msk [vmem:[#allocation5 + $0x68] sm:$0xff] %vm3670, %v3601
      %3685 = vst.msk [vmem:[#allocation5 + $0x70] sm:$0xff] %vm3670, %v3603
      %3686 = vst.msk [vmem:[#allocation5 + $0x78] sm:$0xff] %vm3670, %v3605
      %3687 = vst.msk [vmem:[#allocation5 + $0x80] sm:$0xff] %vm3670, %v3607
      %3688 = vst.msk [vmem:[#allocation5 + $0x88] sm:$0xff] %vm3670, %v3609
      %3689 = vst.msk [vmem:[#allocation5 + $0x90] sm:$0xff] %vm3670, %v3611
      %3690 = vst.msk [vmem:[#allocation5 + $0x98] sm:$0xff] %vm3670, %v3613
      %3691 = vst.msk [vmem:[#allocation5 + $0xa0] sm:$0xff] %vm3670, %v3615
      %3692 = vst.msk [vmem:[#allocation5 + $0xa8] sm:$0xff] %vm3670, %v3617
      %3693 = vst.msk [vmem:[#allocation5 + $0xb0] sm:$0xff] %vm3670, %v3619
      %3694 = vst.msk [vmem:[#allocation5 + $0xb8] sm:$0xff] %vm3670, %v3621
      %3695 = vst.msk [vmem:[#allocation5 + $0xc0] sm:$0xff] %vm3670, %v3623
      %3696 = vst.msk [vmem:[#allocation5 + $0xc8] sm:$0xff] %vm3670, %v3625
      %3697 = vst.msk [vmem:[#allocation5 + $0xd0] sm:$0xff] %vm3670, %v3627
      %3698 = vst.msk [vmem:[#allocation5 + $0xd8] sm:$0xff] %vm3670, %v3629
      %3699 = vst.msk [vmem:[#allocation5 + $0xe0] sm:$0xff] %vm3670, %v3631
      %3700 = vst.msk [vmem:[#allocation5 + $0xe8] sm:$0xff] %vm3670, %v3633
      %3701 = vst.msk [vmem:[#allocation5 + $0xf0] sm:$0xff] %vm3670, %v3635
      %3702 = vst.msk [vmem:[#allocation5 + $0xf8] sm:$0xff] %vm3670, %v3637
      %v3703 = vld [vmem:[%s3509 + $0x1] sm:$0xff]
      %v3704 = vld [vmem:[%s3509 + $0x9] sm:$0xff]
      %v3705 = vld [vmem:[%s3509 + $0x19] sm:$0xff]
      %v3706 = vld [vmem:[%s3509 + $0x21] sm:$0xff]
      %v3707 = vld [vmem:[%s3509 + $0x31] sm:$0xff]
      %v3708 = vld [vmem:[%s3509 + $0x39] sm:$0xff]
      %v3709 = vld [vmem:[%s3509 + $0x49] sm:$0xff]
      %v3710 = vld [vmem:[%s3509 + $0x51] sm:$0xff]
      %v3711 = vld [vmem:[%s3509 + $0x61] sm:$0xff]
      %v3712 = vld [vmem:[%s3509 + $0x69] sm:$0xff]
      %v3713 = vld [vmem:[%s3509 + $0x79] sm:$0xff]
      %v3714 = vld [vmem:[%s3509 + $0x81] sm:$0xff]
      %v3715 = vld [vmem:[%s3509 + $0x91] sm:$0xff]
      %v3716 = vld [vmem:[%s3509 + $0x99] sm:$0xff]
      %v3717 = vld [vmem:[%s3509 + $0xa9] sm:$0xff]
      %v3718 = vld [vmem:[%s3509 + $0xb1] sm:$0xff]
      %v3719 = vld [vmem:[%s3509 + $0xc1] sm:$0xff]
      %v3720 = vld [vmem:[%s3509 + $0xc9] sm:$0xff]
      %v3721 = vld [vmem:[%s3509 + $0xd9] sm:$0xff]
      %v3722 = vld [vmem:[%s3509 + $0xe1] sm:$0xff]
      %v3723 = vld [vmem:[%s3509 + $0xf1] sm:$0xff]
      %v3724 = vld [vmem:[%s3509 + $0xf9] sm:$0xff]
      %v3725 = vld [vmem:[%s3509 + $0x109] sm:$0xff]
      %v3726 = vld [vmem:[%s3509 + $0x111] sm:$0xff]
      %v3727 = vld [vmem:[%s3509 + $0x121] sm:$0xff]
      %v3728 = vld [vmem:[%s3509 + $0x129] sm:$0xff]
      %v3729 = vld [vmem:[%s3509 + $0x139] sm:$0xff]
      %v3730 = vld [vmem:[%s3509 + $0x141] sm:$0xff]
      %v3731 = vld [vmem:[%s3509 + $0x151] sm:$0xff]
      %v3732 = vld [vmem:[%s3509 + $0x159] sm:$0xff]
      %v3733 = vld [vmem:[%s3509 + $0x169] sm:$0xff]
      %v3734 = vld [vmem:[%s3509 + $0x171] sm:$0xff]
      %3767 = vrot.lane.b32.xlu0 %v3703, 56
      %v3768 = vpop.permute.xlu0 %3767
      %3769 = vrot.lane.b32.xlu0 %v3704, 56
      %v3770 = vpop.permute.xlu0 %3769
      %3771 = vrot.lane.b32.xlu0 %v3705, 56
      %v3772 = vpop.permute.xlu0 %3771
      %3773 = vrot.lane.b32.xlu0 %v3706, 56
      %v3774 = vpop.permute.xlu0 %3773
      %3775 = vrot.lane.b32.xlu0 %v3707, 56
      %v3776 = vpop.permute.xlu0 %3775
      %3777 = vrot.lane.b32.xlu0 %v3708, 56
      %v3778 = vpop.permute.xlu0 %3777
      %3779 = vrot.lane.b32.xlu0 %v3709, 56
      %v3780 = vpop.permute.xlu0 %3779
      %3781 = vrot.lane.b32.xlu0 %v3710, 56
      %v3782 = vpop.permute.xlu0 %3781
      %3783 = vrot.lane.b32.xlu0 %v3711, 56
      %v3784 = vpop.permute.xlu0 %3783
      %3785 = vrot.lane.b32.xlu0 %v3712, 56
      %v3786 = vpop.permute.xlu0 %3785
      %3787 = vrot.lane.b32.xlu0 %v3713, 56
      %v3788 = vpop.permute.xlu0 %3787
      %3789 = vrot.lane.b32.xlu0 %v3714, 56
      %v3790 = vpop.permute.xlu0 %3789
      %3791 = vrot.lane.b32.xlu0 %v3715, 56
      %v3792 = vpop.permute.xlu0 %3791
      %3793 = vrot.lane.b32.xlu0 %v3716, 56
      %v3794 = vpop.permute.xlu0 %3793
      %3795 = vrot.lane.b32.xlu0 %v3717, 56
      %v3796 = vpop.permute.xlu0 %3795
      %3797 = vrot.lane.b32.xlu0 %v3718, 56
      %v3798 = vpop.permute.xlu0 %3797
      %3799 = vrot.lane.b32.xlu0 %v3719, 56
      %v3800 = vpop.permute.xlu0 %3799
      %3801 = vrot.lane.b32.xlu0 %v3720, 56
      %v3802 = vpop.permute.xlu0 %3801
      %3803 = vrot.lane.b32.xlu0 %v3721, 56
      %v3804 = vpop.permute.xlu0 %3803
      %3805 = vrot.lane.b32.xlu0 %v3722, 56
      %v3806 = vpop.permute.xlu0 %3805
      %3807 = vrot.lane.b32.xlu0 %v3723, 56
      %v3808 = vpop.permute.xlu0 %3807
      %3809 = vrot.lane.b32.xlu0 %v3724, 56
      %v3810 = vpop.permute.xlu0 %3809
      %3811 = vrot.lane.b32.xlu0 %v3725, 56
      %v3812 = vpop.permute.xlu0 %3811
      %3813 = vrot.lane.b32.xlu0 %v3726, 56
      %v3814 = vpop.permute.xlu0 %3813
      %3815 = vrot.lane.b32.xlu0 %v3727, 56
      %v3816 = vpop.permute.xlu0 %3815
      %3817 = vrot.lane.b32.xlu0 %v3728, 56
      %v3818 = vpop.permute.xlu0 %3817
      %3819 = vrot.lane.b32.xlu0 %v3729, 56
      %v3820 = vpop.permute.xlu0 %3819
      %3821 = vrot.lane.b32.xlu0 %v3730, 56
      %v3822 = vpop.permute.xlu0 %3821
      %3823 = vrot.lane.b32.xlu0 %v3731, 56
      %v3824 = vpop.permute.xlu0 %3823
      %3825 = vrot.lane.b32.xlu0 %v3732, 56
      %v3826 = vpop.permute.xlu0 %3825
      %3827 = vrot.lane.b32.xlu0 %v3733, 56
      %v3828 = vpop.permute.xlu0 %3827
      %3829 = vrot.lane.b32.xlu0 %v3734, 56
      %v3830 = vpop.permute.xlu0 %3829
      %vm3863 = vcmask 523712
      %3864 = vst.msk [vmem:[#allocation5] sm:$0xff] %vm3863, %v3768
      %3865 = vst.msk [vmem:[#allocation5 + $0x8] sm:$0xff] %vm3863, %v3770
      %3866 = vst.msk [vmem:[#allocation5 + $0x10] sm:$0xff] %vm3863, %v3772
      %3867 = vst.msk [vmem:[#allocation5 + $0x18] sm:$0xff] %vm3863, %v3774
      %3868 = vst.msk [vmem:[#allocation5 + $0x20] sm:$0xff] %vm3863, %v3776
      %3869 = vst.msk [vmem:[#allocation5 + $0x28] sm:$0xff] %vm3863, %v3778
      %3870 = vst.msk [vmem:[#allocation5 + $0x30] sm:$0xff] %vm3863, %v3780
      %3871 = vst.msk [vmem:[#allocation5 + $0x38] sm:$0xff] %vm3863, %v3782
      %3872 = vst.msk [vmem:[#allocation5 + $0x40] sm:$0xff] %vm3863, %v3784
      %3873 = vst.msk [vmem:[#allocation5 + $0x48] sm:$0xff] %vm3863, %v3786
      %3874 = vst.msk [vmem:[#allocation5 + $0x50] sm:$0xff] %vm3863, %v3788
      %3875 = vst.msk [vmem:[#allocation5 + $0x58] sm:$0xff] %vm3863, %v3790
      %3876 = vst.msk [vmem:[#allocation5 + $0x60] sm:$0xff] %vm3863, %v3792
      %3877 = vst.msk [vmem:[#allocation5 + $0x68] sm:$0xff] %vm3863, %v3794
      %3878 = vst.msk [vmem:[#allocation5 + $0x70] sm:$0xff] %vm3863, %v3796
      %3879 = vst.msk [vmem:[#allocation5 + $0x78] sm:$0xff] %vm3863, %v3798
      %3880 = vst.msk [vmem:[#allocation5 + $0x80] sm:$0xff] %vm3863, %v3800
      %3881 = vst.msk [vmem:[#allocation5 + $0x88] sm:$0xff] %vm3863, %v3802
      %3882 = vst.msk [vmem:[#allocation5 + $0x90] sm:$0xff] %vm3863, %v3804
      %3883 = vst.msk [vmem:[#allocation5 + $0x98] sm:$0xff] %vm3863, %v3806
      %3884 = vst.msk [vmem:[#allocation5 + $0xa0] sm:$0xff] %vm3863, %v3808
      %3885 = vst.msk [vmem:[#allocation5 + $0xa8] sm:$0xff] %vm3863, %v3810
      %3886 = vst.msk [vmem:[#allocation5 + $0xb0] sm:$0xff] %vm3863, %v3812
      %3887 = vst.msk [vmem:[#allocation5 + $0xb8] sm:$0xff] %vm3863, %v3814
      %3888 = vst.msk [vmem:[#allocation5 + $0xc0] sm:$0xff] %vm3863, %v3816
      %3889 = vst.msk [vmem:[#allocation5 + $0xc8] sm:$0xff] %vm3863, %v3818
      %3890 = vst.msk [vmem:[#allocation5 + $0xd0] sm:$0xff] %vm3863, %v3820
      %3891 = vst.msk [vmem:[#allocation5 + $0xd8] sm:$0xff] %vm3863, %v3822
      %3892 = vst.msk [vmem:[#allocation5 + $0xe0] sm:$0xff] %vm3863, %v3824
      %3893 = vst.msk [vmem:[#allocation5 + $0xe8] sm:$0xff] %vm3863, %v3826
      %3894 = vst.msk [vmem:[#allocation5 + $0xf0] sm:$0xff] %vm3863, %v3828
      %3895 = vst.msk [vmem:[#allocation5 + $0xf8] sm:$0xff] %vm3863, %v3830
      %v3896 = vld [vmem:[%s3509 + $0x2] sm:$0xff]
      %v3897 = vld [vmem:[%s3509 + $0xa] sm:$0xff]
      %v3898 = vld [vmem:[%s3509 + $0x1a] sm:$0xff]
      %v3899 = vld [vmem:[%s3509 + $0x22] sm:$0xff]
      %v3900 = vld [vmem:[%s3509 + $0x32] sm:$0xff]
      %v3901 = vld [vmem:[%s3509 + $0x3a] sm:$0xff]
      %v3902 = vld [vmem:[%s3509 + $0x4a] sm:$0xff]
      %v3903 = vld [vmem:[%s3509 + $0x52] sm:$0xff]
      %v3904 = vld [vmem:[%s3509 + $0x62] sm:$0xff]
      %v3905 = vld [vmem:[%s3509 + $0x6a] sm:$0xff]
      %v3906 = vld [vmem:[%s3509 + $0x7a] sm:$0xff]
      %v3907 = vld [vmem:[%s3509 + $0x82] sm:$0xff]
      %v3908 = vld [vmem:[%s3509 + $0x92] sm:$0xff]
      %v3909 = vld [vmem:[%s3509 + $0x9a] sm:$0xff]
      %v3910 = vld [vmem:[%s3509 + $0xaa] sm:$0xff]
      %v3911 = vld [vmem:[%s3509 + $0xb2] sm:$0xff]
      %v3912 = vld [vmem:[%s3509 + $0xc2] sm:$0xff]
      %v3913 = vld [vmem:[%s3509 + $0xca] sm:$0xff]
      %v3914 = vld [vmem:[%s3509 + $0xda] sm:$0xff]
      %v3915 = vld [vmem:[%s3509 + $0xe2] sm:$0xff]
      %v3916 = vld [vmem:[%s3509 + $0xf2] sm:$0xff]
      %v3917 = vld [vmem:[%s3509 + $0xfa] sm:$0xff]
      %v3918 = vld [vmem:[%s3509 + $0x10a] sm:$0xff]
      %v3919 = vld [vmem:[%s3509 + $0x112] sm:$0xff]
      %v3920 = vld [vmem:[%s3509 + $0x122] sm:$0xff]
      %v3921 = vld [vmem:[%s3509 + $0x12a] sm:$0xff]
      %v3922 = vld [vmem:[%s3509 + $0x13a] sm:$0xff]
      %v3923 = vld [vmem:[%s3509 + $0x142] sm:$0xff]
      %v3924 = vld [vmem:[%s3509 + $0x152] sm:$0xff]
      %v3925 = vld [vmem:[%s3509 + $0x15a] sm:$0xff]
      %v3926 = vld [vmem:[%s3509 + $0x16a] sm:$0xff]
      %v3927 = vld [vmem:[%s3509 + $0x172] sm:$0xff]
      %3960 = vrot.lane.b32.xlu0 %v3896, 64
      %v3961 = vpop.permute.xlu0 %3960
      %3962 = vrot.lane.b32.xlu0 %v3897, 64
      %v3963 = vpop.permute.xlu0 %3962
      %3964 = vrot.lane.b32.xlu0 %v3898, 64
      %v3965 = vpop.permute.xlu0 %3964
      %3966 = vrot.lane.b32.xlu0 %v3899, 64
      %v3967 = vpop.permute.xlu0 %3966
      %3968 = vrot.lane.b32.xlu0 %v3900, 64
      %v3969 = vpop.permute.xlu0 %3968
      %3970 = vrot.lane.b32.xlu0 %v3901, 64
      %v3971 = vpop.permute.xlu0 %3970
      %3972 = vrot.lane.b32.xlu0 %v3902, 64
      %v3973 = vpop.permute.xlu0 %3972
      %3974 = vrot.lane.b32.xlu0 %v3903, 64
      %v3975 = vpop.permute.xlu0 %3974
      %3976 = vrot.lane.b32.xlu0 %v3904, 64
      %v3977 = vpop.permute.xlu0 %3976
      %3978 = vrot.lane.b32.xlu0 %v3905, 64
      %v3979 = vpop.permute.xlu0 %3978
      %3980 = vrot.lane.b32.xlu0 %v3906, 64
      %v3981 = vpop.permute.xlu0 %3980
      %3982 = vrot.lane.b32.xlu0 %v3907, 64
      %v3983 = vpop.permute.xlu0 %3982
      %3984 = vrot.lane.b32.xlu0 %v3908, 64
      %v3985 = vpop.permute.xlu0 %3984
      %3986 = vrot.lane.b32.xlu0 %v3909, 64
      %v3987 = vpop.permute.xlu0 %3986
      %3988 = vrot.lane.b32.xlu0 %v3910, 64
      %v3989 = vpop.permute.xlu0 %3988
      %3990 = vrot.lane.b32.xlu0 %v3911, 64
      %v3991 = vpop.permute.xlu0 %3990
      %3992 = vrot.lane.b32.xlu0 %v3912, 64
      %v3993 = vpop.permute.xlu0 %3992
      %3994 = vrot.lane.b32.xlu0 %v3913, 64
      %v3995 = vpop.permute.xlu0 %3994
      %3996 = vrot.lane.b32.xlu0 %v3914, 64
      %v3997 = vpop.permute.xlu0 %3996
      %3998 = vrot.lane.b32.xlu0 %v3915, 64
      %v3999 = vpop.permute.xlu0 %3998
      %4000 = vrot.lane.b32.xlu0 %v3916, 64
      %v4001 = vpop.permute.xlu0 %4000
      %4002 = vrot.lane.b32.xlu0 %v3917, 64
      %v4003 = vpop.permute.xlu0 %4002
      %4004 = vrot.lane.b32.xlu0 %v3918, 64
      %v4005 = vpop.permute.xlu0 %4004
      %4006 = vrot.lane.b32.xlu0 %v3919, 64
      %v4007 = vpop.permute.xlu0 %4006
      %4008 = vrot.lane.b32.xlu0 %v3920, 64
      %v4009 = vpop.permute.xlu0 %4008
      %4010 = vrot.lane.b32.xlu0 %v3921, 64
      %v4011 = vpop.permute.xlu0 %4010
      %4012 = vrot.lane.b32.xlu0 %v3922, 64
      %v4013 = vpop.permute.xlu0 %4012
      %4014 = vrot.lane.b32.xlu0 %v3923, 64
      %v4015 = vpop.permute.xlu0 %4014
      %4016 = vrot.lane.b32.xlu0 %v3924, 64
      %v4017 = vpop.permute.xlu0 %4016
      %4018 = vrot.lane.b32.xlu0 %v3925, 64
      %v4019 = vpop.permute.xlu0 %4018
      %4020 = vrot.lane.b32.xlu0 %v3926, 64
      %v4021 = vpop.permute.xlu0 %4020
      %4022 = vrot.lane.b32.xlu0 %v3927, 64
      %v4023 = vpop.permute.xlu0 %4022
      %vm4056 = vcmask 589312
      %4057 = vst.msk [vmem:[#allocation5] sm:$0xff] %vm4056, %v3961
      %4058 = vst.msk [vmem:[#allocation5 + $0x8] sm:$0xff] %vm4056, %v3963
      %4059 = vst.msk [vmem:[#allocation5 + $0x10] sm:$0xff] %vm4056, %v3965
      %4060 = vst.msk [vmem:[#allocation5 + $0x18] sm:$0xff] %vm4056, %v3967
      %4061 = vst.msk [vmem:[#allocation5 + $0x20] sm:$0xff] %vm4056, %v3969
      %4062 = vst.msk [vmem:[#allocation5 + $0x28] sm:$0xff] %vm4056, %v3971
      %4063 = vst.msk [vmem:[#allocation5 + $0x30] sm:$0xff] %vm4056, %v3973
      %4064 = vst.msk [vmem:[#allocation5 + $0x38] sm:$0xff] %vm4056, %v3975
      %4065 = vst.msk [vmem:[#allocation5 + $0x40] sm:$0xff] %vm4056, %v3977
      %4066 = vst.msk [vmem:[#allocation5 + $0x48] sm:$0xff] %vm4056, %v3979
      %4067 = vst.msk [vmem:[#allocation5 + $0x50] sm:$0xff] %vm4056, %v3981
      %4068 = vst.msk [vmem:[#allocation5 + $0x58] sm:$0xff] %vm4056, %v3983
      %4069 = vst.msk [vmem:[#allocation5 + $0x60] sm:$0xff] %vm4056, %v3985
      %4070 = vst.msk [vmem:[#allocation5 + $0x68] sm:$0xff] %vm4056, %v3987
      %4071 = vst.msk [vmem:[#allocation5 + $0x70] sm:$0xff] %vm4056, %v3989
      %4072 = vst.msk [vmem:[#allocation5 + $0x78] sm:$0xff] %vm4056, %v3991
      %4073 = vst.msk [vmem:[#allocation5 + $0x80] sm:$0xff] %vm4056, %v3993
      %4074 = vst.msk [vmem:[#allocation5 + $0x88] sm:$0xff] %vm4056, %v3995
      %4075 = vst.msk [vmem:[#allocation5 + $0x90] sm:$0xff] %vm4056, %v3997
      %4076 = vst.msk [vmem:[#allocation5 + $0x98] sm:$0xff] %vm4056, %v3999
      %4077 = vst.msk [vmem:[#allocation5 + $0xa0] sm:$0xff] %vm4056, %v4001
      %4078 = vst.msk [vmem:[#allocation5 + $0xa8] sm:$0xff] %vm4056, %v4003
      %4079 = vst.msk [vmem:[#allocation5 + $0xb0] sm:$0xff] %vm4056, %v4005
      %4080 = vst.msk [vmem:[#allocation5 + $0xb8] sm:$0xff] %vm4056, %v4007
      %4081 = vst.msk [vmem:[#allocation5 + $0xc0] sm:$0xff] %vm4056, %v4009
      %4082 = vst.msk [vmem:[#allocation5 + $0xc8] sm:$0xff] %vm4056, %v4011
      %4083 = vst.msk [vmem:[#allocation5 + $0xd0] sm:$0xff] %vm4056, %v4013
      %4084 = vst.msk [vmem:[#allocation5 + $0xd8] sm:$0xff] %vm4056, %v4015
      %4085 = vst.msk [vmem:[#allocation5 + $0xe0] sm:$0xff] %vm4056, %v4017
      %4086 = vst.msk [vmem:[#allocation5 + $0xe8] sm:$0xff] %vm4056, %v4019
      %4087 = vst.msk [vmem:[#allocation5 + $0xf0] sm:$0xff] %vm4056, %v4021
      %4088 = vst.msk [vmem:[#allocation5 + $0xf8] sm:$0xff] %vm4056, %v4023
      %v4089 = vld [vmem:[#allocation5] sm:$0xff]
      %v4090 = vld [vmem:[#allocation5 + $0x8] sm:$0xff]
      %v4091 = vld [vmem:[#allocation5 + $0x10] sm:$0xff]
      %v4092 = vld [vmem:[#allocation5 + $0x18] sm:$0xff]
      %v4093 = vld [vmem:[#allocation5 + $0x20] sm:$0xff]
      %v4094 = vld [vmem:[#allocation5 + $0x28] sm:$0xff]
      %v4095 = vld [vmem:[#allocation5 + $0x30] sm:$0xff]
      %v4096 = vld [vmem:[#allocation5 + $0x38] sm:$0xff]
      %v4097 = vld [vmem:[#allocation5 + $0x40] sm:$0xff]
      %v4098 = vld [vmem:[#allocation5 + $0x48] sm:$0xff]
      %v4099 = vld [vmem:[#allocation5 + $0x50] sm:$0xff]
      %v4100 = vld [vmem:[#allocation5 + $0x58] sm:$0xff]
      %v4101 = vld [vmem:[#allocation5 + $0x60] sm:$0xff]
      %v4102 = vld [vmem:[#allocation5 + $0x68] sm:$0xff]
      %v4103 = vld [vmem:[#allocation5 + $0x70] sm:$0xff]
      %v4104 = vld [vmem:[#allocation5 + $0x78] sm:$0xff]
      %v4105 = vld [vmem:[#allocation5 + $0x80] sm:$0xff]
      %v4106 = vld [vmem:[#allocation5 + $0x88] sm:$0xff]
      %v4107 = vld [vmem:[#allocation5 + $0x90] sm:$0xff]
      %v4108 = vld [vmem:[#allocation5 + $0x98] sm:$0xff]
      %v4109 = vld [vmem:[#allocation5 + $0xa0] sm:$0xff]
      %v4110 = vld [vmem:[#allocation5 + $0xa8] sm:$0xff]
      %v4111 = vld [vmem:[#allocation5 + $0xb0] sm:$0xff]
      %v4112 = vld [vmem:[#allocation5 + $0xb8] sm:$0xff]
      %v4113 = vld [vmem:[#allocation5 + $0xc0] sm:$0xff]
      %v4114 = vld [vmem:[#allocation5 + $0xc8] sm:$0xff]
      %v4115 = vld [vmem:[#allocation5 + $0xd0] sm:$0xff]
      %v4116 = vld [vmem:[#allocation5 + $0xd8] sm:$0xff]
      %v4117 = vld [vmem:[#allocation5 + $0xe0] sm:$0xff]
      %v4118 = vld [vmem:[#allocation5 + $0xe8] sm:$0xff]
      %v4119 = vld [vmem:[#allocation5 + $0xf0] sm:$0xff]
      %v4120 = vld [vmem:[#allocation5 + $0xf8] sm:$0xff]
      %v4121 = vld [vmem:[%s3] sm:$0xff]
      %v4122 = vld [vmem:[%s3 + $0x8] sm:$0xff]
      %v4123 = vld [vmem:[%s3 + $0x10] sm:$0xff]
      %v4124 = vld [vmem:[%s3 + $0x18] sm:$0xff]
      %v4125 = vld [vmem:[%s3 + $0x20] sm:$0xff]
      %v4126 = vld [vmem:[%s3 + $0x28] sm:$0xff]
      %v4127 = vld [vmem:[%s3 + $0x30] sm:$0xff]
      %v4128 = vld [vmem:[%s3 + $0x38] sm:$0xff]
      %v4129 = vld [vmem:[%s3 + $0x40] sm:$0xff]
      %v4130 = vld [vmem:[%s4] sm:$0x1]
      %v4132 = vlaneseq
      %v4133 = vshrl.u32 %v4132, 7
      %v4134 = vsub.s32 0, %v4133
      %v4135 = vrot.slane %v4130, %v4134
      %vm4137 = vcmask 588800
      %v4139 = vsel %vm4137, %v4089, 0
      %v4142 = vsel %vm4137, %v4090, 0
      %v4145 = vsel %vm4137, %v4091, 0
      %v4148 = vsel %vm4137, %v4092, 0
      %v4151 = vsel %vm4137, %v4093, 0
      %v4154 = vsel %vm4137, %v4094, 0
      %v4157 = vsel %vm4137, %v4095, 0
      %v4160 = vsel %vm4137, %v4096, 0
      %v4163 = vsel %vm4137, %v4097, 0
      %v4166 = vsel %vm4137, %v4098, 0
      %v4169 = vsel %vm4137, %v4099, 0
      %v4172 = vsel %vm4137, %v4100, 0
      %v4175 = vsel %vm4137, %v4101, 0
      %v4178 = vsel %vm4137, %v4102, 0
      %v4181 = vsel %vm4137, %v4103, 0
      %v4184 = vsel %vm4137, %v4104, 0
      %v4187 = vsel %vm4137, %v4105, 0
      %v4190 = vsel %vm4137, %v4106, 0
      %v4193 = vsel %vm4137, %v4107, 0
      %v4196 = vsel %vm4137, %v4108, 0
      %v4199 = vsel %vm4137, %v4109, 0
      %v4202 = vsel %vm4137, %v4110, 0
      %v4205 = vsel %vm4137, %v4111, 0
      %v4208 = vsel %vm4137, %v4112, 0
      %v4211 = vsel %vm4137, %v4113, 0
      %v4214 = vsel %vm4137, %v4114, 0
      %v4217 = vsel %vm4137, %v4115, 0
      %v4220 = vsel %vm4137, %v4116, 0
      %v4223 = vsel %vm4137, %v4117, 0
      %v4226 = vsel %vm4137, %v4118, 0
      %v4229 = vsel %vm4137, %v4119, 0
      %v4232 = vsel %vm4137, %v4120, 0
      %4234 = vmatprep.subr.mxu0 0.0
      %4235 = vmatpush1.msra.mxu0 %v4121
      %4236 = vmatprep.subr.mxu0 0.0
      %4237 = vmatpush1.msra.mxu0 %v4122
      %4238 = vmatprep.subr.mxu0 0.0
      %4239 = vmatpush1.msra.mxu0 %v4123
      %4240 = vmatprep.subr.mxu0 0.0
      %4241 = vmatpush1.msra.mxu0 %v4124
      %4242 = vmatprep.subr.mxu0 0.0
      %4243 = vmatpush1.msra.mxu0 %v4125
      %4244 = vmatprep.subr.mxu0 0.0
      %4245 = vmatpush1.msra.mxu0 %v4126
      %4246 = vmatprep.subr.mxu0 0.0
      %4247 = vmatpush1.msra.mxu0 %v4127
      %4248 = vmatprep.subr.mxu0 0.0
      %4249 = vmatpush1.msra.mxu0 %v4128
      %4250 = vmatprep.subr.mxu0 0.0
      %4251 = vmatpush1.msra.mxu0 %v4129
      %4252 = vmatprep.subr.mxu0 0.0
      %4253 = vmatpush1.msra.mxu0 0.0
      %4254 = vmatprep.subr.mxu0 0.0
      %4255 = vmatpush1.msra.mxu0 0.0
      %4256 = vmatprep.subr.mxu0 0.0
      %4257 = vmatpush1.msra.mxu0 0.0
      %4258 = vmatprep.subr.mxu0 0.0
      %4259 = vmatpush1.msra.mxu0 0.0
      %4260 = vmatprep.subr.mxu0 0.0
      %4261 = vmatpush1.msra.mxu0 0.0
      %4262 = vmatprep.subr.mxu0 0.0
      %4263 = vmatpush1.msra.mxu0 0.0
      %4264 = vmatprep.subr.mxu0 0.0
      %4265 = vmatpush1.msra.mxu0 0.0
      %4266 = vmatprep.subr.mxu0 0.0
      %4267 = vmatpush1.msra.mxu0 0.0
      %4268 = vmatprep.subr.mxu0 0.0
      %4269 = vmatpush1.msra.mxu0 0.0
      %4270 = vmatprep.subr.mxu0 0.0
      %4271 = vmatpush1.msra.mxu0 0.0
      %4272 = vmatprep.subr.mxu0 0.0
      %4273 = vmatpush1.msra.mxu0 0.0
      %4274 = vmatprep.subr.mxu0 0.0
      %4275 = vmatpush1.msra.mxu0 0.0
      %4276 = vmatprep.subr.mxu0 0.0
      %4277 = vmatpush1.msra.mxu0 0.0
      %4278 = vmatprep.subr.mxu0 0.0
      %4279 = vmatpush1.msra.mxu0 0.0
      %4280 = vmatprep.subr.mxu0 0.0
      %4281 = vmatpush1.msra.mxu0 0.0
      %4282 = vmatprep.subr.mxu0 0.0
      %4283 = vmatpush1.msra.mxu0 0.0
      %4284 = vmatprep.subr.mxu0 0.0
      %4285 = vmatpush1.msra.mxu0 0.0
      %4286 = vmatprep.subr.mxu0 0.0
      %4287 = vmatpush1.msra.mxu0 0.0
      %4288 = vmatprep.subr.mxu0 0.0
      %4289 = vmatpush1.msra.mxu0 0.0
      %4290 = vmatprep.subr.mxu0 0.0
      %4291 = vmatpush1.msra.mxu0 0.0
      %4292 = vmatprep.subr.mxu0 0.0
      %4293 = vmatpush1.msra.mxu0 0.0
      %4294 = vmatprep.subr.mxu0 0.0
      %4295 = vmatpush1.msra.mxu0 0.0
      %4296 = vmatprep.subr.mxu0 0.0
      %4297 = vmatpush1.msra.mxu0 0.0
      %4298 = vmatprep.mubr.f32.mxu0 0.0
      %4299 = vmatmul.mubr.f32.gmra.mrb[0].mxu0 %v4139
      %v4300 = vpop.f32.mrb[0].mxu0
      %v4301 = vadd.f32 %v4135, %v4300
      %v4302 = vpop.f32.mrb[0].mxu0
      %4303 = vmatprep.mubr.f32.mxu0 0.0
      %4304 = vmatmul.mubr.f32.gmra.mrb[0].mxu0 %v4142
      %v4305 = vpop.f32.mrb[0].mxu0
      %v4306 = vadd.f32 %v4135, %v4305
      %v4307 = vpop.f32.mrb[0].mxu0
      %4308 = vmatprep.mubr.f32.mxu0 0.0
      %4309 = vmatmul.mubr.f32.gmra.mrb[0].mxu0 %v4145
      %v4310 = vpop.f32.mrb[0].mxu0
      %v4311 = vadd.f32 %v4135, %v4310
      %v4312 = vpop.f32.mrb[0].mxu0
      %4313 = vmatprep.mubr.f32.mxu0 0.0
      %4314 = vmatmul.mubr.f32.gmra.mrb[0].mxu0 %v4148
      %v4315 = vpop.f32.mrb[0].mxu0
      %v4316 = vadd.f32 %v4135, %v4315
      %v4317 = vpop.f32.mrb[0].mxu0
      %4318 = vmatprep.mubr.f32.mxu0 0.0
      %4319 = vmatmul.mubr.f32.gmra.mrb[0].mxu0 %v4151
      %v4320 = vpop.f32.mrb[0].mxu0
      %v4321 = vadd.f32 %v4135, %v4320
      %v4322 = vpop.f32.mrb[0].mxu0
      %4323 = vmatprep.mubr.f32.mxu0 0.0
      %4324 = vmatmul.mubr.f32.gmra.mrb[0].mxu0 %v4154
      %v4325 = vpop.f32.mrb[0].mxu0
      %v4326 = vadd.f32 %v4135, %v4325
      %v4327 = vpop.f32.mrb[0].mxu0
      %4328 = vmatprep.mubr.f32.mxu0 0.0
      %4329 = vmatmul.mubr.f32.gmra.mrb[0].mxu0 %v4157
      %v4330 = vpop.f32.mrb[0].mxu0
      %v4331 = vadd.f32 %v4135, %v4330
      %v4332 = vpop.f32.mrb[0].mxu0
      %4333 = vmatprep.mubr.f32.mxu0 0.0
      %4334 = vmatmul.mubr.f32.gmra.mrb[0].mxu0 %v4160
      %v4335 = vpop.f32.mrb[0].mxu0
      %v4336 = vadd.f32 %v4135, %v4335
      %v4337 = vpop.f32.mrb[0].mxu0
      %4338 = vmatprep.mubr.f32.mxu0 0.0
      %4339 = vmatmul.mubr.f32.gmra.mrb[0].mxu0 %v4163
      %v4340 = vpop.f32.mrb[0].mxu0
      %v4341 = vadd.f32 %v4135, %v4340
      %v4342 = vpop.f32.mrb[0].mxu0
      %4343 = vmatprep.mubr.f32.mxu0 0.0
      %4344 = vmatmul.mubr.f32.gmra.mrb[0].mxu0 %v4166
      %v4345 = vpop.f32.mrb[0].mxu0
      %v4346 = vadd.f32 %v4135, %v4345
      %v4347 = vpop.f32.mrb[0].mxu0
      %4348 = vmatprep.mubr.f32.mxu0 0.0
      %4349 = vmatmul.mubr.f32.gmra.mrb[0].mxu0 %v4169
      %v4350 = vpop.f32.mrb[0].mxu0
      %v4351 = vadd.f32 %v4135, %v4350
      %v4352 = vpop.f32.mrb[0].mxu0
      %4353 = vmatprep.mubr.f32.mxu0 0.0
      %4354 = vmatmul.mubr.f32.gmra.mrb[0].mxu0 %v4172
      %v4355 = vpop.f32.mrb[0].mxu0
      %v4356 = vadd.f32 %v4135, %v4355
      %v4357 = vpop.f32.mrb[0].mxu0
      %4358 = vmatprep.mubr.f32.mxu0 0.0
      %4359 = vmatmul.mubr.f32.gmra.mrb[0].mxu0 %v4175
      %v4360 = vpop.f32.mrb[0].mxu0
      %v4361 = vadd.f32 %v4135, %v4360
      %v4362 = vpop.f32.mrb[0].mxu0
      %4363 = vmatprep.mubr.f32.mxu0 0.0
      %4364 = vmatmul.mubr.f32.gmra.mrb[0].mxu0 %v4178
      %v4365 = vpop.f32.mrb[0].mxu0
      %v4366 = vadd.f32 %v4135, %v4365
      %v4367 = vpop.f32.mrb[0].mxu0
      %4368 = vmatprep.mubr.f32.mxu0 0.0
      %4369 = vmatmul.mubr.f32.gmra.mrb[0].mxu0 %v4181
      %v4370 = vpop.f32.mrb[0].mxu0
      %v4371 = vadd.f32 %v4135, %v4370
      %v4372 = vpop.f32.mrb[0].mxu0
      %4373 = vmatprep.mubr.f32.mxu0 0.0
      %4374 = vmatmul.mubr.f32.gmra.mrb[0].mxu0 %v4184
      %v4375 = vpop.f32.mrb[0].mxu0
      %v4376 = vadd.f32 %v4135, %v4375
      %v4377 = vpop.f32.mrb[0].mxu0
      %4378 = vmatprep.mubr.f32.mxu0 0.0
      %4379 = vmatmul.mubr.f32.gmra.mrb[0].mxu0 %v4187
      %v4380 = vpop.f32.mrb[0].mxu0
      %v4381 = vadd.f32 %v4135, %v4380
      %v4382 = vpop.f32.mrb[0].mxu0
      %4383 = vmatprep.mubr.f32.mxu0 0.0
      %4384 = vmatmul.mubr.f32.gmra.mrb[0].mxu0 %v4190
      %v4385 = vpop.f32.mrb[0].mxu0
      %v4386 = vadd.f32 %v4135, %v4385
      %v4387 = vpop.f32.mrb[0].mxu0
      %4388 = vmatprep.mubr.f32.mxu0 0.0
      %4389 = vmatmul.mubr.f32.gmra.mrb[0].mxu0 %v4193
      %v4390 = vpop.f32.mrb[0].mxu0
      %v4391 = vadd.f32 %v4135, %v4390
      %v4392 = vpop.f32.mrb[0].mxu0
      %4393 = vmatprep.mubr.f32.mxu0 0.0
      %4394 = vmatmul.mubr.f32.gmra.mrb[0].mxu0 %v4196
      %v4395 = vpop.f32.mrb[0].mxu0
      %v4396 = vadd.f32 %v4135, %v4395
      %v4397 = vpop.f32.mrb[0].mxu0
      %4398 = vmatprep.mubr.f32.mxu0 0.0
      %4399 = vmatmul.mubr.f32.gmra.mrb[0].mxu0 %v4199
      %v4400 = vpop.f32.mrb[0].mxu0
      %v4401 = vadd.f32 %v4135, %v4400
      %v4402 = vpop.f32.mrb[0].mxu0
      %4403 = vmatprep.mubr.f32.mxu0 0.0
      %4404 = vmatmul.mubr.f32.gmra.mrb[0].mxu0 %v4202
      %v4405 = vpop.f32.mrb[0].mxu0
      %v4406 = vadd.f32 %v4135, %v4405
      %v4407 = vpop.f32.mrb[0].mxu0
      %4408 = vmatprep.mubr.f32.mxu0 0.0
      %4409 = vmatmul.mubr.f32.gmra.mrb[0].mxu0 %v4205
      %v4410 = vpop.f32.mrb[0].mxu0
      %v4411 = vadd.f32 %v4135, %v4410
      %v4412 = vpop.f32.mrb[0].mxu0
      %4413 = vmatprep.mubr.f32.mxu0 0.0
      %4414 = vmatmul.mubr.f32.gmra.mrb[0].mxu0 %v4208
      %v4415 = vpop.f32.mrb[0].mxu0
      %v4416 = vadd.f32 %v4135, %v4415
      %v4417 = vpop.f32.mrb[0].mxu0
      %4418 = vmatprep.mubr.f32.mxu0 0.0
      %4419 = vmatmul.mubr.f32.gmra.mrb[0].mxu0 %v4211
      %v4420 = vpop.f32.mrb[0].mxu0
      %v4421 = vadd.f32 %v4135, %v4420
      %v4422 = vpop.f32.mrb[0].mxu0
      %4423 = vmatprep.mubr.f32.mxu0 0.0
      %4424 = vmatmul.mubr.f32.gmra.mrb[0].mxu0 %v4214
      %v4425 = vpop.f32.mrb[0].mxu0
      %v4426 = vadd.f32 %v4135, %v4425
      %v4427 = vpop.f32.mrb[0].mxu0
      %4428 = vmatprep.mubr.f32.mxu0 0.0
      %4429 = vmatmul.mubr.f32.gmra.mrb[0].mxu0 %v4217
      %v4430 = vpop.f32.mrb[0].mxu0
      %v4431 = vadd.f32 %v4135, %v4430
      %v4432 = vpop.f32.mrb[0].mxu0
      %4433 = vmatprep.mubr.f32.mxu0 0.0
      %4434 = vmatmul.mubr.f32.gmra.mrb[0].mxu0 %v4220
      %v4435 = vpop.f32.mrb[0].mxu0
      %v4436 = vadd.f32 %v4135, %v4435
      %v4437 = vpop.f32.mrb[0].mxu0
      %4438 = vmatprep.mubr.f32.mxu0 0.0
      %4439 = vmatmul.mubr.f32.gmra.mrb[0].mxu0 %v4223
      %v4440 = vpop.f32.mrb[0].mxu0
      %v4441 = vadd.f32 %v4135, %v4440
      %v4442 = vpop.f32.mrb[0].mxu0
      %4443 = vmatprep.mubr.f32.mxu0 0.0
      %4444 = vmatmul.mubr.f32.gmra.mrb[0].mxu0 %v4226
      %v4445 = vpop.f32.mrb[0].mxu0
      %v4446 = vadd.f32 %v4135, %v4445
      %v4447 = vpop.f32.mrb[0].mxu0
      %4448 = vmatprep.mubr.f32.mxu0 0.0
      %4449 = vmatmul.mubr.f32.gmra.mrb[0].mxu0 %v4229
      %v4450 = vpop.f32.mrb[0].mxu0
      %v4451 = vadd.f32 %v4135, %v4450
      %v4452 = vpop.f32.mrb[0].mxu0
      %4453 = vmatprep.mubr.f32.mxu0 0.0
      %4454 = vmatmul.mubr.f32.gmra.mrb[0].mxu0 %v4232
      %v4455 = vpop.f32.mrb[0].mxu0
      %v4456 = vadd.f32 %v4135, %v4455
      %v4457 = vpop.f32.mrb[0].mxu0
      %4458 = vdwg.mxu0
      %v4459 = vld [vmem:[%s5] sm:$0xf]
      %v4460 = vld [vmem:[%s6] sm:$0x1]
      %v4462 = vlaneseq
      %v4463 = vshrl.u32 %v4462, 7
      %v4464 = vsub.s32 0, %v4463
      %v4465 = vrot.slane %v4460, %v4464
      %v4468 = vsel %vm311, %v279, 0
      %v4471 = vsel %vm311, %v280, 0
      %v4474 = vsel %vm311, %v281, 0
      %v4477 = vsel %vm311, %v282, 0
      %v4480 = vsel %vm311, %v283, 0
      %v4483 = vsel %vm311, %v284, 0
      %v4486 = vsel %vm311, %v285, 0
      %v4489 = vsel %vm311, %v286, 0
      %v4492 = vsel %vm311, %v287, 0
      %v4495 = vsel %vm311, %v288, 0
      %v4498 = vsel %vm311, %v289, 0
      %v4501 = vsel %vm311, %v290, 0
      %v4504 = vsel %vm311, %v291, 0
      %v4507 = vsel %vm311, %v292, 0
      %v4510 = vsel %vm311, %v293, 0
      %v4513 = vsel %vm311, %v294, 0
      %v4516 = vsel %vm311, %v295, 0
      %v4519 = vsel %vm311, %v296, 0
      %v4522 = vsel %vm311, %v297, 0
      %v4525 = vsel %vm311, %v298, 0
      %v4528 = vsel %vm311, %v299, 0
      %v4531 = vsel %vm311, %v300, 0
      %v4534 = vsel %vm311, %v301, 0
      %v4537 = vsel %vm311, %v302, 0
      %v4540 = vsel %vm311, %v303, 0
      %v4543 = vsel %vm311, %v304, 0
      %v4546 = vsel %vm311, %v305, 0
      %v4549 = vsel %vm311, %v306, 0
      %v4552 = vsel %vm311, %v307, 0
      %v4555 = vsel %vm311, %v308, 0
      %v4558 = vsel %vm311, %v309, 0
      %v4561 = vsel %vm311, %v310, 0
      %v4564 = vsel %vm2140, %v4459, 0
      %4566 = vmatprep.subr.mxu0 0.0
      %4567 = vmatpush1.msra.mxu0 %v4564
      %4568 = vmatprep.subr.mxu0 0.0
      %4569 = vmatpush1.msra.mxu0 0.0
      %4570 = vmatprep.subr.mxu0 0.0
      %4571 = vmatpush1.msra.mxu0 0.0
      %4572 = vmatprep.subr.mxu0 0.0
      %4573 = vmatpush1.msra.mxu0 0.0
      %4574 = vmatprep.subr.mxu0 0.0
      %4575 = vmatpush1.msra.mxu0 0.0
      %4576 = vmatprep.subr.mxu0 0.0
      %4577 = vmatpush1.msra.mxu0 0.0
      %4578 = vmatprep.subr.mxu0 0.0
      %4579 = vmatpush1.msra.mxu0 0.0
      %4580 = vmatprep.subr.mxu0 0.0
      %4581 = vmatpush1.msra.mxu0 0.0
      %4582 = vmatprep.subr.mxu0 0.0
      %4583 = vmatpush1.msra.mxu0 0.0
      %4584 = vmatprep.subr.mxu0 0.0
      %4585 = vmatpush1.msra.mxu0 0.0
      %4586 = vmatprep.subr.mxu0 0.0
      %4587 = vmatpush1.msra.mxu0 0.0
      %4588 = vmatprep.subr.mxu0 0.0
      %4589 = vmatpush1.msra.mxu0 0.0
      %4590 = vmatprep.subr.mxu0 0.0
      %4591 = vmatpush1.msra.mxu0 0.0
      %4592 = vmatprep.subr.mxu0 0.0
      %4593 = vmatpush1.msra.mxu0 0.0
      %4594 = vmatprep.subr.mxu0 0.0
      %4595 = vmatpush1.msra.mxu0 0.0
      %4596 = vmatprep.subr.mxu0 0.0
      %4597 = vmatpush1.msra.mxu0 0.0
      %4598 = vmatprep.subr.mxu0 0.0
      %4599 = vmatpush1.msra.mxu0 0.0
      %4600 = vmatprep.subr.mxu0 0.0
      %4601 = vmatpush1.msra.mxu0 0.0
      %4602 = vmatprep.subr.mxu0 0.0
      %4603 = vmatpush1.msra.mxu0 0.0
      %4604 = vmatprep.subr.mxu0 0.0
      %4605 = vmatpush1.msra.mxu0 0.0
      %4606 = vmatprep.subr.mxu0 0.0
      %4607 = vmatpush1.msra.mxu0 0.0
      %4608 = vmatprep.subr.mxu0 0.0
      %4609 = vmatpush1.msra.mxu0 0.0
      %4610 = vmatprep.subr.mxu0 0.0
      %4611 = vmatpush1.msra.mxu0 0.0
      %4612 = vmatprep.subr.mxu0 0.0
      %4613 = vmatpush1.msra.mxu0 0.0
      %4614 = vmatprep.subr.mxu0 0.0
      %4615 = vmatpush1.msra.mxu0 0.0
      %4616 = vmatprep.subr.mxu0 0.0
      %4617 = vmatpush1.msra.mxu0 0.0
      %4618 = vmatprep.subr.mxu0 0.0
      %4619 = vmatpush1.msra.mxu0 0.0
      %4620 = vmatprep.subr.mxu0 0.0
      %4621 = vmatpush1.msra.mxu0 0.0
      %4622 = vmatprep.subr.mxu0 0.0
      %4623 = vmatpush1.msra.mxu0 0.0
      %4624 = vmatprep.subr.mxu0 0.0
      %4625 = vmatpush1.msra.mxu0 0.0
      %4626 = vmatprep.subr.mxu0 0.0
      %4627 = vmatpush1.msra.mxu0 0.0
      %4628 = vmatprep.subr.mxu0 0.0
      %4629 = vmatpush1.msra.mxu0 0.0
      %4630 = vmatprep.mubr.f32.mxu0 0.0
      %4631 = vmatmul.mubr.f32.gmra.mrb[0].mxu0 %v4468
      %v4632 = vpop.f32.mrb[0].mxu0
      %v4633 = vadd.f32 %v4465, %v4632
      %v4634 = vpop.f32.mrb[0].mxu0
      %4635 = vmatprep.mubr.f32.mxu0 0.0
      %4636 = vmatmul.mubr.f32.gmra.mrb[0].mxu0 %v4471
      %v4637 = vpop.f32.mrb[0].mxu0
      %v4638 = vadd.f32 %v4465, %v4637
      %v4639 = vpop.f32.mrb[0].mxu0
      %4640 = vmatprep.mubr.f32.mxu0 0.0
      %4641 = vmatmul.mubr.f32.gmra.mrb[0].mxu0 %v4474
      %v4642 = vpop.f32.mrb[0].mxu0
      %v4643 = vadd.f32 %v4465, %v4642
      %v4644 = vpop.f32.mrb[0].mxu0
      %4645 = vmatprep.mubr.f32.mxu0 0.0
      %4646 = vmatmul.mubr.f32.gmra.mrb[0].mxu0 %v4477
      %v4647 = vpop.f32.mrb[0].mxu0
      %v4648 = vadd.f32 %v4465, %v4647
      %v4649 = vpop.f32.mrb[0].mxu0
      %4650 = vmatprep.mubr.f32.mxu0 0.0
      %4651 = vmatmul.mubr.f32.gmra.mrb[0].mxu0 %v4480
      %v4652 = vpop.f32.mrb[0].mxu0
      %v4653 = vadd.f32 %v4465, %v4652
      %v4654 = vpop.f32.mrb[0].mxu0
      %4655 = vmatprep.mubr.f32.mxu0 0.0
      %4656 = vmatmul.mubr.f32.gmra.mrb[0].mxu0 %v4483
      %v4657 = vpop.f32.mrb[0].mxu0
      %v4658 = vadd.f32 %v4465, %v4657
      %v4659 = vpop.f32.mrb[0].mxu0
      %4660 = vmatprep.mubr.f32.mxu0 0.0
      %4661 = vmatmul.mubr.f32.gmra.mrb[0].mxu0 %v4486
      %v4662 = vpop.f32.mrb[0].mxu0
      %v4663 = vadd.f32 %v4465, %v4662
      %v4664 = vpop.f32.mrb[0].mxu0
      %4665 = vmatprep.mubr.f32.mxu0 0.0
      %4666 = vmatmul.mubr.f32.gmra.mrb[0].mxu0 %v4489
      %v4667 = vpop.f32.mrb[0].mxu0
      %v4668 = vadd.f32 %v4465, %v4667
      %v4669 = vpop.f32.mrb[0].mxu0
      %4670 = vmatprep.mubr.f32.mxu0 0.0
      %4671 = vmatmul.mubr.f32.gmra.mrb[0].mxu0 %v4492
      %v4672 = vpop.f32.mrb[0].mxu0
      %v4673 = vadd.f32 %v4465, %v4672
      %v4674 = vpop.f32.mrb[0].mxu0
      %4675 = vmatprep.mubr.f32.mxu0 0.0
      %4676 = vmatmul.mubr.f32.gmra.mrb[0].mxu0 %v4495
      %v4677 = vpop.f32.mrb[0].mxu0
      %v4678 = vadd.f32 %v4465, %v4677
      %v4679 = vpop.f32.mrb[0].mxu0
      %4680 = vmatprep.mubr.f32.mxu0 0.0
      %4681 = vmatmul.mubr.f32.gmra.mrb[0].mxu0 %v4498
      %v4682 = vpop.f32.mrb[0].mxu0
      %v4683 = vadd.f32 %v4465, %v4682
      %v4684 = vpop.f32.mrb[0].mxu0
      %4685 = vmatprep.mubr.f32.mxu0 0.0
      %4686 = vmatmul.mubr.f32.gmra.mrb[0].mxu0 %v4501
      %v4687 = vpop.f32.mrb[0].mxu0
      %v4688 = vadd.f32 %v4465, %v4687
      %v4689 = vpop.f32.mrb[0].mxu0
      %4690 = vmatprep.mubr.f32.mxu0 0.0
      %4691 = vmatmul.mubr.f32.gmra.mrb[0].mxu0 %v4504
      %v4692 = vpop.f32.mrb[0].mxu0
      %v4693 = vadd.f32 %v4465, %v4692
      %v4694 = vpop.f32.mrb[0].mxu0
      %4695 = vmatprep.mubr.f32.mxu0 0.0
      %4696 = vmatmul.mubr.f32.gmra.mrb[0].mxu0 %v4507
      %v4697 = vpop.f32.mrb[0].mxu0
      %v4698 = vadd.f32 %v4465, %v4697
      %v4699 = vpop.f32.mrb[0].mxu0
      %4700 = vmatprep.mubr.f32.mxu0 0.0
      %4701 = vmatmul.mubr.f32.gmra.mrb[0].mxu0 %v4510
      %v4702 = vpop.f32.mrb[0].mxu0
      %v4703 = vadd.f32 %v4465, %v4702
      %v4704 = vpop.f32.mrb[0].mxu0
      %4705 = vmatprep.mubr.f32.mxu0 0.0
      %4706 = vmatmul.mubr.f32.gmra.mrb[0].mxu0 %v4513
      %v4707 = vpop.f32.mrb[0].mxu0
      %v4708 = vadd.f32 %v4465, %v4707
      %v4709 = vpop.f32.mrb[0].mxu0
      %4710 = vmatprep.mubr.f32.mxu0 0.0
      %4711 = vmatmul.mubr.f32.gmra.mrb[0].mxu0 %v4516
      %v4712 = vpop.f32.mrb[0].mxu0
      %v4713 = vadd.f32 %v4465, %v4712
      %v4714 = vpop.f32.mrb[0].mxu0
      %4715 = vmatprep.mubr.f32.mxu0 0.0
      %4716 = vmatmul.mubr.f32.gmra.mrb[0].mxu0 %v4519
      %v4717 = vpop.f32.mrb[0].mxu0
      %v4718 = vadd.f32 %v4465, %v4717
      %v4719 = vpop.f32.mrb[0].mxu0
      %4720 = vmatprep.mubr.f32.mxu0 0.0
      %4721 = vmatmul.mubr.f32.gmra.mrb[0].mxu0 %v4522
      %v4722 = vpop.f32.mrb[0].mxu0
      %v4723 = vadd.f32 %v4465, %v4722
      %v4724 = vpop.f32.mrb[0].mxu0
      %4725 = vmatprep.mubr.f32.mxu0 0.0
      %4726 = vmatmul.mubr.f32.gmra.mrb[0].mxu0 %v4525
      %v4727 = vpop.f32.mrb[0].mxu0
      %v4728 = vadd.f32 %v4465, %v4727
      %v4729 = vpop.f32.mrb[0].mxu0
      %4730 = vmatprep.mubr.f32.mxu0 0.0
      %4731 = vmatmul.mubr.f32.gmra.mrb[0].mxu0 %v4528
      %v4732 = vpop.f32.mrb[0].mxu0
      %v4733 = vadd.f32 %v4465, %v4732
      %v4734 = vpop.f32.mrb[0].mxu0
      %4735 = vmatprep.mubr.f32.mxu0 0.0
      %4736 = vmatmul.mubr.f32.gmra.mrb[0].mxu0 %v4531
      %v4737 = vpop.f32.mrb[0].mxu0
      %v4738 = vadd.f32 %v4465, %v4737
      %v4739 = vpop.f32.mrb[0].mxu0
      %4740 = vmatprep.mubr.f32.mxu0 0.0
      %4741 = vmatmul.mubr.f32.gmra.mrb[0].mxu0 %v4534
      %v4742 = vpop.f32.mrb[0].mxu0
      %v4743 = vadd.f32 %v4465, %v4742
      %v4744 = vpop.f32.mrb[0].mxu0
      %4745 = vmatprep.mubr.f32.mxu0 0.0
      %4746 = vmatmul.mubr.f32.gmra.mrb[0].mxu0 %v4537
      %v4747 = vpop.f32.mrb[0].mxu0
      %v4748 = vadd.f32 %v4465, %v4747
      %v4749 = vpop.f32.mrb[0].mxu0
      %4750 = vmatprep.mubr.f32.mxu0 0.0
      %4751 = vmatmul.mubr.f32.gmra.mrb[0].mxu0 %v4540
      %v4752 = vpop.f32.mrb[0].mxu0
      %v4753 = vadd.f32 %v4465, %v4752
      %v4754 = vpop.f32.mrb[0].mxu0
      %4755 = vmatprep.mubr.f32.mxu0 0.0
      %4756 = vmatmul.mubr.f32.gmra.mrb[0].mxu0 %v4543
      %v4757 = vpop.f32.mrb[0].mxu0
      %v4758 = vadd.f32 %v4465, %v4757
      %v4759 = vpop.f32.mrb[0].mxu0
      %4760 = vmatprep.mubr.f32.mxu0 0.0
      %4761 = vmatmul.mubr.f32.gmra.mrb[0].mxu0 %v4546
      %v4762 = vpop.f32.mrb[0].mxu0
      %v4763 = vadd.f32 %v4465, %v4762
      %v4764 = vpop.f32.mrb[0].mxu0
      %4765 = vmatprep.mubr.f32.mxu0 0.0
      %4766 = vmatmul.mubr.f32.gmra.mrb[0].mxu0 %v4549
      %v4767 = vpop.f32.mrb[0].mxu0
      %v4768 = vadd.f32 %v4465, %v4767
      %v4769 = vpop.f32.mrb[0].mxu0
      %4770 = vmatprep.mubr.f32.mxu0 0.0
      %4771 = vmatmul.mubr.f32.gmra.mrb[0].mxu0 %v4552
      %v4772 = vpop.f32.mrb[0].mxu0
      %v4773 = vadd.f32 %v4465, %v4772
      %v4774 = vpop.f32.mrb[0].mxu0
      %4775 = vmatprep.mubr.f32.mxu0 0.0
      %4776 = vmatmul.mubr.f32.gmra.mrb[0].mxu0 %v4555
      %v4777 = vpop.f32.mrb[0].mxu0
      %v4778 = vadd.f32 %v4465, %v4777
      %v4779 = vpop.f32.mrb[0].mxu0
      %4780 = vmatprep.mubr.f32.mxu0 0.0
      %4781 = vmatmul.mubr.f32.gmra.mrb[0].mxu0 %v4558
      %v4782 = vpop.f32.mrb[0].mxu0
      %v4783 = vadd.f32 %v4465, %v4782
      %v4784 = vpop.f32.mrb[0].mxu0
      %4785 = vmatprep.mubr.f32.mxu0 0.0
      %4786 = vmatmul.mubr.f32.gmra.mrb[0].mxu0 %v4561
      %v4787 = vpop.f32.mrb[0].mxu0
      %v4788 = vadd.f32 %v4465, %v4787
      %v4789 = vpop.f32.mrb[0].mxu0
      %4790 = vdwg.mxu0
      %v4791 = vadd.f32 %v4301, %v4633
      %v4792 = vadd.f32 %v4306, %v4638
      %v4793 = vadd.f32 %v4311, %v4643
      %v4794 = vadd.f32 %v4316, %v4648
      %v4795 = vadd.f32 %v4321, %v4653
      %v4796 = vadd.f32 %v4326, %v4658
      %v4797 = vadd.f32 %v4331, %v4663
      %v4798 = vadd.f32 %v4336, %v4668
      %v4799 = vadd.f32 %v4341, %v4673
      %v4800 = vadd.f32 %v4346, %v4678
      %v4801 = vadd.f32 %v4351, %v4683
      %v4802 = vadd.f32 %v4356, %v4688
      %v4803 = vadd.f32 %v4361, %v4693
      %v4804 = vadd.f32 %v4366, %v4698
      %v4805 = vadd.f32 %v4371, %v4703
      %v4806 = vadd.f32 %v4376, %v4708
      %v4807 = vadd.f32 %v4381, %v4713
      %v4808 = vadd.f32 %v4386, %v4718
      %v4809 = vadd.f32 %v4391, %v4723
      %v4810 = vadd.f32 %v4396, %v4728
      %v4811 = vadd.f32 %v4401, %v4733
      %v4812 = vadd.f32 %v4406, %v4738
      %v4813 = vadd.f32 %v4411, %v4743
      %v4814 = vadd.f32 %v4416, %v4748
      %v4815 = vadd.f32 %v4421, %v4753
      %v4816 = vadd.f32 %v4426, %v4758
      %v4817 = vadd.f32 %v4431, %v4763
      %v4818 = vadd.f32 %v4436, %v4768
      %v4819 = vadd.f32 %v4441, %v4773
      %v4820 = vadd.f32 %v4446, %v4778
      %v4821 = vadd.f32 %v4451, %v4783
      %v4822 = vadd.f32 %v4456, %v4788
      %v4823 = vmax.f32 %v4791, 0.0
      %v4824 = vmax.f32 %v4792, 0.0
      %v4825 = vmax.f32 %v4793, 0.0
      %v4826 = vmax.f32 %v4794, 0.0
      %v4827 = vmax.f32 %v4795, 0.0
      %v4828 = vmax.f32 %v4796, 0.0
      %v4829 = vmax.f32 %v4797, 0.0
      %v4830 = vmax.f32 %v4798, 0.0
      %v4831 = vmax.f32 %v4799, 0.0
      %v4832 = vmax.f32 %v4800, 0.0
      %v4833 = vmax.f32 %v4801, 0.0
      %v4834 = vmax.f32 %v4802, 0.0
      %v4835 = vmax.f32 %v4803, 0.0
      %v4836 = vmax.f32 %v4804, 0.0
      %v4837 = vmax.f32 %v4805, 0.0
      %v4838 = vmax.f32 %v4806, 0.0
      %v4839 = vmax.f32 %v4807, 0.0
      %v4840 = vmax.f32 %v4808, 0.0
      %v4841 = vmax.f32 %v4809, 0.0
      %v4842 = vmax.f32 %v4810, 0.0
      %v4843 = vmax.f32 %v4811, 0.0
      %v4844 = vmax.f32 %v4812, 0.0
      %v4845 = vmax.f32 %v4813, 0.0
      %v4846 = vmax.f32 %v4814, 0.0
      %v4847 = vmax.f32 %v4815, 0.0
      %v4848 = vmax.f32 %v4816, 0.0
      %v4849 = vmax.f32 %v4817, 0.0
      %v4850 = vmax.f32 %v4818, 0.0
      %v4851 = vmax.f32 %v4819, 0.0
      %v4852 = vmax.f32 %v4820, 0.0
      %v4853 = vmax.f32 %v4821, 0.0
      %v4854 = vmax.f32 %v4822, 0.0
      %4855 = vst.msk [vmem:[%s278] sm:$0xff] %vm2401, %v4823
      %4856 = vst.msk [vmem:[%s278 + $0x8] sm:$0xff] %vm2401, %v4824
      %4857 = vst.msk [vmem:[%s278 + $0x10] sm:$0xff] %vm2401, %v4825
      %4858 = vst.msk [vmem:[%s278 + $0x18] sm:$0xff] %vm2401, %v4826
      %4859 = vst.msk [vmem:[%s278 + $0x20] sm:$0xff] %vm2401, %v4827
      %4860 = vst.msk [vmem:[%s278 + $0x28] sm:$0xff] %vm2401, %v4828
      %4861 = vst.msk [vmem:[%s278 + $0x30] sm:$0xff] %vm2401, %v4829
      %4862 = vst.msk [vmem:[%s278 + $0x38] sm:$0xff] %vm2401, %v4830
      %4863 = vst.msk [vmem:[%s278 + $0x40] sm:$0xff] %vm2401, %v4831
      %4864 = vst.msk [vmem:[%s278 + $0x48] sm:$0xff] %vm2401, %v4832
      %4865 = vst.msk [vmem:[%s278 + $0x50] sm:$0xff] %vm2401, %v4833
      %4866 = vst.msk [vmem:[%s278 + $0x58] sm:$0xff] %vm2401, %v4834
      %4867 = vst.msk [vmem:[%s278 + $0x60] sm:$0xff] %vm2401, %v4835
      %4868 = vst.msk [vmem:[%s278 + $0x68] sm:$0xff] %vm2401, %v4836
      %4869 = vst.msk [vmem:[%s278 + $0x70] sm:$0xff] %vm2401, %v4837
      %4870 = vst.msk [vmem:[%s278 + $0x78] sm:$0xff] %vm2401, %v4838
      %4871 = vst.msk [vmem:[%s278 + $0x80] sm:$0xff] %vm2401, %v4839
      %4872 = vst.msk [vmem:[%s278 + $0x88] sm:$0xff] %vm2401, %v4840
      %4873 = vst.msk [vmem:[%s278 + $0x90] sm:$0xff] %vm2401, %v4841
      %4874 = vst.msk [vmem:[%s278 + $0x98] sm:$0xff] %vm2401, %v4842
      %4875 = vst.msk [vmem:[%s278 + $0xa0] sm:$0xff] %vm2401, %v4843
      %4876 = vst.msk [vmem:[%s278 + $0xa8] sm:$0xff] %vm2401, %v4844
      %4877 = vst.msk [vmem:[%s278 + $0xb0] sm:$0xff] %vm2401, %v4845
      %4878 = vst.msk [vmem:[%s278 + $0xb8] sm:$0xff] %vm2401, %v4846
      %4879 = vst.msk [vmem:[%s278 + $0xc0] sm:$0xff] %vm2401, %v4847
      %4880 = vst.msk [vmem:[%s278 + $0xc8] sm:$0xff] %vm2401, %v4848
      %4881 = vst.msk [vmem:[%s278 + $0xd0] sm:$0xff] %vm2401, %v4849
      %4882 = vst.msk [vmem:[%s278 + $0xd8] sm:$0xff] %vm2401, %v4850
      %4883 = vst.msk [vmem:[%s278 + $0xe0] sm:$0xff] %vm2401, %v4851
      %4884 = vst.msk [vmem:[%s278 + $0xe8] sm:$0xff] %vm2401, %v4852
      %4885 = vst.msk [vmem:[%s278 + $0xf0] sm:$0xff] %vm2401, %v4853
      %4886 = vst.msk [vmem:[%s278 + $0xf8] sm:$0xff] %vm2401, %v4854
      %p4887 = scmp.lt.s32.totalorder %s18, 1
      %s4888 = scalar_select %p4887, %s18, 1
      %s4889 = smul.addr %s4888, 32
      %s4890 = smul.addr %s4889, 8
      %s4891 = scalar_lea.vmem %s7, %s4890
      // Predicated region
      $region49: #{tpu_custom_call.1} parent=47 // pred_check
        %p4892 = pneg %p188
      $region50: #{tpu_custom_call.1} parent=47 // pred_check_branch
        %4894 = sbr.rel (%p4892) target = $region52
      $region51: #{tpu_custom_call.1} parent=47 // pred_region
        _
      $region52: #{tpu_custom_call.1} parent=47 // pred_fallthru
        _
    $region48: #{tpu_custom_call.1} parent=5 // pred_fallthru
      _
    %p4895 = scmp.le.s32.totalorder 2, %s13
    // Predicated region
    $region53: #{tpu_custom_call.1} parent=5 // pred_check
      %p4896 = pneg %p4895
    $region54: #{tpu_custom_call.1} parent=5 // pred_check_branch
      %4898 = sbr.rel (%p4896) target = $region56
    $region55: #{tpu_custom_call.1} parent=5 // pred_region
      %s4899 = ssub.s32 %s13, 2
      // Predicated region
      $region57: #{tpu_custom_call.1} parent=55 // pred_check
        %p4900 = pneg %p194
      $region58: #{tpu_custom_call.1} parent=55 // pred_check_branch
        %4902 = sbr.rel (%p4900) target = $region60
      $region59: #{tpu_custom_call.1} parent=55 // pred_region
        %p4903 = scmp.lt.s32.totalorder %s19, 1
        %s4904 = scalar_select %p4903, %s19, 1
        %s4905 = smul.addr %s4904, 32
        %s4906 = smul.addr %s4905, 8
        %s4907 = scalar_lea.vmem %s7, %s4906
      $region60: #{tpu_custom_call.1} parent=55 // pred_fallthru
        _
    $region56: #{tpu_custom_call.1} parent=5 // pred_fallthru
      _
  $region6: #{tpu_custom_call.1} parent=0 // loop_footer
    %s17 = sadd.s32 1, %s13
  $region7: #{tpu_custom_call.1} parent=0 // loop_footer_branch
    %12 = sbr.rel target = $region3
  $region8: #{tpu_custom_call.1} parent=0 // loop_exit
    _

</llo_original>
